<compile_context>
chip_gen: v5e
topology: v5e:2x2
jax: 0.10.0
libtpu: 0.0.40
codegen_flags: <defaults>
</compile_context>

<pallas_src>
import jax
import jax.numpy as jnp
from jax import lax
from jax.experimental import pallas as pl
from jax.experimental.pallas import tpu as pltpu


# ------------------------------------------------------------------ kernel


def sgsnet_fused_kernel(
    x_ref, e_ref, rowcol_ref, colr_ref, nbat_ref, ebat_ref,
    wxr_ref, ew1c_ref, ew1e_ref, eb1_ref, ew2_ref, eb2_ref, ew3_ref, eb3_ref,
    m1w1e_ref, m1b1_ref, m1w2_ref, m1b2_ref,
    m2w1x_ref, m2w1a_ref, m2b1_ref, m2w2_ref, m2b2_ref,
    aw1n_ref, aw1e_ref, ab1_ref, aw2_ref, ab2_ref, aw3_ref, ab3_ref,
    out_ref,
):
    f32 = jnp.float32
    bf16 = jnp.bfloat16
    x = x_ref[...]                       # [N, C] f32 (residual stream)
    e = e_ref[...]                       # [E, C] f32 (residual stream)
    n = x.shape[0]
    m = e.shape[0]
    b = out_ref.shape[0]
    num_layers = wxr_ref.shape[0]
    he = ew2_ref.shape[1]                # edge-MLP hidden width (split point)

    def dot(a_bf, w_bf):
        # bf16 operands, f32 accumulation on the MXU
        return jnp.dot(a_bf, w_bf, preferred_element_type=f32)

    # ---- static index machinery: built once (bf16 one-hots; 0/1 exact) ----
    iota_2en = lax.broadcasted_iota(jnp.int32, (2 * m, n), 1)
    gather_oh = (rowcol_ref[...] == iota_2en).astype(bf16)      # [2E, N]
    iota_ne = lax.broadcasted_iota(jnp.int32, (n, m), 0)
    scat_col = (colr_ref[...] == iota_ne).astype(bf16)          # [N, E]
    iota_bn = lax.broadcasted_iota(jnp.int32, (b, n), 0)
    scat_nb = (nbat_ref[...] == iota_bn).astype(bf16)           # [B, N]
    iota_be = lax.broadcasted_iota(jnp.int32, (b, m), 0)
    scat_eb = (ebat_ref[...] == iota_be).astype(bf16)           # [B, E]
    # inverse segment counts (exact small-integer sums; empty segments -> 1)
    inv_col = 1.0 / jnp.maximum(
        jnp.sum(scat_col.astype(f32), axis=1, keepdims=True), 1.0)
    inv_nb = 1.0 / jnp.maximum(
        jnp.sum(scat_nb.astype(f32), axis=1, keepdims=True), 1.0)
    inv_eb = 1.0 / jnp.maximum(
        jnp.sum(scat_eb.astype(f32), axis=1, keepdims=True), 1.0)

    # ---- ResidualMetaLayer stack (static unroll over stacked weights) ----
    for l in range(num_layers):
        x_bf = x.astype(bf16)                                    # hoisted casts
        e_bf = e.astype(bf16)

        # fused gather of x[row] and x[col]: one [2E,N] x [N,C] bf16 dot
        # (one-hot rows are 0/1 -> result is exactly x_bf[idx])
        xx = dot(gather_oh, x_bf)                                # [2E, C]
        x_row_bf = xx[:m].astype(bf16)                           # exact re-cast
        x_col_bf = xx[m:].astype(bf16)

        # fused first-layer dot for the shared x[row] LHS:
        #   [E, C] @ [C, he + hn1] -> split into EdgeModel / NodeModel parts
        fused = dot(x_row_bf, wxr_ref[l])                        # [E, he+hn1]
        h_e0 = fused[:, :he]
        h_n0 = fused[:, he:]

        # EdgeModel: cat([x_row, x_col, e]) @ W  ==  split-weight matmuls
        h = h_e0 + dot(x_col_bf, ew1c_ref[l]) + dot(e_bf, ew1e_ref[l]) + eb1_ref[l]
        h = jnp.maximum(h, 0.0)
        h = jnp.maximum(dot(h.astype(bf16), ew2_ref[l]) + eb2_ref[l], 0.0)
        e_res = dot(h.astype(bf16), ew3_ref[l]) + eb3_ref[l]
        e = jnp.maximum(e + e_res, 0.0)                          # residual + relu (f32)
        e_new_bf = e.astype(bf16)

        # NodeModel MLP1: cat([x_row, e_new]) @ W  (x_row part already in h_n0)
        h = jnp.maximum(h_n0 + dot(e_new_bf, m1w1e_ref[l]) + m1b1_ref[l], 0.0)
        h = jnp.maximum(dot(h.astype(bf16), m1w2_ref[l]) + m1b2_ref[l], 0.0)

        # scatter_mean over col: bf16 one-hot matmul * hoisted inverse counts
        per_node = dot(scat_col, h.astype(bf16)) * inv_col       # [N, hn1]

        # NodeModel MLP2: cat([x, per_node]) @ W  ==  split-weight matmuls
        h = jnp.maximum(dot(x_bf, m2w1x_ref[l])
                        + dot(per_node.astype(bf16), m2w1a_ref[l])
                        + m2b1_ref[l], 0.0)
        x_res = dot(h.astype(bf16), m2w2_ref[l]) + m2b2_ref[l]
        x = jnp.maximum(x + x_res, 0.0)                          # residual + relu (f32)

    # ---- NodeEdgeAggregationModel (batch means + global MLP) ----
    node_mean = dot(scat_nb, x.astype(bf16)) * inv_nb            # [B, C]
    edge_mean = dot(scat_eb, e.astype(bf16)) * inv_eb            # [B, C]
    h = jnp.maximum(dot(node_mean.astype(bf16), aw1n_ref[...])
                    + dot(edge_mean.astype(bf16), aw1e_ref[...])
                    + ab1_ref[...], 0.0)
    h = jnp.maximum(dot(h.astype(bf16), aw2_ref[...]) + ab2_ref[...], 0.0)
    out_ref[...] = dot(h.astype(bf16), aw3_ref[...]) + ab3_ref[...]   # [B, out_dim]


# ------------------------------------------------------------------ wrapper


def _full_spec(shape):
    zeros = (0,) * len(shape)
    return pl.BlockSpec(shape, lambda i, _z=zeros: _z)


def _vmem_limit_bytes():
    """Generation-aware VMEM budget (leave headroom below physical)."""
    try:
        cap = int(pltpu.get_tpu_info().vmem_capacity_bytes)
        return min(cap * 3 // 4, 100 * 1024 * 1024)   # ~48 MiB v7x, ~96 MiB v5e/v6e
    except Exception:
        return 32 * 1024 * 1024


def sgsnet_forward(node_features, edge_index, edge_attr, batch, num_graphs, params):
    """SGSNet.forward starting from encoded node/edge features.

    node_features: [N, C] f32, edge_index: [2, E] int32, edge_attr: [E, C] f32,
    batch: [N] int32. Returns [B] logits (outputs[:, 0] of the output MLP).
    Assumes no cross-graph edges (batch[row] == batch[col]), as in the reference.
    """
    n, c = node_features.shape

    row = edge_index[0].astype(jnp.int32)
    col = edge_index[1].astype(jnp.int32)
    # gather indices: combined [2E, 1] (sublane-major: the [2E, N] one-hot needs
    # the index to vary along sublanes).  TODO(synk): move to SMEM scalar
    # prefetch when adopting the tiled production gather.
    rowcol2d = jnp.concatenate([row, col]).reshape(-1, 1)
    col_row = col.reshape(1, -1)                                  # [1, E]
    nbatch_row = batch.astype(jnp.int32).reshape(1, -1)           # [1, N]
    ebatch_row = batch[row].astype(jnp.int32).reshape(1, -1)      # [1, E]

    bf16 = jnp.bfloat16

    def stack(key, dtype=None):
        w = jnp.stack([lp[key] for lp in params["layers"]])
        return w.astype(dtype) if dtype is not None else w

    ew1 = stack("ew1")
    m1w1 = stack("m1w1")
    # fused first-layer weight for the shared x[row] LHS: [L, C, he + hn1] bf16
    wxr = jnp.concatenate([ew1[:, :c, :], m1w1[:, :c, :]], axis=2).astype(bf16)
    ew1c = ew1[:, c:2 * c, :].astype(bf16)
    ew1e = ew1[:, 2 * c:, :].astype(bf16)
    eb1, ew2, eb2, ew3, eb3 = (stack("eb1"), stack("ew2", bf16), stack("eb2"),
                               stack("ew3", bf16), stack("eb3"))
    m1w1e = m1w1[:, c:, :].astype(bf16)
    m1b1, m1w2, m1b2 = stack("m1b1"), stack("m1w2", bf16), stack("m1b2")
    m2w1 = stack("m2w1")
    m2w1x, m2w1a = m2w1[:, :c, :].astype(bf16), m2w1[:, c:, :].astype(bf16)
    m2b1, m2w2, m2b2 = stack("m2b1"), stack("m2w2", bf16), stack("m2b2")

    agg = params["agg"]
    aw1n, aw1e = agg["w1"][:c, :].astype(bf16), agg["w1"][c:, :].astype(bf16)
    ab1, aw2, ab2 = agg["b1"], agg["w2"].astype(bf16), agg["b2"]
    aw3, ab3 = agg["w3"].astype(bf16), agg["b3"]       # keep all output columns
    out_dim = aw3.shape[1]

    inputs = [
        node_features, edge_attr, rowcol2d, col_row, nbatch_row, ebatch_row,
        wxr, ew1c, ew1e, eb1, ew2, eb2, ew3, eb3,
        m1w1e, m1b1, m1w2, m1b2,
        m2w1x, m2w1a, m2b1, m2w2, m2b2,
        aw1n, aw1e, ab1, aw2, ab2, aw3, ab3,
    ]

    out = pl.pallas_call(
        sgsnet_fused_kernel,
        out_shape=jax.ShapeDtypeStruct((num_graphs, out_dim), jnp.float32),
        grid=(1,),
        in_specs=[_full_spec(a.shape) for a in inputs],
        out_specs=_full_spec((num_graphs, out_dim)),
        compiler_params=pltpu.CompilerParams(
            dimension_semantics=("arbitrary",),
            vmem_limit_bytes=_vmem_limit_bytes(),
        ),
    )(*inputs)
    return out[:, 0]


# ------------------------------------------------------ params & reference


def make_params(key, c=32):
    def lin_p(k, fi, fo):
        kw, kb = jax.random.split(k)
        w = (jax.random.normal(kw, (fi, fo), jnp.float32) / jnp.sqrt(fi)).astype(jnp.float32)
        b = (0.01 * jax.random.normal(kb, (1, fo), jnp.float32)).astype(jnp.float32)
        return w, b

    keys = iter(jax.random.split(key, 64))
    he, hn1, hn2 = 64, 64, 64
    layers = []
    for _ in range(2):  # two ResidualMetaLayers
        p = {}
        p["ew1"], p["eb1"] = lin_p(next(keys), 3 * c, he)
        p["ew2"], p["eb2"] = lin_p(next(keys), he, he)
        p["ew3"], p["eb3"] = lin_p(next(keys), he, c)
        p["m1w1"], p["m1b1"] = lin_p(next(keys), 2 * c, hn1)
        p["m1w2"], p["m1b2"] = lin_p(next(keys), hn1, hn1)
        p["m2w1"], p["m2b1"] = lin_p(next(keys), c + hn1, hn2)
        p["m2w2"], p["m2b2"] = lin_p(next(keys), hn2, c)
        layers.append(p)
    agg = {}
    agg["w1"], agg["b1"] = lin_p(next(keys), 2 * c, 64)
    agg["w2"], agg["b2"] = lin_p(next(keys), 64, 32)
    agg["w3"], agg["b3"] = lin_p(next(keys), 32, 4)
    return {"layers": layers, "agg": agg}


def _dot_bf16(a, b):
    return jnp.dot(a.astype(jnp.bfloat16), b.astype(jnp.bfloat16),
                   preferred_element_type=jnp.float32)


def _ref_seg_mean(data, idx, size, cast=None):
    d = data if cast is None else data.astype(cast).astype(jnp.float32)
    sums = jax.ops.segment_sum(d, idx, num_segments=size)
    cnt = jax.ops.segment_sum(jnp.ones((data.shape[0],), jnp.float32), idx,
                              num_segments=size)
    return sums / jnp.maximum(cnt, 1.0)[:, None]


def sgsnet_reference(x, edge_index, e, batch, num_graphs, params, dot_fn, seg_cast=None):
    """Pure-JAX reference; dot_fn / seg_cast control the precision policy."""
    def lin(h, w, b, relu):
        h = dot_fn(h, w) + b
        return jnp.maximum(h, 0.0) if relu else h

    row, col = edge_index[0], edge_index[1]
    for p in params["layers"]:
        xr, xc = x[row], x[col]
        h = jnp.concatenate([xr, xc, e], axis=1)
        h = lin(h, p["ew1"], p["eb1"], True)
        h = lin(h, p["ew2"], p["eb2"], True)
        e = jnp.maximum(e + lin(h, p["ew3"], p["eb3"], False), 0.0)
        h = jnp.concatenate([xr, e], axis=1)
        h = lin(h, p["m1w1"], p["m1b1"], True)
        h = lin(h, p["m1w2"], p["m1b2"], True)
        per_node = _ref_seg_mean(h, col, x.shape[0], cast=seg_cast)
        h = jnp.concatenate([x, per_node], axis=1)
        h = lin(h, p["m2w1"], p["m2b1"], True)
        x = jnp.maximum(x + lin(h, p["m2w2"], p["m2b2"], False), 0.0)
    node_mean = _ref_seg_mean(x, batch, num_graphs, cast=seg_cast)
    edge_mean = _ref_seg_mean(e, batch[row], num_graphs, cast=seg_cast)
    p = params["agg"]
    h = jnp.concatenate([node_mean, edge_mean], axis=1)
    h = lin(h, p["w1"], p["b1"], True)
    h = lin(h, p["w2"], p["b2"], True)
    return lin(h, p["w3"], p["b3"], False)[:, 0]


# ---------------------------------------------------------------------- main


if __name__ == "__main__":
    key = jax.random.PRNGKey(0)
    k_nf, k_ea, k_p = jax.random.split(key, 3)

    B, N_PER_GRAPH, C = 2, 8, 32
    N = B * N_PER_GRAPH
    # fully-connected (no self loops) within each graph
    edges = []
    for g in range(B):
        for i in range(N_PER_GRAPH):
            for j in range(N_PER_GRAPH):
                if i != j:
                    edges.append((g * N_PER_GRAPH + i, g * N_PER_GRAPH + j))
    edge_index = jnp.asarray(edges, dtype=jnp.int32).T        # [2, E]
    E = edge_index.shape[1]
    batch = jnp.repeat(jnp.arange(B, dtype=jnp.int32), N_PER_GRAPH)  # [N]

    # invariant assumed by edge_batch = batch[row] (same as the reference)
    assert bool(jnp.all(batch[edge_index[0]] == batch[edge_index[1]]))

    node_features = jax.random.normal(k_nf, (N, C), jnp.float32)
    edge_attr = jax.random.normal(k_ea, (E, C), jnp.float32)
    params = make_params(k_p, c=C)

    logits = sgsnet_forward(node_features, edge_index, edge_attr, batch, B, params)
    logits = jax.block_until_ready(logits)
    assert logits.shape == (B,), logits.shape

    # tight check: reference with the same precision policy as the kernel
    # (bf16 matmul operands, f32 accumulation, bf16-rounded segment means)
    ref_matched = sgsnet_reference(node_features, edge_index, edge_attr, batch,
                                   B, params, _dot_bf16, seg_cast=jnp.bfloat16)
    assert jnp.allclose(logits, ref_matched, atol=2e-3, rtol=2e-3), (logits, ref_matched)

    # coarse semantic check against a full-f32 reference
    def _dot_f32(a, b):
        return jnp.dot(a, b, precision=jax.lax.Precision.HIGHEST)
    ref_f32 = sgsnet_reference(node_features, edge_index, edge_attr, batch,
                               B, params, _dot_f32, seg_cast=None)
    assert jnp.allclose(logits, ref_f32, atol=5e-2, rtol=5e-2), (logits, ref_f32)

    print("KERNEL_OK")
</pallas_src>

<mosaic_0001>
module attributes {stable_mosaic.version = 11 : i64} {
  func.func @sgsnet_fused_kernel(%arg0: i32, %arg1: memref<16x32xf32, #tpu.memory_space<vmem>>, %arg2: memref<112x32xf32, #tpu.memory_space<vmem>>, %arg3: memref<224x1xi32, #tpu.memory_space<vmem>>, %arg4: memref<1x112xi32, #tpu.memory_space<vmem>>, %arg5: memref<1x16xi32, #tpu.memory_space<vmem>>, %arg6: memref<1x112xi32, #tpu.memory_space<vmem>>, %arg7: memref<2x32x128xbf16, #tpu.memory_space<vmem>>, %arg8: memref<2x32x64xbf16, #tpu.memory_space<vmem>>, %arg9: memref<2x32x64xbf16, #tpu.memory_space<vmem>>, %arg10: memref<2x1x64xf32, #tpu.memory_space<vmem>>, %arg11: memref<2x64x64xbf16, #tpu.memory_space<vmem>>, %arg12: memref<2x1x64xf32, #tpu.memory_space<vmem>>, %arg13: memref<2x64x32xbf16, #tpu.memory_space<vmem>>, %arg14: memref<2x1x32xf32, #tpu.memory_space<vmem>>, %arg15: memref<2x32x64xbf16, #tpu.memory_space<vmem>>, %arg16: memref<2x1x64xf32, #tpu.memory_space<vmem>>, %arg17: memref<2x64x64xbf16, #tpu.memory_space<vmem>>, %arg18: memref<2x1x64xf32, #tpu.memory_space<vmem>>, %arg19: memref<2x32x64xbf16, #tpu.memory_space<vmem>>, %arg20: memref<2x64x64xbf16, #tpu.memory_space<vmem>>, %arg21: memref<2x1x64xf32, #tpu.memory_space<vmem>>, %arg22: memref<2x64x32xbf16, #tpu.memory_space<vmem>>, %arg23: memref<2x1x32xf32, #tpu.memory_space<vmem>>, %arg24: memref<32x64xbf16, #tpu.memory_space<vmem>>, %arg25: memref<32x64xbf16, #tpu.memory_space<vmem>>, %arg26: memref<1x64xf32, #tpu.memory_space<vmem>>, %arg27: memref<64x32xbf16, #tpu.memory_space<vmem>>, %arg28: memref<1x32xf32, #tpu.memory_space<vmem>>, %arg29: memref<32x4xbf16, #tpu.memory_space<vmem>>, %arg30: memref<1x4xf32, #tpu.memory_space<vmem>>, %arg31: memref<2x4xf32, #tpu.memory_space<vmem>>) attributes {dimension_semantics = [#tpu.dimension_semantics<arbitrary>], iteration_bounds = array<i64: 1>, scalar_prefetch = 0 : i64, scratch_operands = 0 : i64, tpu.core_type = #tpu.core_type<tc>, window_params = [{pipeline_mode = #tpu.pipeline_mode<synchronous>, transform_indices = @transform_0, window_bounds = array<i64: 16, 32>}, {pipeline_mode = #tpu.pipeline_mode<synchronous>, transform_indices = @transform_1, window_bounds = array<i64: 112, 32>}, {pipeline_mode = #tpu.pipeline_mode<synchronous>, transform_indices = @transform_2, window_bounds = array<i64: 224, 1>}, {pipeline_mode = #tpu.pipeline_mode<synchronous>, transform_indices = @transform_3, window_bounds = array<i64: 1, 112>}, {pipeline_mode = #tpu.pipeline_mode<synchronous>, transform_indices = @transform_4, window_bounds = array<i64: 1, 16>}, {pipeline_mode = #tpu.pipeline_mode<synchronous>, transform_indices = @transform_5, window_bounds = array<i64: 1, 112>}, {pipeline_mode = #tpu.pipeline_mode<synchronous>, transform_indices = @transform_6, window_bounds = array<i64: 2, 32, 128>}, {pipeline_mode = #tpu.pipeline_mode<synchronous>, transform_indices = @transform_7, window_bounds = array<i64: 2, 32, 64>}, {pipeline_mode = #tpu.pipeline_mode<synchronous>, transform_indices = @transform_8, window_bounds = array<i64: 2, 32, 64>}, {pipeline_mode = #tpu.pipeline_mode<synchronous>, transform_indices = @transform_9, window_bounds = array<i64: 2, 1, 64>}, {pipeline_mode = #tpu.pipeline_mode<synchronous>, transform_indices = @transform_10, window_bounds = array<i64: 2, 64, 64>}, {pipeline_mode = #tpu.pipeline_mode<synchronous>, transform_indices = @transform_11, window_bounds = array<i64: 2, 1, 64>}, {pipeline_mode = #tpu.pipeline_mode<synchronous>, transform_indices = @transform_12, window_bounds = array<i64: 2, 64, 32>}, {pipeline_mode = #tpu.pipeline_mode<synchronous>, transform_indices = @transform_13, window_bounds = array<i64: 2, 1, 32>}, {pipeline_mode = #tpu.pipeline_mode<synchronous>, transform_indices = @transform_14, window_bounds = array<i64: 2, 32, 64>}, {pipeline_mode = #tpu.pipeline_mode<synchronous>, transform_indices = @transform_15, window_bounds = array<i64: 2, 1, 64>}, {pipeline_mode = #tpu.pipeline_mode<synchronous>, transform_indices = @transform_16, window_bounds = array<i64: 2, 64, 64>}, {pipeline_mode = #tpu.pipeline_mode<synchronous>, transform_indices = @transform_17, window_bounds = array<i64: 2, 1, 64>}, {pipeline_mode = #tpu.pipeline_mode<synchronous>, transform_indices = @transform_18, window_bounds = array<i64: 2, 32, 64>}, {pipeline_mode = #tpu.pipeline_mode<synchronous>, transform_indices = @transform_19, window_bounds = array<i64: 2, 64, 64>}, {pipeline_mode = #tpu.pipeline_mode<synchronous>, transform_indices = @transform_20, window_bounds = array<i64: 2, 1, 64>}, {pipeline_mode = #tpu.pipeline_mode<synchronous>, transform_indices = @transform_21, window_bounds = array<i64: 2, 64, 32>}, {pipeline_mode = #tpu.pipeline_mode<synchronous>, transform_indices = @transform_22, window_bounds = array<i64: 2, 1, 32>}, {pipeline_mode = #tpu.pipeline_mode<synchronous>, transform_indices = @transform_23, window_bounds = array<i64: 32, 64>}, {pipeline_mode = #tpu.pipeline_mode<synchronous>, transform_indices = @transform_24, window_bounds = array<i64: 32, 64>}, {pipeline_mode = #tpu.pipeline_mode<synchronous>, transform_indices = @transform_25, window_bounds = array<i64: 1, 64>}, {pipeline_mode = #tpu.pipeline_mode<synchronous>, transform_indices = @transform_26, window_bounds = array<i64: 64, 32>}, {pipeline_mode = #tpu.pipeline_mode<synchronous>, transform_indices = @transform_27, window_bounds = array<i64: 1, 32>}, {pipeline_mode = #tpu.pipeline_mode<synchronous>, transform_indices = @transform_28, window_bounds = array<i64: 32, 4>}, {pipeline_mode = #tpu.pipeline_mode<synchronous>, transform_indices = @transform_29, window_bounds = array<i64: 1, 4>}, {pipeline_mode = #tpu.pipeline_mode<synchronous>, transform_indices = @transform_30, window_bounds = array<i64: 2, 4>}]} {
    %c0 = arith.constant 0 : index
    %c0_0 = arith.constant 0 : index
    %0 = vector.load %arg1[%c0, %c0_0] : memref<16x32xf32, #tpu.memory_space<vmem>>, vector<16x32xf32>
    %c0_1 = arith.constant 0 : index
    %c0_2 = arith.constant 0 : index
    %1 = vector.load %arg2[%c0_1, %c0_2] : memref<112x32xf32, #tpu.memory_space<vmem>>, vector<112x32xf32>
    %2 = tpu.iota {dimensions = array<i32: 1>} : vector<224x16xi32>
    %c0_3 = arith.constant 0 : index
    %c0_4 = arith.constant 0 : index
    %3 = vector.load %arg3[%c0_3, %c0_4] : memref<224x1xi32, #tpu.memory_space<vmem>>, vector<224x1xi32>
    %4 = vector.broadcast %3 : vector<224x1xi32> to vector<224x16xi32>
    %5 = arith.cmpi eq, %4, %2 : vector<224x16xi32>
    %6 = arith.extui %5 : vector<224x16xi1> to vector<224x16xi32>
    %7 = arith.sitofp %6 : vector<224x16xi32> to vector<224x16xf32>
    %8 = arith.truncf %7 : vector<224x16xf32> to vector<224x16xbf16>
    %9 = tpu.iota {dimensions = array<i32: 0>} : vector<16x112xi32>
    %c0_5 = arith.constant 0 : index
    %c0_6 = arith.constant 0 : index
    %10 = vector.load %arg4[%c0_5, %c0_6] : memref<1x112xi32, #tpu.memory_space<vmem>>, vector<1x112xi32>
    %11 = vector.broadcast %10 : vector<1x112xi32> to vector<16x112xi32>
    %12 = arith.cmpi eq, %11, %9 : vector<16x112xi32>
    %13 = arith.extui %12 : vector<16x112xi1> to vector<16x112xi32>
    %14 = arith.sitofp %13 : vector<16x112xi32> to vector<16x112xf32>
    %15 = arith.truncf %14 : vector<16x112xf32> to vector<16x112xbf16>
    %16 = tpu.iota {dimensions = array<i32: 0>} : vector<2x16xi32>
    %c0_7 = arith.constant 0 : index
    %c0_8 = arith.constant 0 : index
    %17 = vector.load %arg5[%c0_7, %c0_8] : memref<1x16xi32, #tpu.memory_space<vmem>>, vector<1x16xi32>
    %18 = vector.broadcast %17 : vector<1x16xi32> to vector<2x16xi32>
    %19 = arith.cmpi eq, %18, %16 : vector<2x16xi32>
    %20 = arith.extui %19 : vector<2x16xi1> to vector<2x16xi32>
    %21 = arith.sitofp %20 : vector<2x16xi32> to vector<2x16xf32>
    %22 = arith.truncf %21 : vector<2x16xf32> to vector<2x16xbf16>
    %23 = tpu.iota {dimensions = array<i32: 0>} : vector<2x112xi32>
    %c0_9 = arith.constant 0 : index
    %c0_10 = arith.constant 0 : index
    %24 = vector.load %arg6[%c0_9, %c0_10] : memref<1x112xi32, #tpu.memory_space<vmem>>, vector<1x112xi32>
    %25 = vector.broadcast %24 : vector<1x112xi32> to vector<2x112xi32>
    %26 = arith.cmpi eq, %25, %23 : vector<2x112xi32>
    %27 = arith.extui %26 : vector<2x112xi1> to vector<2x112xi32>
    %28 = arith.sitofp %27 : vector<2x112xi32> to vector<2x112xf32>
    %29 = arith.truncf %28 : vector<2x112xf32> to vector<2x112xbf16>
    %30 = arith.extf %15 : vector<16x112xbf16> to vector<16x112xf32>
    %cst = arith.constant dense<0.000000e+00> : vector<16xf32>
    %31 = vector.multi_reduction <add>, %30, %cst [1] : vector<16x112xf32> to vector<16xf32>
    %32 = vector.shape_cast %31 : vector<16xf32> to vector<16x1xf32>
    %cst_11 = arith.constant 1.000000e+00 : f32
    %33 = vector.broadcast %cst_11 : f32 to vector<16x1xf32>
    %34 = arith.maximumf %32, %33 : vector<16x1xf32>
    %cst_12 = arith.constant 1.000000e+00 : f32
    %35 = vector.broadcast %cst_12 : f32 to vector<16x1xf32>
    %36 = arith.divf %35, %34 : vector<16x1xf32>
    %37 = arith.extf %22 : vector<2x16xbf16> to vector<2x16xf32>
    %cst_13 = arith.constant dense<0.000000e+00> : vector<2xf32>
    %38 = vector.multi_reduction <add>, %37, %cst_13 [1] : vector<2x16xf32> to vector<2xf32>
    %39 = vector.shape_cast %38 : vector<2xf32> to vector<2x1xf32>
    %cst_14 = arith.constant 1.000000e+00 : f32
    %40 = vector.broadcast %cst_14 : f32 to vector<2x1xf32>
    %41 = arith.maximumf %39, %40 : vector<2x1xf32>
    %cst_15 = arith.constant 1.000000e+00 : f32
    %42 = vector.broadcast %cst_15 : f32 to vector<2x1xf32>
    %43 = arith.divf %42, %41 : vector<2x1xf32>
    %44 = arith.extf %29 : vector<2x112xbf16> to vector<2x112xf32>
    %cst_16 = arith.constant dense<0.000000e+00> : vector<2xf32>
    %45 = vector.multi_reduction <add>, %44, %cst_16 [1] : vector<2x112xf32> to vector<2xf32>
    %46 = vector.shape_cast %45 : vector<2xf32> to vector<2x1xf32>
    %cst_17 = arith.constant 1.000000e+00 : f32
    %47 = vector.broadcast %cst_17 : f32 to vector<2x1xf32>
    %48 = arith.maximumf %46, %47 : vector<2x1xf32>
    %cst_18 = arith.constant 1.000000e+00 : f32
    %49 = vector.broadcast %cst_18 : f32 to vector<2x1xf32>
    %50 = arith.divf %49, %48 : vector<2x1xf32>
    %51 = arith.truncf %0 : vector<16x32xf32> to vector<16x32xbf16>
    %52 = arith.truncf %1 : vector<112x32xf32> to vector<112x32xbf16>
    %cst_19 = arith.constant dense<0.000000e+00> : vector<224x32xf32>
    %53 = tpu.matmul %8, %51, %cst_19 {dimension_numbers = #tpu.dot_dimension_numbers<[1], [0], [0], [1], [0, 0, 1, 1], [], []>} : vector<224x16xbf16>, vector<16x32xbf16>, vector<224x32xf32> -> vector<224x32xf32>
    %54 = vector.extract_strided_slice %53 {offsets = [0, 0], sizes = [112, 32], strides = [1, 1]} : vector<224x32xf32> to vector<112x32xf32>
    %55 = arith.truncf %54 : vector<112x32xf32> to vector<112x32xbf16>
    %56 = vector.extract_strided_slice %53 {offsets = [112, 0], sizes = [112, 32], strides = [1, 1]} : vector<224x32xf32> to vector<112x32xf32>
    %57 = arith.truncf %56 : vector<112x32xf32> to vector<112x32xbf16>
    %c0_20 = arith.constant 0 : index
    %c0_21 = arith.constant 0 : index
    %c0_22 = arith.constant 0 : index
    %58 = vector.load %arg7[%c0_20, %c0_21, %c0_22] : memref<2x32x128xbf16, #tpu.memory_space<vmem>>, vector<1x32x128xbf16>
    %59 = vector.shape_cast %58 : vector<1x32x128xbf16> to vector<32x128xbf16>
    %cst_23 = arith.constant dense<0.000000e+00> : vector<112x128xf32>
    %60 = tpu.matmul %55, %59, %cst_23 {dimension_numbers = #tpu.dot_dimension_numbers<[1], [0], [0], [1], [0, 0, 1, 1], [], []>} : vector<112x32xbf16>, vector<32x128xbf16>, vector<112x128xf32> -> vector<112x128xf32>
    %61 = vector.extract_strided_slice %60 {offsets = [0, 0], sizes = [112, 64], strides = [1, 1]} : vector<112x128xf32> to vector<112x64xf32>
    %62 = vector.extract_strided_slice %60 {offsets = [0, 64], sizes = [112, 64], strides = [1, 1]} : vector<112x128xf32> to vector<112x64xf32>
    %c0_24 = arith.constant 0 : index
    %c0_25 = arith.constant 0 : index
    %c0_26 = arith.constant 0 : index
    %63 = vector.load %arg8[%c0_24, %c0_25, %c0_26] : memref<2x32x64xbf16, #tpu.memory_space<vmem>>, vector<1x32x64xbf16>
    %64 = vector.shape_cast %63 : vector<1x32x64xbf16> to vector<32x64xbf16>
    %cst_27 = arith.constant dense<0.000000e+00> : vector<112x64xf32>
    %65 = tpu.matmul %57, %64, %cst_27 {dimension_numbers = #tpu.dot_dimension_numbers<[1], [0], [0], [1], [0, 0, 1, 1], [], []>} : vector<112x32xbf16>, vector<32x64xbf16>, vector<112x64xf32> -> vector<112x64xf32>
    %66 = arith.addf %61, %65 : vector<112x64xf32>
    %c0_28 = arith.constant 0 : index
    %c0_29 = arith.constant 0 : index
    %c0_30 = arith.constant 0 : index
    %67 = vector.load %arg9[%c0_28, %c0_29, %c0_30] : memref<2x32x64xbf16, #tpu.memory_space<vmem>>, vector<1x32x64xbf16>
    %68 = vector.shape_cast %67 : vector<1x32x64xbf16> to vector<32x64xbf16>
    %cst_31 = arith.constant dense<0.000000e+00> : vector<112x64xf32>
    %69 = tpu.matmul %52, %68, %cst_31 {dimension_numbers = #tpu.dot_dimension_numbers<[1], [0], [0], [1], [0, 0, 1, 1], [], []>} : vector<112x32xbf16>, vector<32x64xbf16>, vector<112x64xf32> -> vector<112x64xf32>
    %70 = arith.addf %66, %69 : vector<112x64xf32>
    %c0_32 = arith.constant 0 : index
    %c0_33 = arith.constant 0 : index
    %c0_34 = arith.constant 0 : index
    %71 = vector.load %arg10[%c0_32, %c0_33, %c0_34] : memref<2x1x64xf32, #tpu.memory_space<vmem>>, vector<1x1x64xf32>
    %72 = vector.shape_cast %71 : vector<1x1x64xf32> to vector<1x64xf32>
    %73 = vector.broadcast %72 : vector<1x64xf32> to vector<112x64xf32>
    %74 = arith.addf %70, %73 : vector<112x64xf32>
    %cst_35 = arith.constant 0.000000e+00 : f32
    %75 = vector.broadcast %cst_35 : f32 to vector<112x64xf32>
    %76 = arith.maximumf %74, %75 : vector<112x64xf32>
    %77 = arith.truncf %76 : vector<112x64xf32> to vector<112x64xbf16>
    %c0_36 = arith.constant 0 : index
    %c0_37 = arith.constant 0 : index
    %c0_38 = arith.constant 0 : index
    %78 = vector.load %arg11[%c0_36, %c0_37, %c0_38] : memref<2x64x64xbf16, #tpu.memory_space<vmem>>, vector<1x64x64xbf16>
    %79 = vector.shape_cast %78 : vector<1x64x64xbf16> to vector<64x64xbf16>
    %cst_39 = arith.constant dense<0.000000e+00> : vector<112x64xf32>
    %80 = tpu.matmul %77, %79, %cst_39 {dimension_numbers = #tpu.dot_dimension_numbers<[1], [0], [0], [1], [0, 0, 1, 1], [], []>} : vector<112x64xbf16>, vector<64x64xbf16>, vector<112x64xf32> -> vector<112x64xf32>
    %c0_40 = arith.constant 0 : index
    %c0_41 = arith.constant 0 : index
    %c0_42 = arith.constant 0 : index
    %81 = vector.load %arg12[%c0_40, %c0_41, %c0_42] : memref<2x1x64xf32, #tpu.memory_space<vmem>>, vector<1x1x64xf32>
    %82 = vector.shape_cast %81 : vector<1x1x64xf32> to vector<1x64xf32>
    %83 = vector.broadcast %82 : vector<1x64xf32> to vector<112x64xf32>
    %84 = arith.addf %80, %83 : vector<112x64xf32>
    %cst_43 = arith.constant 0.000000e+00 : f32
    %85 = vector.broadcast %cst_43 : f32 to vector<112x64xf32>
    %86 = arith.maximumf %84, %85 : vector<112x64xf32>
    %87 = arith.truncf %86 : vector<112x64xf32> to vector<112x64xbf16>
    %c0_44 = arith.constant 0 : index
    %c0_45 = arith.constant 0 : index
    %c0_46 = arith.constant 0 : index
    %88 = vector.load %arg13[%c0_44, %c0_45, %c0_46] : memref<2x64x32xbf16, #tpu.memory_space<vmem>>, vector<1x64x32xbf16>
    %89 = vector.shape_cast %88 : vector<1x64x32xbf16> to vector<64x32xbf16>
    %cst_47 = arith.constant dense<0.000000e+00> : vector<112x32xf32>
    %90 = tpu.matmul %87, %89, %cst_47 {dimension_numbers = #tpu.dot_dimension_numbers<[1], [0], [0], [1], [0, 0, 1, 1], [], []>} : vector<112x64xbf16>, vector<64x32xbf16>, vector<112x32xf32> -> vector<112x32xf32>
    %c0_48 = arith.constant 0 : index
    %c0_49 = arith.constant 0 : index
    %c0_50 = arith.constant 0 : index
    %91 = vector.load %arg14[%c0_48, %c0_49, %c0_50] : memref<2x1x32xf32, #tpu.memory_space<vmem>>, vector<1x1x32xf32>
    %92 = vector.shape_cast %91 : vector<1x1x32xf32> to vector<1x32xf32>
    %93 = vector.broadcast %92 : vector<1x32xf32> to vector<112x32xf32>
    %94 = arith.addf %90, %93 : vector<112x32xf32>
    %95 = arith.addf %1, %94 : vector<112x32xf32>
    %cst_51 = arith.constant 0.000000e+00 : f32
    %96 = vector.broadcast %cst_51 : f32 to vector<112x32xf32>
    %97 = arith.maximumf %95, %96 : vector<112x32xf32>
    %98 = arith.truncf %97 : vector<112x32xf32> to vector<112x32xbf16>
    %c0_52 = arith.constant 0 : index
    %c0_53 = arith.constant 0 : index
    %c0_54 = arith.constant 0 : index
    %99 = vector.load %arg15[%c0_52, %c0_53, %c0_54] : memref<2x32x64xbf16, #tpu.memory_space<vmem>>, vector<1x32x64xbf16>
    %100 = vector.shape_cast %99 : vector<1x32x64xbf16> to vector<32x64xbf16>
    %cst_55 = arith.constant dense<0.000000e+00> : vector<112x64xf32>
    %101 = tpu.matmul %98, %100, %cst_55 {dimension_numbers = #tpu.dot_dimension_numbers<[1], [0], [0], [1], [0, 0, 1, 1], [], []>} : vector<112x32xbf16>, vector<32x64xbf16>, vector<112x64xf32> -> vector<112x64xf32>
    %102 = arith.addf %62, %101 : vector<112x64xf32>
    %c0_56 = arith.constant 0 : index
    %c0_57 = arith.constant 0 : index
    %c0_58 = arith.constant 0 : index
    %103 = vector.load %arg16[%c0_56, %c0_57, %c0_58] : memref<2x1x64xf32, #tpu.memory_space<vmem>>, vector<1x1x64xf32>
    %104 = vector.shape_cast %103 : vector<1x1x64xf32> to vector<1x64xf32>
    %105 = vector.broadcast %104 : vector<1x64xf32> to vector<112x64xf32>
    %106 = arith.addf %102, %105 : vector<112x64xf32>
    %cst_59 = arith.constant 0.000000e+00 : f32
    %107 = vector.broadcast %cst_59 : f32 to vector<112x64xf32>
    %108 = arith.maximumf %106, %107 : vector<112x64xf32>
    %109 = arith.truncf %108 : vector<112x64xf32> to vector<112x64xbf16>
    %c0_60 = arith.constant 0 : index
    %c0_61 = arith.constant 0 : index
    %c0_62 = arith.constant 0 : index
    %110 = vector.load %arg17[%c0_60, %c0_61, %c0_62] : memref<2x64x64xbf16, #tpu.memory_space<vmem>>, vector<1x64x64xbf16>
    %111 = vector.shape_cast %110 : vector<1x64x64xbf16> to vector<64x64xbf16>
    %cst_63 = arith.constant dense<0.000000e+00> : vector<112x64xf32>
    %112 = tpu.matmul %109, %111, %cst_63 {dimension_numbers = #tpu.dot_dimension_numbers<[1], [0], [0], [1], [0, 0, 1, 1], [], []>} : vector<112x64xbf16>, vector<64x64xbf16>, vector<112x64xf32> -> vector<112x64xf32>
    %c0_64 = arith.constant 0 : index
    %c0_65 = arith.constant 0 : index
    %c0_66 = arith.constant 0 : index
    %113 = vector.load %arg18[%c0_64, %c0_65, %c0_66] : memref<2x1x64xf32, #tpu.memory_space<vmem>>, vector<1x1x64xf32>
    %114 = vector.shape_cast %113 : vector<1x1x64xf32> to vector<1x64xf32>
    %115 = vector.broadcast %114 : vector<1x64xf32> to vector<112x64xf32>
    %116 = arith.addf %112, %115 : vector<112x64xf32>
    %cst_67 = arith.constant 0.000000e+00 : f32
    %117 = vector.broadcast %cst_67 : f32 to vector<112x64xf32>
    %118 = arith.maximumf %116, %117 : vector<112x64xf32>
    %119 = arith.truncf %118 : vector<112x64xf32> to vector<112x64xbf16>
    %cst_68 = arith.constant dense<0.000000e+00> : vector<16x64xf32>
    %120 = tpu.matmul %15, %119, %cst_68 {dimension_numbers = #tpu.dot_dimension_numbers<[1], [0], [0], [1], [0, 0, 1, 1], [], []>} : vector<16x112xbf16>, vector<112x64xbf16>, vector<16x64xf32> -> vector<16x64xf32>
    %121 = vector.broadcast %36 : vector<16x1xf32> to vector<16x64xf32>
    %122 = arith.mulf %120, %121 : vector<16x64xf32>
    %c0_69 = arith.constant 0 : index
    %c0_70 = arith.constant 0 : index
    %c0_71 = arith.constant 0 : index
    %123 = vector.load %arg19[%c0_69, %c0_70, %c0_71] : memref<2x32x64xbf16, #tpu.memory_space<vmem>>, vector<1x32x64xbf16>
    %124 = vector.shape_cast %123 : vector<1x32x64xbf16> to vector<32x64xbf16>
    %cst_72 = arith.constant dense<0.000000e+00> : vector<16x64xf32>
    %125 = tpu.matmul %51, %124, %cst_72 {dimension_numbers = #tpu.dot_dimension_numbers<[1], [0], [0], [1], [0, 0, 1, 1], [], []>} : vector<16x32xbf16>, vector<32x64xbf16>, vector<16x64xf32> -> vector<16x64xf32>
    %126 = arith.truncf %122 : vector<16x64xf32> to vector<16x64xbf16>
    %c0_73 = arith.constant 0 : index
    %c0_74 = arith.constant 0 : index
    %c0_75 = arith.constant 0 : index
    %127 = vector.load %arg20[%c0_73, %c0_74, %c0_75] : memref<2x64x64xbf16, #tpu.memory_space<vmem>>, vector<1x64x64xbf16>
    %128 = vector.shape_cast %127 : vector<1x64x64xbf16> to vector<64x64xbf16>
    %cst_76 = arith.constant dense<0.000000e+00> : vector<16x64xf32>
    %129 = tpu.matmul %126, %128, %cst_76 {dimension_numbers = #tpu.dot_dimension_numbers<[1], [0], [0], [1], [0, 0, 1, 1], [], []>} : vector<16x64xbf16>, vector<64x64xbf16>, vector<16x64xf32> -> vector<16x64xf32>
    %130 = arith.addf %125, %129 : vector<16x64xf32>
    %c0_77 = arith.constant 0 : index
    %c0_78 = arith.constant 0 : index
    %c0_79 = arith.constant 0 : index
    %131 = vector.load %arg21[%c0_77, %c0_78, %c0_79] : memref<2x1x64xf32, #tpu.memory_space<vmem>>, vector<1x1x64xf32>
    %132 = vector.shape_cast %131 : vector<1x1x64xf32> to vector<1x64xf32>
    %133 = vector.broadcast %132 : vector<1x64xf32> to vector<16x64xf32>
    %134 = arith.addf %130, %133 : vector<16x64xf32>
    %cst_80 = arith.constant 0.000000e+00 : f32
    %135 = vector.broadcast %cst_80 : f32 to vector<16x64xf32>
    %136 = arith.maximumf %134, %135 : vector<16x64xf32>
    %137 = arith.truncf %136 : vector<16x64xf32> to vector<16x64xbf16>
    %c0_81 = arith.constant 0 : index
    %c0_82 = arith.constant 0 : index
    %c0_83 = arith.constant 0 : index
    %138 = vector.load %arg22[%c0_81, %c0_82, %c0_83] : memref<2x64x32xbf16, #tpu.memory_space<vmem>>, vector<1x64x32xbf16>
    %139 = vector.shape_cast %138 : vector<1x64x32xbf16> to vector<64x32xbf16>
    %cst_84 = arith.constant dense<0.000000e+00> : vector<16x32xf32>
    %140 = tpu.matmul %137, %139, %cst_84 {dimension_numbers = #tpu.dot_dimension_numbers<[1], [0], [0], [1], [0, 0, 1, 1], [], []>} : vector<16x64xbf16>, vector<64x32xbf16>, vector<16x32xf32> -> vector<16x32xf32>
    %c0_85 = arith.constant 0 : index
    %c0_86 = arith.constant 0 : index
    %c0_87 = arith.constant 0 : index
    %141 = vector.load %arg23[%c0_85, %c0_86, %c0_87] : memref<2x1x32xf32, #tpu.memory_space<vmem>>, vector<1x1x32xf32>
    %142 = vector.shape_cast %141 : vector<1x1x32xf32> to vector<1x32xf32>
    %143 = vector.broadcast %142 : vector<1x32xf32> to vector<16x32xf32>
    %144 = arith.addf %140, %143 : vector<16x32xf32>
    %145 = arith.addf %0, %144 : vector<16x32xf32>
    %cst_88 = arith.constant 0.000000e+00 : f32
    %146 = vector.broadcast %cst_88 : f32 to vector<16x32xf32>
    %147 = arith.maximumf %145, %146 : vector<16x32xf32>
    %148 = arith.truncf %147 : vector<16x32xf32> to vector<16x32xbf16>
    %149 = arith.truncf %97 : vector<112x32xf32> to vector<112x32xbf16>
    %cst_89 = arith.constant dense<0.000000e+00> : vector<224x32xf32>
    %150 = tpu.matmul %8, %148, %cst_89 {dimension_numbers = #tpu.dot_dimension_numbers<[1], [0], [0], [1], [0, 0, 1, 1], [], []>} : vector<224x16xbf16>, vector<16x32xbf16>, vector<224x32xf32> -> vector<224x32xf32>
    %151 = vector.extract_strided_slice %150 {offsets = [0, 0], sizes = [112, 32], strides = [1, 1]} : vector<224x32xf32> to vector<112x32xf32>
    %152 = arith.truncf %151 : vector<112x32xf32> to vector<112x32xbf16>
    %153 = vector.extract_strided_slice %150 {offsets = [112, 0], sizes = [112, 32], strides = [1, 1]} : vector<224x32xf32> to vector<112x32xf32>
    %154 = arith.truncf %153 : vector<112x32xf32> to vector<112x32xbf16>
    %c1 = arith.constant 1 : index
    %c0_90 = arith.constant 0 : index
    %c0_91 = arith.constant 0 : index
    %155 = vector.load %arg7[%c1, %c0_90, %c0_91] : memref<2x32x128xbf16, #tpu.memory_space<vmem>>, vector<1x32x128xbf16>
    %156 = vector.shape_cast %155 : vector<1x32x128xbf16> to vector<32x128xbf16>
    %cst_92 = arith.constant dense<0.000000e+00> : vector<112x128xf32>
    %157 = tpu.matmul %152, %156, %cst_92 {dimension_numbers = #tpu.dot_dimension_numbers<[1], [0], [0], [1], [0, 0, 1, 1], [], []>} : vector<112x32xbf16>, vector<32x128xbf16>, vector<112x128xf32> -> vector<112x128xf32>
    %158 = vector.extract_strided_slice %157 {offsets = [0, 0], sizes = [112, 64], strides = [1, 1]} : vector<112x128xf32> to vector<112x64xf32>
    %159 = vector.extract_strided_slice %157 {offsets = [0, 64], sizes = [112, 64], strides = [1, 1]} : vector<112x128xf32> to vector<112x64xf32>
    %c1_93 = arith.constant 1 : index
    %c0_94 = arith.constant 0 : index
    %c0_95 = arith.constant 0 : index
    %160 = vector.load %arg8[%c1_93, %c0_94, %c0_95] : memref<2x32x64xbf16, #tpu.memory_space<vmem>>, vector<1x32x64xbf16>
    %161 = vector.shape_cast %160 : vector<1x32x64xbf16> to vector<32x64xbf16>
    %cst_96 = arith.constant dense<0.000000e+00> : vector<112x64xf32>
    %162 = tpu.matmul %154, %161, %cst_96 {dimension_numbers = #tpu.dot_dimension_numbers<[1], [0], [0], [1], [0, 0, 1, 1], [], []>} : vector<112x32xbf16>, vector<32x64xbf16>, vector<112x64xf32> -> vector<112x64xf32>
    %163 = arith.addf %158, %162 : vector<112x64xf32>
    %c1_97 = arith.constant 1 : index
    %c0_98 = arith.constant 0 : index
    %c0_99 = arith.constant 0 : index
    %164 = vector.load %arg9[%c1_97, %c0_98, %c0_99] : memref<2x32x64xbf16, #tpu.memory_space<vmem>>, vector<1x32x64xbf16>
    %165 = vector.shape_cast %164 : vector<1x32x64xbf16> to vector<32x64xbf16>
    %cst_100 = arith.constant dense<0.000000e+00> : vector<112x64xf32>
    %166 = tpu.matmul %149, %165, %cst_100 {dimension_numbers = #tpu.dot_dimension_numbers<[1], [0], [0], [1], [0, 0, 1, 1], [], []>} : vector<112x32xbf16>, vector<32x64xbf16>, vector<112x64xf32> -> vector<112x64xf32>
    %167 = arith.addf %163, %166 : vector<112x64xf32>
    %c1_101 = arith.constant 1 : index
    %c0_102 = arith.constant 0 : index
    %c0_103 = arith.constant 0 : index
    %168 = vector.load %arg10[%c1_101, %c0_102, %c0_103] : memref<2x1x64xf32, #tpu.memory_space<vmem>>, vector<1x1x64xf32>
    %169 = vector.shape_cast %168 : vector<1x1x64xf32> to vector<1x64xf32>
    %170 = vector.broadcast %169 : vector<1x64xf32> to vector<112x64xf32>
    %171 = arith.addf %167, %170 : vector<112x64xf32>
    %cst_104 = arith.constant 0.000000e+00 : f32
    %172 = vector.broadcast %cst_104 : f32 to vector<112x64xf32>
    %173 = arith.maximumf %171, %172 : vector<112x64xf32>
    %174 = arith.truncf %173 : vector<112x64xf32> to vector<112x64xbf16>
    %c1_105 = arith.constant 1 : index
    %c0_106 = arith.constant 0 : index
    %c0_107 = arith.constant 0 : index
    %175 = vector.load %arg11[%c1_105, %c0_106, %c0_107] : memref<2x64x64xbf16, #tpu.memory_space<vmem>>, vector<1x64x64xbf16>
    %176 = vector.shape_cast %175 : vector<1x64x64xbf16> to vector<64x64xbf16>
    %cst_108 = arith.constant dense<0.000000e+00> : vector<112x64xf32>
    %177 = tpu.matmul %174, %176, %cst_108 {dimension_numbers = #tpu.dot_dimension_numbers<[1], [0], [0], [1], [0, 0, 1, 1], [], []>} : vector<112x64xbf16>, vector<64x64xbf16>, vector<112x64xf32> -> vector<112x64xf32>
    %c1_109 = arith.constant 1 : index
    %c0_110 = arith.constant 0 : index
    %c0_111 = arith.constant 0 : index
    %178 = vector.load %arg12[%c1_109, %c0_110, %c0_111] : memref<2x1x64xf32, #tpu.memory_space<vmem>>, vector<1x1x64xf32>
    %179 = vector.shape_cast %178 : vector<1x1x64xf32> to vector<1x64xf32>
    %180 = vector.broadcast %179 : vector<1x64xf32> to vector<112x64xf32>
    %181 = arith.addf %177, %180 : vector<112x64xf32>
    %cst_112 = arith.constant 0.000000e+00 : f32
    %182 = vector.broadcast %cst_112 : f32 to vector<112x64xf32>
    %183 = arith.maximumf %181, %182 : vector<112x64xf32>
    %184 = arith.truncf %183 : vector<112x64xf32> to vector<112x64xbf16>
    %c1_113 = arith.constant 1 : index
    %c0_114 = arith.constant 0 : index
    %c0_115 = arith.constant 0 : index
    %185 = vector.load %arg13[%c1_113, %c0_114, %c0_115] : memref<2x64x32xbf16, #tpu.memory_space<vmem>>, vector<1x64x32xbf16>
    %186 = vector.shape_cast %185 : vector<1x64x32xbf16> to vector<64x32xbf16>
    %cst_116 = arith.constant dense<0.000000e+00> : vector<112x32xf32>
    %187 = tpu.matmul %184, %186, %cst_116 {dimension_numbers = #tpu.dot_dimension_numbers<[1], [0], [0], [1], [0, 0, 1, 1], [], []>} : vector<112x64xbf16>, vector<64x32xbf16>, vector<112x32xf32> -> vector<112x32xf32>
    %c1_117 = arith.constant 1 : index
    %c0_118 = arith.constant 0 : index
    %c0_119 = arith.constant 0 : index
    %188 = vector.load %arg14[%c1_117, %c0_118, %c0_119] : memref<2x1x32xf32, #tpu.memory_space<vmem>>, vector<1x1x32xf32>
    %189 = vector.shape_cast %188 : vector<1x1x32xf32> to vector<1x32xf32>
    %190 = vector.broadcast %189 : vector<1x32xf32> to vector<112x32xf32>
    %191 = arith.addf %187, %190 : vector<112x32xf32>
    %192 = arith.addf %97, %191 : vector<112x32xf32>
    %cst_120 = arith.constant 0.000000e+00 : f32
    %193 = vector.broadcast %cst_120 : f32 to vector<112x32xf32>
    %194 = arith.maximumf %192, %193 : vector<112x32xf32>
    %195 = arith.truncf %194 : vector<112x32xf32> to vector<112x32xbf16>
    %c1_121 = arith.constant 1 : index
    %c0_122 = arith.constant 0 : index
    %c0_123 = arith.constant 0 : index
    %196 = vector.load %arg15[%c1_121, %c0_122, %c0_123] : memref<2x32x64xbf16, #tpu.memory_space<vmem>>, vector<1x32x64xbf16>
    %197 = vector.shape_cast %196 : vector<1x32x64xbf16> to vector<32x64xbf16>
    %cst_124 = arith.constant dense<0.000000e+00> : vector<112x64xf32>
    %198 = tpu.matmul %195, %197, %cst_124 {dimension_numbers = #tpu.dot_dimension_numbers<[1], [0], [0], [1], [0, 0, 1, 1], [], []>} : vector<112x32xbf16>, vector<32x64xbf16>, vector<112x64xf32> -> vector<112x64xf32>
    %199 = arith.addf %159, %198 : vector<112x64xf32>
    %c1_125 = arith.constant 1 : index
    %c0_126 = arith.constant 0 : index
    %c0_127 = arith.constant 0 : index
    %200 = vector.load %arg16[%c1_125, %c0_126, %c0_127] : memref<2x1x64xf32, #tpu.memory_space<vmem>>, vector<1x1x64xf32>
    %201 = vector.shape_cast %200 : vector<1x1x64xf32> to vector<1x64xf32>
    %202 = vector.broadcast %201 : vector<1x64xf32> to vector<112x64xf32>
    %203 = arith.addf %199, %202 : vector<112x64xf32>
    %cst_128 = arith.constant 0.000000e+00 : f32
    %204 = vector.broadcast %cst_128 : f32 to vector<112x64xf32>
    %205 = arith.maximumf %203, %204 : vector<112x64xf32>
    %206 = arith.truncf %205 : vector<112x64xf32> to vector<112x64xbf16>
    %c1_129 = arith.constant 1 : index
    %c0_130 = arith.constant 0 : index
    %c0_131 = arith.constant 0 : index
    %207 = vector.load %arg17[%c1_129, %c0_130, %c0_131] : memref<2x64x64xbf16, #tpu.memory_space<vmem>>, vector<1x64x64xbf16>
    %208 = vector.shape_cast %207 : vector<1x64x64xbf16> to vector<64x64xbf16>
    %cst_132 = arith.constant dense<0.000000e+00> : vector<112x64xf32>
    %209 = tpu.matmul %206, %208, %cst_132 {dimension_numbers = #tpu.dot_dimension_numbers<[1], [0], [0], [1], [0, 0, 1, 1], [], []>} : vector<112x64xbf16>, vector<64x64xbf16>, vector<112x64xf32> -> vector<112x64xf32>
    %c1_133 = arith.constant 1 : index
    %c0_134 = arith.constant 0 : index
    %c0_135 = arith.constant 0 : index
    %210 = vector.load %arg18[%c1_133, %c0_134, %c0_135] : memref<2x1x64xf32, #tpu.memory_space<vmem>>, vector<1x1x64xf32>
    %211 = vector.shape_cast %210 : vector<1x1x64xf32> to vector<1x64xf32>
    %212 = vector.broadcast %211 : vector<1x64xf32> to vector<112x64xf32>
    %213 = arith.addf %209, %212 : vector<112x64xf32>
    %cst_136 = arith.constant 0.000000e+00 : f32
    %214 = vector.broadcast %cst_136 : f32 to vector<112x64xf32>
    %215 = arith.maximumf %213, %214 : vector<112x64xf32>
    %216 = arith.truncf %215 : vector<112x64xf32> to vector<112x64xbf16>
    %cst_137 = arith.constant dense<0.000000e+00> : vector<16x64xf32>
    %217 = tpu.matmul %15, %216, %cst_137 {dimension_numbers = #tpu.dot_dimension_numbers<[1], [0], [0], [1], [0, 0, 1, 1], [], []>} : vector<16x112xbf16>, vector<112x64xbf16>, vector<16x64xf32> -> vector<16x64xf32>
    %218 = vector.broadcast %36 : vector<16x1xf32> to vector<16x64xf32>
    %219 = arith.mulf %217, %218 : vector<16x64xf32>
    %c1_138 = arith.constant 1 : index
    %c0_139 = arith.constant 0 : index
    %c0_140 = arith.constant 0 : index
    %220 = vector.load %arg19[%c1_138, %c0_139, %c0_140] : memref<2x32x64xbf16, #tpu.memory_space<vmem>>, vector<1x32x64xbf16>
    %221 = vector.shape_cast %220 : vector<1x32x64xbf16> to vector<32x64xbf16>
    %cst_141 = arith.constant dense<0.000000e+00> : vector<16x64xf32>
    %222 = tpu.matmul %148, %221, %cst_141 {dimension_numbers = #tpu.dot_dimension_numbers<[1], [0], [0], [1], [0, 0, 1, 1], [], []>} : vector<16x32xbf16>, vector<32x64xbf16>, vector<16x64xf32> -> vector<16x64xf32>
    %223 = arith.truncf %219 : vector<16x64xf32> to vector<16x64xbf16>
    %c1_142 = arith.constant 1 : index
    %c0_143 = arith.constant 0 : index
    %c0_144 = arith.constant 0 : index
    %224 = vector.load %arg20[%c1_142, %c0_143, %c0_144] : memref<2x64x64xbf16, #tpu.memory_space<vmem>>, vector<1x64x64xbf16>
    %225 = vector.shape_cast %224 : vector<1x64x64xbf16> to vector<64x64xbf16>
    %cst_145 = arith.constant dense<0.000000e+00> : vector<16x64xf32>
    %226 = tpu.matmul %223, %225, %cst_145 {dimension_numbers = #tpu.dot_dimension_numbers<[1], [0], [0], [1], [0, 0, 1, 1], [], []>} : vector<16x64xbf16>, vector<64x64xbf16>, vector<16x64xf32> -> vector<16x64xf32>
    %227 = arith.addf %222, %226 : vector<16x64xf32>
    %c1_146 = arith.constant 1 : index
    %c0_147 = arith.constant 0 : index
    %c0_148 = arith.constant 0 : index
    %228 = vector.load %arg21[%c1_146, %c0_147, %c0_148] : memref<2x1x64xf32, #tpu.memory_space<vmem>>, vector<1x1x64xf32>
    %229 = vector.shape_cast %228 : vector<1x1x64xf32> to vector<1x64xf32>
    %230 = vector.broadcast %229 : vector<1x64xf32> to vector<16x64xf32>
    %231 = arith.addf %227, %230 : vector<16x64xf32>
    %cst_149 = arith.constant 0.000000e+00 : f32
    %232 = vector.broadcast %cst_149 : f32 to vector<16x64xf32>
    %233 = arith.maximumf %231, %232 : vector<16x64xf32>
    %234 = arith.truncf %233 : vector<16x64xf32> to vector<16x64xbf16>
    %c1_150 = arith.constant 1 : index
    %c0_151 = arith.constant 0 : index
    %c0_152 = arith.constant 0 : index
    %235 = vector.load %arg22[%c1_150, %c0_151, %c0_152] : memref<2x64x32xbf16, #tpu.memory_space<vmem>>, vector<1x64x32xbf16>
    %236 = vector.shape_cast %235 : vector<1x64x32xbf16> to vector<64x32xbf16>
    %cst_153 = arith.constant dense<0.000000e+00> : vector<16x32xf32>
    %237 = tpu.matmul %234, %236, %cst_153 {dimension_numbers = #tpu.dot_dimension_numbers<[1], [0], [0], [1], [0, 0, 1, 1], [], []>} : vector<16x64xbf16>, vector<64x32xbf16>, vector<16x32xf32> -> vector<16x32xf32>
    %c1_154 = arith.constant 1 : index
    %c0_155 = arith.constant 0 : index
    %c0_156 = arith.constant 0 : index
    %238 = vector.load %arg23[%c1_154, %c0_155, %c0_156] : memref<2x1x32xf32, #tpu.memory_space<vmem>>, vector<1x1x32xf32>
    %239 = vector.shape_cast %238 : vector<1x1x32xf32> to vector<1x32xf32>
    %240 = vector.broadcast %239 : vector<1x32xf32> to vector<16x32xf32>
    %241 = arith.addf %237, %240 : vector<16x32xf32>
    %242 = arith.addf %147, %241 : vector<16x32xf32>
    %cst_157 = arith.constant 0.000000e+00 : f32
    %243 = vector.broadcast %cst_157 : f32 to vector<16x32xf32>
    %244 = arith.maximumf %242, %243 : vector<16x32xf32>
    %245 = arith.truncf %244 : vector<16x32xf32> to vector<16x32xbf16>
    %cst_158 = arith.constant dense<0.000000e+00> : vector<2x32xf32>
    %246 = tpu.matmul %22, %245, %cst_158 {dimension_numbers = #tpu.dot_dimension_numbers<[1], [0], [0], [1], [0, 0, 1, 1], [], []>} : vector<2x16xbf16>, vector<16x32xbf16>, vector<2x32xf32> -> vector<2x32xf32>
    %247 = vector.broadcast %43 : vector<2x1xf32> to vector<2x32xf32>
    %248 = arith.mulf %246, %247 : vector<2x32xf32>
    %249 = arith.truncf %194 : vector<112x32xf32> to vector<112x32xbf16>
    %cst_159 = arith.constant dense<0.000000e+00> : vector<2x32xf32>
    %250 = tpu.matmul %29, %249, %cst_159 {dimension_numbers = #tpu.dot_dimension_numbers<[1], [0], [0], [1], [0, 0, 1, 1], [], []>} : vector<2x112xbf16>, vector<112x32xbf16>, vector<2x32xf32> -> vector<2x32xf32>
    %251 = vector.broadcast %50 : vector<2x1xf32> to vector<2x32xf32>
    %252 = arith.mulf %250, %251 : vector<2x32xf32>
    %253 = arith.truncf %248 : vector<2x32xf32> to vector<2x32xbf16>
    %c0_160 = arith.constant 0 : index
    %c0_161 = arith.constant 0 : index
    %254 = vector.load %arg24[%c0_160, %c0_161] : memref<32x64xbf16, #tpu.memory_space<vmem>>, vector<32x64xbf16>
    %cst_162 = arith.constant dense<0.000000e+00> : vector<2x64xf32>
    %255 = tpu.matmul %253, %254, %cst_162 {dimension_numbers = #tpu.dot_dimension_numbers<[1], [0], [0], [1], [0, 0, 1, 1], [], []>} : vector<2x32xbf16>, vector<32x64xbf16>, vector<2x64xf32> -> vector<2x64xf32>
    %256 = arith.truncf %252 : vector<2x32xf32> to vector<2x32xbf16>
    %c0_163 = arith.constant 0 : index
    %c0_164 = arith.constant 0 : index
    %257 = vector.load %arg25[%c0_163, %c0_164] : memref<32x64xbf16, #tpu.memory_space<vmem>>, vector<32x64xbf16>
    %cst_165 = arith.constant dense<0.000000e+00> : vector<2x64xf32>
    %258 = tpu.matmul %256, %257, %cst_165 {dimension_numbers = #tpu.dot_dimension_numbers<[1], [0], [0], [1], [0, 0, 1, 1], [], []>} : vector<2x32xbf16>, vector<32x64xbf16>, vector<2x64xf32> -> vector<2x64xf32>
    %259 = arith.addf %255, %258 : vector<2x64xf32>
    %c0_166 = arith.constant 0 : index
    %c0_167 = arith.constant 0 : index
    %260 = vector.load %arg26[%c0_166, %c0_167] : memref<1x64xf32, #tpu.memory_space<vmem>>, vector<1x64xf32>
    %261 = vector.broadcast %260 : vector<1x64xf32> to vector<2x64xf32>
    %262 = arith.addf %259, %261 : vector<2x64xf32>
    %cst_168 = arith.constant 0.000000e+00 : f32
    %263 = vector.broadcast %cst_168 : f32 to vector<2x64xf32>
    %264 = arith.maximumf %262, %263 : vector<2x64xf32>
    %265 = arith.truncf %264 : vector<2x64xf32> to vector<2x64xbf16>
    %c0_169 = arith.constant 0 : index
    %c0_170 = arith.constant 0 : index
    %266 = vector.load %arg27[%c0_169, %c0_170] : memref<64x32xbf16, #tpu.memory_space<vmem>>, vector<64x32xbf16>
    %cst_171 = arith.constant dense<0.000000e+00> : vector<2x32xf32>
    %267 = tpu.matmul %265, %266, %cst_171 {dimension_numbers = #tpu.dot_dimension_numbers<[1], [0], [0], [1], [0, 0, 1, 1], [], []>} : vector<2x64xbf16>, vector<64x32xbf16>, vector<2x32xf32> -> vector<2x32xf32>
    %c0_172 = arith.constant 0 : index
    %c0_173 = arith.constant 0 : index
    %268 = vector.load %arg28[%c0_172, %c0_173] : memref<1x32xf32, #tpu.memory_space<vmem>>, vector<1x32xf32>
    %269 = vector.broadcast %268 : vector<1x32xf32> to vector<2x32xf32>
    %270 = arith.addf %267, %269 : vector<2x32xf32>
    %cst_174 = arith.constant 0.000000e+00 : f32
    %271 = vector.broadcast %cst_174 : f32 to vector<2x32xf32>
    %272 = arith.maximumf %270, %271 : vector<2x32xf32>
    %273 = arith.truncf %272 : vector<2x32xf32> to vector<2x32xbf16>
    %c0_175 = arith.constant 0 : index
    %c0_176 = arith.constant 0 : index
    %274 = vector.load %arg29[%c0_175, %c0_176] : memref<32x4xbf16, #tpu.memory_space<vmem>>, vector<32x4xbf16>
    %cst_177 = arith.constant dense<0.000000e+00> : vector<2x4xf32>
    %275 = tpu.matmul %273, %274, %cst_177 {dimension_numbers = #tpu.dot_dimension_numbers<[1], [0], [0], [1], [0, 0, 1, 1], [], []>} : vector<2x32xbf16>, vector<32x4xbf16>, vector<2x4xf32> -> vector<2x4xf32>
    %c0_178 = arith.constant 0 : index
    %c0_179 = arith.constant 0 : index
    %276 = vector.load %arg30[%c0_178, %c0_179] : memref<1x4xf32, #tpu.memory_space<vmem>>, vector<1x4xf32>
    %277 = vector.broadcast %276 : vector<1x4xf32> to vector<2x4xf32>
    %278 = arith.addf %275, %277 : vector<2x4xf32>
    %c0_180 = arith.constant 0 : index
    %c0_181 = arith.constant 0 : index
    %279 = vector.load %arg31[%c0_180, %c0_181] : memref<2x4xf32, #tpu.memory_space<vmem>>, vector<2x4xf32>
    tpu.vector_store %arg31[%c0_180, %c0_181], %278 {strides = array<i32>} : memref<2x4xf32, #tpu.memory_space<vmem>>, vector<2x4xf32>,
    return
  }
  func.func @transform_0(%arg0: i32) -> (i32, i32) {
    %c0_i32 = arith.constant 0 : i32
    %c0_i32_0 = arith.constant 0 : i32
    %c0_i32_1 = arith.constant 0 : i32
    return %c0_i32, %c0_i32_0 : i32, i32
  }
  func.func @transform_1(%arg0: i32) -> (i32, i32) {
    %c0_i32 = arith.constant 0 : i32
    %c0_i32_0 = arith.constant 0 : i32
    %c0_i32_1 = arith.constant 0 : i32
    return %c0_i32, %c0_i32_0 : i32, i32
  }
  func.func @transform_2(%arg0: i32) -> (i32, i32) {
    %c0_i32 = arith.constant 0 : i32
    %c0_i32_0 = arith.constant 0 : i32
    %c0_i32_1 = arith.constant 0 : i32
    return %c0_i32, %c0_i32_0 : i32, i32
  }
  func.func @transform_3(%arg0: i32) -> (i32, i32) {
    %c0_i32 = arith.constant 0 : i32
    %c0_i32_0 = arith.constant 0 : i32
    %c0_i32_1 = arith.constant 0 : i32
    return %c0_i32, %c0_i32_0 : i32, i32
  }
  func.func @transform_4(%arg0: i32) -> (i32, i32) {
    %c0_i32 = arith.constant 0 : i32
    %c0_i32_0 = arith.constant 0 : i32
    %c0_i32_1 = arith.constant 0 : i32
    return %c0_i32, %c0_i32_0 : i32, i32
  }
  func.func @transform_5(%arg0: i32) -> (i32, i32) {
    %c0_i32 = arith.constant 0 : i32
    %c0_i32_0 = arith.constant 0 : i32
    %c0_i32_1 = arith.constant 0 : i32
    return %c0_i32, %c0_i32_0 : i32, i32
  }
  func.func @transform_6(%arg0: i32) -> (i32, i32, i32) {
    %c0_i32 = arith.constant 0 : i32
    %c0_i32_0 = arith.constant 0 : i32
    %c0_i32_1 = arith.constant 0 : i32
    %c0_i32_2 = arith.constant 0 : i32
    return %c0_i32, %c0_i32_0, %c0_i32_1 : i32, i32, i32
  }
  func.func @transform_7(%arg0: i32) -> (i32, i32, i32) {
    %c0_i32 = arith.constant 0 : i32
    %c0_i32_0 = arith.constant 0 : i32
    %c0_i32_1 = arith.constant 0 : i32
    %c0_i32_2 = arith.constant 0 : i32
    return %c0_i32, %c0_i32_0, %c0_i32_1 : i32, i32, i32
  }
  func.func @transform_8(%arg0: i32) -> (i32, i32, i32) {
    %c0_i32 = arith.constant 0 : i32
    %c0_i32_0 = arith.constant 0 : i32
    %c0_i32_1 = arith.constant 0 : i32
    %c0_i32_2 = arith.constant 0 : i32
    return %c0_i32, %c0_i32_0, %c0_i32_1 : i32, i32, i32
  }
  func.func @transform_9(%arg0: i32) -> (i32, i32, i32) {
    %c0_i32 = arith.constant 0 : i32
    %c0_i32_0 = arith.constant 0 : i32
    %c0_i32_1 = arith.constant 0 : i32
    %c0_i32_2 = arith.constant 0 : i32
    return %c0_i32, %c0_i32_0, %c0_i32_1 : i32, i32, i32
  }
  func.func @transform_10(%arg0: i32) -> (i32, i32, i32) {
    %c0_i32 = arith.constant 0 : i32
    %c0_i32_0 = arith.constant 0 : i32
    %c0_i32_1 = arith.constant 0 : i32
    %c0_i32_2 = arith.constant 0 : i32
    return %c0_i32, %c0_i32_0, %c0_i32_1 : i32, i32, i32
  }
  func.func @transform_11(%arg0: i32) -> (i32, i32, i32) {
    %c0_i32 = arith.constant 0 : i32
    %c0_i32_0 = arith.constant 0 : i32
    %c0_i32_1 = arith.constant 0 : i32
    %c0_i32_2 = arith.constant 0 : i32
    return %c0_i32, %c0_i32_0, %c0_i32_1 : i32, i32, i32
  }
  func.func @transform_12(%arg0: i32) -> (i32, i32, i32) {
    %c0_i32 = arith.constant 0 : i32
    %c0_i32_0 = arith.constant 0 : i32
    %c0_i32_1 = arith.constant 0 : i32
    %c0_i32_2 = arith.constant 0 : i32
    return %c0_i32, %c0_i32_0, %c0_i32_1 : i32, i32, i32
  }
  func.func @transform_13(%arg0: i32) -> (i32, i32, i32) {
    %c0_i32 = arith.constant 0 : i32
    %c0_i32_0 = arith.constant 0 : i32
    %c0_i32_1 = arith.constant 0 : i32
    %c0_i32_2 = arith.constant 0 : i32
    return %c0_i32, %c0_i32_0, %c0_i32_1 : i32, i32, i32
  }
  func.func @transform_14(%arg0: i32) -> (i32, i32, i32) {
    %c0_i32 = arith.constant 0 : i32
    %c0_i32_0 = arith.constant 0 : i32
    %c0_i32_1 = arith.constant 0 : i32
    %c0_i32_2 = arith.constant 0 : i32
    return %c0_i32, %c0_i32_0, %c0_i32_1 : i32, i32, i32
  }
  func.func @transform_15(%arg0: i32) -> (i32, i32, i32) {
    %c0_i32 = arith.constant 0 : i32
    %c0_i32_0 = arith.constant 0 : i32
    %c0_i32_1 = arith.constant 0 : i32
    %c0_i32_2 = arith.constant 0 : i32
    return %c0_i32, %c0_i32_0, %c0_i32_1 : i32, i32, i32
  }
  func.func @transform_16(%arg0: i32) -> (i32, i32, i32) {
    %c0_i32 = arith.constant 0 : i32
    %c0_i32_0 = arith.constant 0 : i32
    %c0_i32_1 = arith.constant 0 : i32
    %c0_i32_2 = arith.constant 0 : i32
    return %c0_i32, %c0_i32_0, %c0_i32_1 : i32, i32, i32
  }
  func.func @transform_17(%arg0: i32) -> (i32, i32, i32) {
    %c0_i32 = arith.constant 0 : i32
    %c0_i32_0 = arith.constant 0 : i32
    %c0_i32_1 = arith.constant 0 : i32
    %c0_i32_2 = arith.constant 0 : i32
    return %c0_i32, %c0_i32_0, %c0_i32_1 : i32, i32, i32
  }
  func.func @transform_18(%arg0: i32) -> (i32, i32, i32) {
    %c0_i32 = arith.constant 0 : i32
    %c0_i32_0 = arith.constant 0 : i32
    %c0_i32_1 = arith.constant 0 : i32
    %c0_i32_2 = arith.constant 0 : i32
    return %c0_i32, %c0_i32_0, %c0_i32_1 : i32, i32, i32
  }
  func.func @transform_19(%arg0: i32) -> (i32, i32, i32) {
    %c0_i32 = arith.constant 0 : i32
    %c0_i32_0 = arith.constant 0 : i32
    %c0_i32_1 = arith.constant 0 : i32
    %c0_i32_2 = arith.constant 0 : i32
    return %c0_i32, %c0_i32_0, %c0_i32_1 : i32, i32, i32
  }
  func.func @transform_20(%arg0: i32) -> (i32, i32, i32) {
    %c0_i32 = arith.constant 0 : i32
    %c0_i32_0 = arith.constant 0 : i32
    %c0_i32_1 = arith.constant 0 : i32
    %c0_i32_2 = arith.constant 0 : i32
    return %c0_i32, %c0_i32_0, %c0_i32_1 : i32, i32, i32
  }
  func.func @transform_21(%arg0: i32) -> (i32, i32, i32) {
    %c0_i32 = arith.constant 0 : i32
    %c0_i32_0 = arith.constant 0 : i32
    %c0_i32_1 = arith.constant 0 : i32
    %c0_i32_2 = arith.constant 0 : i32
    return %c0_i32, %c0_i32_0, %c0_i32_1 : i32, i32, i32
  }
  func.func @transform_22(%arg0: i32) -> (i32, i32, i32) {
    %c0_i32 = arith.constant 0 : i32
    %c0_i32_0 = arith.constant 0 : i32
    %c0_i32_1 = arith.constant 0 : i32
    %c0_i32_2 = arith.constant 0 : i32
    return %c0_i32, %c0_i32_0, %c0_i32_1 : i32, i32, i32
  }
  func.func @transform_23(%arg0: i32) -> (i32, i32) {
    %c0_i32 = arith.constant 0 : i32
    %c0_i32_0 = arith.constant 0 : i32
    %c0_i32_1 = arith.constant 0 : i32
    return %c0_i32, %c0_i32_0 : i32, i32
  }
  func.func @transform_24(%arg0: i32) -> (i32, i32) {
    %c0_i32 = arith.constant 0 : i32
    %c0_i32_0 = arith.constant 0 : i32
    %c0_i32_1 = arith.constant 0 : i32
    return %c0_i32, %c0_i32_0 : i32, i32
  }
  func.func @transform_25(%arg0: i32) -> (i32, i32) {
    %c0_i32 = arith.constant 0 : i32
    %c0_i32_0 = arith.constant 0 : i32
    %c0_i32_1 = arith.constant 0 : i32
    return %c0_i32, %c0_i32_0 : i32, i32
  }
  func.func @transform_26(%arg0: i32) -> (i32, i32) {
    %c0_i32 = arith.constant 0 : i32
    %c0_i32_0 = arith.constant 0 : i32
    %c0_i32_1 = arith.constant 0 : i32
    return %c0_i32, %c0_i32_0 : i32, i32
  }
  func.func @transform_27(%arg0: i32) -> (i32, i32) {
    %c0_i32 = arith.constant 0 : i32
    %c0_i32_0 = arith.constant 0 : i32
    %c0_i32_1 = arith.constant 0 : i32
    return %c0_i32, %c0_i32_0 : i32, i32
  }
  func.func @transform_28(%arg0: i32) -> (i32, i32) {
    %c0_i32 = arith.constant 0 : i32
    %c0_i32_0 = arith.constant 0 : i32
    %c0_i32_1 = arith.constant 0 : i32
    return %c0_i32, %c0_i32_0 : i32, i32
  }
  func.func @transform_29(%arg0: i32) -> (i32, i32) {
    %c0_i32 = arith.constant 0 : i32
    %c0_i32_0 = arith.constant 0 : i32
    %c0_i32_1 = arith.constant 0 : i32
    return %c0_i32, %c0_i32_0 : i32, i32
  }
  func.func @transform_30(%arg0: i32) -> (i32, i32) {
    %c0_i32 = arith.constant 0 : i32
    %c0_i32_0 = arith.constant 0 : i32
    %c0_i32_1 = arith.constant 0 : i32
    return %c0_i32, %c0_i32_0 : i32, i32
  }
}

</mosaic_0001>

<llo_original>
// kernel: tpu_custom_call.1
$region0: #{tpu_custom_call.1}
  #allocation0 [shape = 'u32[]', space=smem, size = 0x4, offset = 0x4, fixed_abs, tag = 'smem constant byte address 0x4 - core index']
  #allocation1 [shape = 'u32[72,128]{1,0:T(1,128)}', space=vmem, size = 0x9000, scoped, tag = 'internal scratch']
  %s0 = inlined_call_operand.smem [shape: u32[31], index: -1, kind: input, shape index: {}]
  %s1 = sld [smem:[%s0]]
  %s2 = scalar_lea.smem %s0, 1
  %s3 = sld [smem:[%s2]]
  %s4 = scalar_lea.smem %s0, 2
  %s5 = sld [smem:[%s4]]
  %s6 = scalar_lea.smem %s0, 3
  %s7 = sld [smem:[%s6]]
  %s8 = scalar_lea.smem %s0, 4
  %s9 = sld [smem:[%s8]]
  %s10 = scalar_lea.smem %s0, 5
  %s11 = sld [smem:[%s10]]
  %s12 = scalar_lea.smem %s0, 6
  %s13 = sld [smem:[%s12]]
  %s14 = scalar_lea.smem %s0, 7
  %s15 = sld [smem:[%s14]]
  %s16 = scalar_lea.smem %s0, 8
  %s17 = sld [smem:[%s16]]
  %s18 = scalar_lea.smem %s0, 9
  %s19 = sld [smem:[%s18]]
  %s20 = scalar_lea.smem %s0, 10
  %s21 = sld [smem:[%s20]]
  %s22 = scalar_lea.smem %s0, 11
  %s23 = sld [smem:[%s22]]
  %s24 = scalar_lea.smem %s0, 12
  %s25 = sld [smem:[%s24]]
  %s26 = scalar_lea.smem %s0, 13
  %s27 = sld [smem:[%s26]]
  %s28 = scalar_lea.smem %s0, 14
  %s29 = sld [smem:[%s28]]
  %s30 = scalar_lea.smem %s0, 15
  %s31 = sld [smem:[%s30]]
  %s32 = scalar_lea.smem %s0, 16
  %s33 = sld [smem:[%s32]]
  %s34 = scalar_lea.smem %s0, 17
  %s35 = sld [smem:[%s34]]
  %s36 = scalar_lea.smem %s0, 18
  %s37 = sld [smem:[%s36]]
  %s38 = scalar_lea.smem %s0, 19
  %s39 = sld [smem:[%s38]]
  %s40 = scalar_lea.smem %s0, 20
  %s41 = sld [smem:[%s40]]
  %s42 = scalar_lea.smem %s0, 21
  %s43 = sld [smem:[%s42]]
  %s44 = scalar_lea.smem %s0, 22
  %s45 = sld [smem:[%s44]]
  %s46 = scalar_lea.smem %s0, 23
  %s47 = sld [smem:[%s46]]
  %s48 = scalar_lea.smem %s0, 24
  %s49 = sld [smem:[%s48]]
  %s50 = scalar_lea.smem %s0, 25
  %s51 = sld [smem:[%s50]]
  %s52 = scalar_lea.smem %s0, 26
  %s53 = sld [smem:[%s52]]
  %s54 = scalar_lea.smem %s0, 27
  %s55 = sld [smem:[%s54]]
  %s56 = scalar_lea.smem %s0, 28
  %s57 = sld [smem:[%s56]]
  %s58 = scalar_lea.smem %s0, 29
  %s59 = sld [smem:[%s58]]
  %s60 = scalar_lea.smem %s0, 30
  %s61 = sld [smem:[%s60]]
  %s62 = sld [smem:[#allocation0]]
  $region130: #{tpu_custom_call.1} parent=0
    _
  %s64 = ssub.s32 1, %s62
  %s65 = scalar_select 0, %s64, %s62
  $region1: #{tpu_custom_call.1} parent=0
    #allocation2 [shape = 'u8[1024]{0}', space=vmem, size = 0x400, scoped, tag = 'output window, operand 0, single buffered']
    #allocation3 [shape = 's32[1]{0}', space=sflag, size = 0x4, scoped, tag = 'scoped memory for tpu_custom_call.1']
    %66 = vsyncpa [#allocation3], 0
    // Predicated region
    $region2: #{tpu_custom_call.1} parent=1 // pred_check
      _
    $region3: #{tpu_custom_call.1} parent=1 // pred_check_branch
      %68 = sbr.rel (0) target = $region5
    $region4: #{tpu_custom_call.1} parent=1 // pred_region
      _
    $region5: #{tpu_custom_call.1} parent=1 // pred_fallthru
      _
    // Predicated region
    $region6: #{tpu_custom_call.1} parent=1 // pred_check
      _
    $region7: #{tpu_custom_call.1} parent=1 // pred_check_branch
      %70 = sbr.rel (0) target = $region9
    $region8: #{tpu_custom_call.1} parent=1 // pred_region
      _
    $region9: #{tpu_custom_call.1} parent=1 // pred_fallthru
      _
    // Predicated region
    $region10: #{tpu_custom_call.1} parent=1 // pred_check
      _
    $region11: #{tpu_custom_call.1} parent=1 // pred_check_branch
      %72 = sbr.rel (0) target = $region13
    $region12: #{tpu_custom_call.1} parent=1 // pred_region
      _
    $region13: #{tpu_custom_call.1} parent=1 // pred_fallthru
      _
    // Predicated region
    $region14: #{tpu_custom_call.1} parent=1 // pred_check
      _
    $region15: #{tpu_custom_call.1} parent=1 // pred_check_branch
      %74 = sbr.rel (0) target = $region17
    $region16: #{tpu_custom_call.1} parent=1 // pred_region
      _
    $region17: #{tpu_custom_call.1} parent=1 // pred_fallthru
      _
    // Predicated region
    $region18: #{tpu_custom_call.1} parent=1 // pred_check
      _
    $region19: #{tpu_custom_call.1} parent=1 // pred_check_branch
      %76 = sbr.rel (0) target = $region21
    $region20: #{tpu_custom_call.1} parent=1 // pred_region
      _
    $region21: #{tpu_custom_call.1} parent=1 // pred_fallthru
      _
    // Predicated region
    $region22: #{tpu_custom_call.1} parent=1 // pred_check
      _
    $region23: #{tpu_custom_call.1} parent=1 // pred_check_branch
      %78 = sbr.rel (0) target = $region25
    $region24: #{tpu_custom_call.1} parent=1 // pred_region
      _
    $region25: #{tpu_custom_call.1} parent=1 // pred_fallthru
      _
    // Predicated region
    $region26: #{tpu_custom_call.1} parent=1 // pred_check
      _
    $region27: #{tpu_custom_call.1} parent=1 // pred_check_branch
      %80 = sbr.rel (0) target = $region29
    $region28: #{tpu_custom_call.1} parent=1 // pred_region
      _
    $region29: #{tpu_custom_call.1} parent=1 // pred_fallthru
      _
    // Predicated region
    $region30: #{tpu_custom_call.1} parent=1 // pred_check
      _
    $region31: #{tpu_custom_call.1} parent=1 // pred_check_branch
      %82 = sbr.rel (0) target = $region33
    $region32: #{tpu_custom_call.1} parent=1 // pred_region
      _
    $region33: #{tpu_custom_call.1} parent=1 // pred_fallthru
      _
    // Predicated region
    $region34: #{tpu_custom_call.1} parent=1 // pred_check
      _
    $region35: #{tpu_custom_call.1} parent=1 // pred_check_branch
      %84 = sbr.rel (0) target = $region37
    $region36: #{tpu_custom_call.1} parent=1 // pred_region
      _
    $region37: #{tpu_custom_call.1} parent=1 // pred_fallthru
      _
    // Predicated region
    $region38: #{tpu_custom_call.1} parent=1 // pred_check
      _
    $region39: #{tpu_custom_call.1} parent=1 // pred_check_branch
      %86 = sbr.rel (0) target = $region41
    $region40: #{tpu_custom_call.1} parent=1 // pred_region
      _
    $region41: #{tpu_custom_call.1} parent=1 // pred_fallthru
      _
    // Predicated region
    $region42: #{tpu_custom_call.1} parent=1 // pred_check
      _
    $region43: #{tpu_custom_call.1} parent=1 // pred_check_branch
      %88 = sbr.rel (0) target = $region45
    $region44: #{tpu_custom_call.1} parent=1 // pred_region
      _
    $region45: #{tpu_custom_call.1} parent=1 // pred_fallthru
      _
    // Predicated region
    $region46: #{tpu_custom_call.1} parent=1 // pred_check
      _
    $region47: #{tpu_custom_call.1} parent=1 // pred_check_branch
      %90 = sbr.rel (0) target = $region49
    $region48: #{tpu_custom_call.1} parent=1 // pred_region
      _
    $region49: #{tpu_custom_call.1} parent=1 // pred_fallthru
      _
    // Predicated region
    $region50: #{tpu_custom_call.1} parent=1 // pred_check
      _
    $region51: #{tpu_custom_call.1} parent=1 // pred_check_branch
      %92 = sbr.rel (0) target = $region53
    $region52: #{tpu_custom_call.1} parent=1 // pred_region
      _
    $region53: #{tpu_custom_call.1} parent=1 // pred_fallthru
      _
    // Predicated region
    $region54: #{tpu_custom_call.1} parent=1 // pred_check
      _
    $region55: #{tpu_custom_call.1} parent=1 // pred_check_branch
      %94 = sbr.rel (0) target = $region57
    $region56: #{tpu_custom_call.1} parent=1 // pred_region
      _
    $region57: #{tpu_custom_call.1} parent=1 // pred_fallthru
      _
    // Predicated region
    $region58: #{tpu_custom_call.1} parent=1 // pred_check
      _
    $region59: #{tpu_custom_call.1} parent=1 // pred_check_branch
      %96 = sbr.rel (0) target = $region61
    $region60: #{tpu_custom_call.1} parent=1 // pred_region
      _
    $region61: #{tpu_custom_call.1} parent=1 // pred_fallthru
      _
    // Predicated region
    $region62: #{tpu_custom_call.1} parent=1 // pred_check
      _
    $region63: #{tpu_custom_call.1} parent=1 // pred_check_branch
      %98 = sbr.rel (0) target = $region65
    $region64: #{tpu_custom_call.1} parent=1 // pred_region
      _
    $region65: #{tpu_custom_call.1} parent=1 // pred_fallthru
      _
    // Predicated region
    $region66: #{tpu_custom_call.1} parent=1 // pred_check
      _
    $region67: #{tpu_custom_call.1} parent=1 // pred_check_branch
      %100 = sbr.rel (0) target = $region69
    $region68: #{tpu_custom_call.1} parent=1 // pred_region
      _
    $region69: #{tpu_custom_call.1} parent=1 // pred_fallthru
      _
    // Predicated region
    $region70: #{tpu_custom_call.1} parent=1 // pred_check
      _
    $region71: #{tpu_custom_call.1} parent=1 // pred_check_branch
      %102 = sbr.rel (0) target = $region73
    $region72: #{tpu_custom_call.1} parent=1 // pred_region
      _
    $region73: #{tpu_custom_call.1} parent=1 // pred_fallthru
      _
    // Predicated region
    $region74: #{tpu_custom_call.1} parent=1 // pred_check
      _
    $region75: #{tpu_custom_call.1} parent=1 // pred_check_branch
      %104 = sbr.rel (0) target = $region77
    $region76: #{tpu_custom_call.1} parent=1 // pred_region
      _
    $region77: #{tpu_custom_call.1} parent=1 // pred_fallthru
      _
    // Predicated region
    $region78: #{tpu_custom_call.1} parent=1 // pred_check
      _
    $region79: #{tpu_custom_call.1} parent=1 // pred_check_branch
      %106 = sbr.rel (0) target = $region81
    $region80: #{tpu_custom_call.1} parent=1 // pred_region
      _
    $region81: #{tpu_custom_call.1} parent=1 // pred_fallthru
      _
    // Predicated region
    $region82: #{tpu_custom_call.1} parent=1 // pred_check
      _
    $region83: #{tpu_custom_call.1} parent=1 // pred_check_branch
      %108 = sbr.rel (0) target = $region85
    $region84: #{tpu_custom_call.1} parent=1 // pred_region
      _
    $region85: #{tpu_custom_call.1} parent=1 // pred_fallthru
      _
    // Predicated region
    $region86: #{tpu_custom_call.1} parent=1 // pred_check
      _
    $region87: #{tpu_custom_call.1} parent=1 // pred_check_branch
      %110 = sbr.rel (0) target = $region89
    $region88: #{tpu_custom_call.1} parent=1 // pred_region
      _
    $region89: #{tpu_custom_call.1} parent=1 // pred_fallthru
      _
    // Predicated region
    $region90: #{tpu_custom_call.1} parent=1 // pred_check
      _
    $region91: #{tpu_custom_call.1} parent=1 // pred_check_branch
      %112 = sbr.rel (0) target = $region93
    $region92: #{tpu_custom_call.1} parent=1 // pred_region
      _
    $region93: #{tpu_custom_call.1} parent=1 // pred_fallthru
      _
    // Predicated region
    $region94: #{tpu_custom_call.1} parent=1 // pred_check
      _
    $region95: #{tpu_custom_call.1} parent=1 // pred_check_branch
      %114 = sbr.rel (0) target = $region97
    $region96: #{tpu_custom_call.1} parent=1 // pred_region
      _
    $region97: #{tpu_custom_call.1} parent=1 // pred_fallthru
      _
    // Predicated region
    $region98: #{tpu_custom_call.1} parent=1 // pred_check
      _
    $region99: #{tpu_custom_call.1} parent=1 // pred_check_branch
      %116 = sbr.rel (0) target = $region101
    $region100: #{tpu_custom_call.1} parent=1 // pred_region
      _
    $region101: #{tpu_custom_call.1} parent=1 // pred_fallthru
      _
    // Predicated region
    $region102: #{tpu_custom_call.1} parent=1 // pred_check
      _
    $region103: #{tpu_custom_call.1} parent=1 // pred_check_branch
      %118 = sbr.rel (0) target = $region105
    $region104: #{tpu_custom_call.1} parent=1 // pred_region
      _
    $region105: #{tpu_custom_call.1} parent=1 // pred_fallthru
      _
    // Predicated region
    $region106: #{tpu_custom_call.1} parent=1 // pred_check
      _
    $region107: #{tpu_custom_call.1} parent=1 // pred_check_branch
      %120 = sbr.rel (0) target = $region109
    $region108: #{tpu_custom_call.1} parent=1 // pred_region
      _
    $region109: #{tpu_custom_call.1} parent=1 // pred_fallthru
      _
    // Predicated region
    $region110: #{tpu_custom_call.1} parent=1 // pred_check
      _
    $region111: #{tpu_custom_call.1} parent=1 // pred_check_branch
      %122 = sbr.rel (0) target = $region113
    $region112: #{tpu_custom_call.1} parent=1 // pred_region
      _
    $region113: #{tpu_custom_call.1} parent=1 // pred_fallthru
      _
    // Predicated region
    $region114: #{tpu_custom_call.1} parent=1 // pred_check
      _
    $region115: #{tpu_custom_call.1} parent=1 // pred_check_branch
      %124 = sbr.rel (0) target = $region117
    $region116: #{tpu_custom_call.1} parent=1 // pred_region
      _
    $region117: #{tpu_custom_call.1} parent=1 // pred_fallthru
      _
    // Predicated region
    $region118: #{tpu_custom_call.1} parent=1 // pred_check
      _
    $region119: #{tpu_custom_call.1} parent=1 // pred_check_branch
      %126 = sbr.rel (0) target = $region121
    $region120: #{tpu_custom_call.1} parent=1 // pred_region
      _
    $region121: #{tpu_custom_call.1} parent=1 // pred_fallthru
      _
    %v128 = vld [vmem:[%s1] sm:$0xff]
    %v129 = vld [vmem:[%s1 + $0x8] sm:$0xff]
    %v130 = vld [vmem:[%s3] sm:$0xff]
    %v131 = vld [vmem:[%s3 + $0x8] sm:$0xff]
    %v132 = vld [vmem:[%s3 + $0x10] sm:$0xff]
    %v133 = vld [vmem:[%s3 + $0x18] sm:$0xff]
    %v134 = vld [vmem:[%s3 + $0x20] sm:$0xff]
    %v135 = vld [vmem:[%s3 + $0x28] sm:$0xff]
    %v136 = vld [vmem:[%s3 + $0x30] sm:$0xff]
    %v137 = vld [vmem:[%s3 + $0x38] sm:$0xff]
    %v138 = vld [vmem:[%s3 + $0x40] sm:$0xff]
    %v139 = vld [vmem:[%s3 + $0x48] sm:$0xff]
    %v140 = vld [vmem:[%s3 + $0x50] sm:$0xff]
    %v141 = vld [vmem:[%s3 + $0x58] sm:$0xff]
    %v142 = vld [vmem:[%s3 + $0x60] sm:$0xff]
    %v143 = vld [vmem:[%s3 + $0x68] sm:$0xff]
    %v144 = vlaneseq
    %v145 = vand.u32 %v144, 127
    %v146 = vld [vmem:[%s5] sm:$0xff]
    %v147 = vld [vmem:[%s5 + $0x8] sm:$0xff]
    %v148 = vld [vmem:[%s5 + $0x10] sm:$0xff]
    %v149 = vld [vmem:[%s5 + $0x18] sm:$0xff]
    %v150 = vld [vmem:[%s5 + $0x20] sm:$0xff]
    %v151 = vld [vmem:[%s5 + $0x28] sm:$0xff]
    %v152 = vld [vmem:[%s5 + $0x30] sm:$0xff]
    %v153 = vld [vmem:[%s5 + $0x38] sm:$0xff]
    %v154 = vld [vmem:[%s5 + $0x40] sm:$0xff]
    %v155 = vld [vmem:[%s5 + $0x48] sm:$0xff]
    %v156 = vld [vmem:[%s5 + $0x50] sm:$0xff]
    %v157 = vld [vmem:[%s5 + $0x58] sm:$0xff]
    %v158 = vld [vmem:[%s5 + $0x60] sm:$0xff]
    %v159 = vld [vmem:[%s5 + $0x68] sm:$0xff]
    %v160 = vld [vmem:[%s5 + $0x70] sm:$0xff]
    %v161 = vld [vmem:[%s5 + $0x78] sm:$0xff]
    %v162 = vld [vmem:[%s5 + $0x80] sm:$0xff]
    %v163 = vld [vmem:[%s5 + $0x88] sm:$0xff]
    %v164 = vld [vmem:[%s5 + $0x90] sm:$0xff]
    %v165 = vld [vmem:[%s5 + $0x98] sm:$0xff]
    %v166 = vld [vmem:[%s5 + $0xa0] sm:$0xff]
    %v167 = vld [vmem:[%s5 + $0xa8] sm:$0xff]
    %v168 = vld [vmem:[%s5 + $0xb0] sm:$0xff]
    %v169 = vld [vmem:[%s5 + $0xb8] sm:$0xff]
    %v170 = vld [vmem:[%s5 + $0xc0] sm:$0xff]
    %v171 = vld [vmem:[%s5 + $0xc8] sm:$0xff]
    %v172 = vld [vmem:[%s5 + $0xd0] sm:$0xff]
    %v173 = vld [vmem:[%s5 + $0xd8] sm:$0xff]
    %174 = vset.pattern.permute.xlu0 0
    %175 = vperm.xlu0 %174, %v146
    %v176 = vpop.permute.xlu0 %175
    %177 = vset.pattern.permute.xlu0 0
    %178 = vperm.xlu0 %177, %v147
    %v179 = vpop.permute.xlu0 %178
    %180 = vset.pattern.permute.xlu0 0
    %181 = vperm.xlu0 %180, %v148
    %v182 = vpop.permute.xlu0 %181
    %183 = vset.pattern.permute.xlu0 0
    %184 = vperm.xlu0 %183, %v149
    %v185 = vpop.permute.xlu0 %184
    %186 = vset.pattern.permute.xlu0 0
    %187 = vperm.xlu0 %186, %v150
    %v188 = vpop.permute.xlu0 %187
    %189 = vset.pattern.permute.xlu0 0
    %190 = vperm.xlu0 %189, %v151
    %v191 = vpop.permute.xlu0 %190
    %192 = vset.pattern.permute.xlu0 0
    %193 = vperm.xlu0 %192, %v152
    %v194 = vpop.permute.xlu0 %193
    %195 = vset.pattern.permute.xlu0 0
    %196 = vperm.xlu0 %195, %v153
    %v197 = vpop.permute.xlu0 %196
    %198 = vset.pattern.permute.xlu0 0
    %199 = vperm.xlu0 %198, %v154
    %v200 = vpop.permute.xlu0 %199
    %201 = vset.pattern.permute.xlu0 0
    %202 = vperm.xlu0 %201, %v155
    %v203 = vpop.permute.xlu0 %202
    %204 = vset.pattern.permute.xlu0 0
    %205 = vperm.xlu0 %204, %v156
    %v206 = vpop.permute.xlu0 %205
    %207 = vset.pattern.permute.xlu0 0
    %208 = vperm.xlu0 %207, %v157
    %v209 = vpop.permute.xlu0 %208
    %210 = vset.pattern.permute.xlu0 0
    %211 = vperm.xlu0 %210, %v158
    %v212 = vpop.permute.xlu0 %211
    %213 = vset.pattern.permute.xlu0 0
    %214 = vperm.xlu0 %213, %v159
    %v215 = vpop.permute.xlu0 %214
    %216 = vset.pattern.permute.xlu0 0
    %217 = vperm.xlu0 %216, %v160
    %v218 = vpop.permute.xlu0 %217
    %219 = vset.pattern.permute.xlu0 0
    %220 = vperm.xlu0 %219, %v161
    %v221 = vpop.permute.xlu0 %220
    %222 = vset.pattern.permute.xlu0 0
    %223 = vperm.xlu0 %222, %v162
    %v224 = vpop.permute.xlu0 %223
    %225 = vset.pattern.permute.xlu0 0
    %226 = vperm.xlu0 %225, %v163
    %v227 = vpop.permute.xlu0 %226
    %228 = vset.pattern.permute.xlu0 0
    %229 = vperm.xlu0 %228, %v164
    %v230 = vpop.permute.xlu0 %229
    %231 = vset.pattern.permute.xlu0 0
    %232 = vperm.xlu0 %231, %v165
    %v233 = vpop.permute.xlu0 %232
    %234 = vset.pattern.permute.xlu0 0
    %235 = vperm.xlu0 %234, %v166
    %v236 = vpop.permute.xlu0 %235
    %237 = vset.pattern.permute.xlu0 0
    %238 = vperm.xlu0 %237, %v167
    %v239 = vpop.permute.xlu0 %238
    %240 = vset.pattern.permute.xlu0 0
    %241 = vperm.xlu0 %240, %v168
    %v242 = vpop.permute.xlu0 %241
    %243 = vset.pattern.permute.xlu0 0
    %244 = vperm.xlu0 %243, %v169
    %v245 = vpop.permute.xlu0 %244
    %246 = vset.pattern.permute.xlu0 0
    %247 = vperm.xlu0 %246, %v170
    %v248 = vpop.permute.xlu0 %247
    %249 = vset.pattern.permute.xlu0 0
    %250 = vperm.xlu0 %249, %v171
    %v251 = vpop.permute.xlu0 %250
    %252 = vset.pattern.permute.xlu0 0
    %253 = vperm.xlu0 %252, %v172
    %v254 = vpop.permute.xlu0 %253
    %255 = vset.pattern.permute.xlu0 0
    %256 = vperm.xlu0 %255, %v173
    %v257 = vpop.permute.xlu0 %256
    %vm258 = vcmp.eq.s32.totalorder %v176, %v145
    %vm259 = vcmp.eq.s32.totalorder %v179, %v145
    %vm260 = vcmp.eq.s32.totalorder %v182, %v145
    %vm261 = vcmp.eq.s32.totalorder %v185, %v145
    %vm262 = vcmp.eq.s32.totalorder %v188, %v145
    %vm263 = vcmp.eq.s32.totalorder %v191, %v145
    %vm264 = vcmp.eq.s32.totalorder %v194, %v145
    %vm265 = vcmp.eq.s32.totalorder %v197, %v145
    %vm266 = vcmp.eq.s32.totalorder %v200, %v145
    %vm267 = vcmp.eq.s32.totalorder %v203, %v145
    %vm268 = vcmp.eq.s32.totalorder %v206, %v145
    %vm269 = vcmp.eq.s32.totalorder %v209, %v145
    %vm270 = vcmp.eq.s32.totalorder %v212, %v145
    %vm271 = vcmp.eq.s32.totalorder %v215, %v145
    %vm272 = vcmp.eq.s32.totalorder %v218, %v145
    %vm273 = vcmp.eq.s32.totalorder %v221, %v145
    %vm274 = vcmp.eq.s32.totalorder %v224, %v145
    %vm275 = vcmp.eq.s32.totalorder %v227, %v145
    %vm276 = vcmp.eq.s32.totalorder %v230, %v145
    %vm277 = vcmp.eq.s32.totalorder %v233, %v145
    %vm278 = vcmp.eq.s32.totalorder %v236, %v145
    %vm279 = vcmp.eq.s32.totalorder %v239, %v145
    %vm280 = vcmp.eq.s32.totalorder %v242, %v145
    %vm281 = vcmp.eq.s32.totalorder %v245, %v145
    %vm282 = vcmp.eq.s32.totalorder %v248, %v145
    %vm283 = vcmp.eq.s32.totalorder %v251, %v145
    %vm284 = vcmp.eq.s32.totalorder %v254, %v145
    %vm285 = vcmp.eq.s32.totalorder %v257, %v145
    %v286 = vsel %vm258, 1, 0
    %v287 = vsel %vm259, 1, 0
    %v288 = vsel %vm260, 1, 0
    %v289 = vsel %vm261, 1, 0
    %v290 = vsel %vm262, 1, 0
    %v291 = vsel %vm263, 1, 0
    %v292 = vsel %vm264, 1, 0
    %v293 = vsel %vm265, 1, 0
    %v294 = vsel %vm266, 1, 0
    %v295 = vsel %vm267, 1, 0
    %v296 = vsel %vm268, 1, 0
    %v297 = vsel %vm269, 1, 0
    %v298 = vsel %vm270, 1, 0
    %v299 = vsel %vm271, 1, 0
    %v300 = vsel %vm272, 1, 0
    %v301 = vsel %vm273, 1, 0
    %v302 = vsel %vm274, 1, 0
    %v303 = vsel %vm275, 1, 0
    %v304 = vsel %vm276, 1, 0
    %v305 = vsel %vm277, 1, 0
    %v306 = vsel %vm278, 1, 0
    %v307 = vsel %vm279, 1, 0
    %v308 = vsel %vm280, 1, 0
    %v309 = vsel %vm281, 1, 0
    %v310 = vsel %vm282, 1, 0
    %v311 = vsel %vm283, 1, 0
    %v312 = vsel %vm284, 1, 0
    %v313 = vsel %vm285, 1, 0
    %v314 = vcvt.s32.f32 %v286
    %v315 = vcvt.s32.f32 %v287
    %v316 = vcvt.s32.f32 %v288
    %v317 = vcvt.s32.f32 %v289
    %v318 = vcvt.s32.f32 %v290
    %v319 = vcvt.s32.f32 %v291
    %v320 = vcvt.s32.f32 %v292
    %v321 = vcvt.s32.f32 %v293
    %v322 = vcvt.s32.f32 %v294
    %v323 = vcvt.s32.f32 %v295
    %v324 = vcvt.s32.f32 %v296
    %v325 = vcvt.s32.f32 %v297
    %v326 = vcvt.s32.f32 %v298
    %v327 = vcvt.s32.f32 %v299
    %v328 = vcvt.s32.f32 %v300
    %v329 = vcvt.s32.f32 %v301
    %v330 = vcvt.s32.f32 %v302
    %v331 = vcvt.s32.f32 %v303
    %v332 = vcvt.s32.f32 %v304
    %v333 = vcvt.s32.f32 %v305
    %v334 = vcvt.s32.f32 %v306
    %v335 = vcvt.s32.f32 %v307
    %v336 = vcvt.s32.f32 %v308
    %v337 = vcvt.s32.f32 %v309
    %v338 = vcvt.s32.f32 %v310
    %v339 = vcvt.s32.f32 %v311
    %v340 = vcvt.s32.f32 %v312
    %v341 = vcvt.s32.f32 %v313
    %v342 = vpack.c.bf16 %v315, %v314
    %v343 = vpack.c.bf16 %v317, %v316
    %v344 = vpack.c.bf16 %v319, %v318
    %v345 = vpack.c.bf16 %v321, %v320
    %v346 = vpack.c.bf16 %v323, %v322
    %v347 = vpack.c.bf16 %v325, %v324
    %v348 = vpack.c.bf16 %v327, %v326
    %v349 = vpack.c.bf16 %v329, %v328
    %v350 = vpack.c.bf16 %v331, %v330
    %v351 = vpack.c.bf16 %v333, %v332
    %v352 = vpack.c.bf16 %v335, %v334
    %v353 = vpack.c.bf16 %v337, %v336
    %v354 = vpack.c.bf16 %v339, %v338
    %v355 = vpack.c.bf16 %v341, %v340
    %v356 = vlaneseq
    %v357 = vshrl.u32 %v356, 7
    %v358 = vadd.s32 %v357, 8
    %v359 = vld [vmem:[%s7] sm:$0x1]
    %v360 = vperm.slane %v359, 0
    %vm361 = vcmp.eq.s32.totalorder %v360, %v357
    %vm362 = vcmp.eq.s32.totalorder %v360, %v358
    %v363 = vsel %vm361, 1, 0
    %v364 = vsel %vm362, 1, 0
    %v365 = vcvt.s32.f32 %v363
    %v366 = vcvt.s32.f32 %v364
    %v367 = vpack.c.bf16 %v366, %v365
    %v368 = vld [vmem:[%s9] sm:$0x1]
    %v369 = vperm.slane %v368, 0
    %vm370 = vcmp.eq.s32.totalorder %v369, %v357
    %v371 = vsel %vm370, 1, 0
    %v372 = vcvt.s32.f32 %v371
    %v373 = vpack.c.bf16 %v372, %v372
    %v374 = vld [vmem:[%s11] sm:$0x1]
    %v375 = vperm.slane %v374, 0
    %vm376 = vcmp.eq.s32.totalorder %v375, %v357
    %v377 = vsel %vm376, 1, 0
    %v378 = vcvt.s32.f32 %v377
    %v379 = vpack.c.bf16 %v378, %v378
    %v380 = vunpack.c.l.bf16 %v367
    %v381 = vunpack.c.h.bf16 %v367
    %vm382 = vcmask 916480
    %v383 = vsel %vm382, %v380, 0.0
    %384 = vadd.xlane.f32.xlu0 %v383
    %v385 = vpop.xlane.xlu0 %384
    %v386 = vsel %vm382, %v381, 0.0
    %387 = vadd.xlane.f32.xlu0 %v386
    %v388 = vpop.xlane.xlu0 %387
    %v389 = vmax.f32 %v385, 1.0
    %v390 = vmax.f32 %v388, 1.0
    %v391 = vrcp.pop %v389
    %v392 = vmul.f32 %v389, %v391
    %v393 = vsub.f32 1.0, %v392
    %v394 = vmul.f32 %v391, %v393
    %v395 = vadd.f32 %v391, %v394
    %vm396 = vweird.f32 %v389
    %vm397 = vweird.f32 %v391
    %vm398 = vmor %vm396, %vm397
    %v399 = vsel %vm398, %v391, %v395
    %v400 = vand.u32 2147483647, %v389
    %vm401 = vcmp.eq.f32.partialorder %v400, 8.507059e+37
    %v402 = vand.u32 %v389, 2147483648
    %v403 = vor.u32 1.1754944e-38, %v402
    %v404 = vsel %vm401, %v403, %v399
    %v405 = vmul.f32 1.0, %v404
    %v406 = vrcp.pop %v390
    %v407 = vmul.f32 %v390, %v406
    %v408 = vsub.f32 1.0, %v407
    %v409 = vmul.f32 %v406, %v408
    %v410 = vadd.f32 %v406, %v409
    %vm411 = vweird.f32 %v390
    %vm412 = vweird.f32 %v406
    %vm413 = vmor %vm411, %vm412
    %v414 = vsel %vm413, %v406, %v410
    %v415 = vand.u32 2147483647, %v390
    %vm416 = vcmp.eq.f32.partialorder %v415, 8.507059e+37
    %v417 = vand.u32 %v390, 2147483648
    %v418 = vor.u32 1.1754944e-38, %v417
    %v419 = vsel %vm416, %v418, %v414
    %v420 = vmul.f32 1.0, %v419
    %v421 = vunpack.c.l.bf16 %v373
    %vm422 = vcmask 123904
    %v423 = vsel %vm422, %v421, 0.0
    %424 = vadd.xlane.f32.xlu0 %v423
    %v425 = vpop.xlane.xlu0 %424
    %v426 = vmax.f32 %v425, 1.0
    %v427 = vrcp.pop %v426
    %v428 = vmul.f32 %v426, %v427
    %v429 = vsub.f32 1.0, %v428
    %v430 = vmul.f32 %v427, %v429
    %v431 = vadd.f32 %v427, %v430
    %vm432 = vweird.f32 %v426
    %vm433 = vweird.f32 %v427
    %vm434 = vmor %vm432, %vm433
    %v435 = vsel %vm434, %v427, %v431
    %v436 = vand.u32 2147483647, %v426
    %vm437 = vcmp.eq.f32.partialorder %v436, 8.507059e+37
    %v438 = vand.u32 %v426, 2147483648
    %v439 = vor.u32 1.1754944e-38, %v438
    %v440 = vsel %vm437, %v439, %v435
    %v441 = vmul.f32 1.0, %v440
    %v442 = vunpack.c.l.bf16 %v379
    %vm443 = vcmask 910336
    %v444 = vsel %vm443, %v442, 0.0
    %445 = vadd.xlane.f32.xlu0 %v444
    %v446 = vpop.xlane.xlu0 %445
    %v447 = vmax.f32 %v446, 1.0
    %v448 = vrcp.pop %v447
    %v449 = vmul.f32 %v447, %v448
    %v450 = vsub.f32 1.0, %v449
    %v451 = vmul.f32 %v448, %v450
    %v452 = vadd.f32 %v448, %v451
    %vm453 = vweird.f32 %v447
    %vm454 = vweird.f32 %v448
    %vm455 = vmor %vm453, %vm454
    %v456 = vsel %vm455, %v448, %v452
    %v457 = vand.u32 2147483647, %v447
    %vm458 = vcmp.eq.f32.partialorder %v457, 8.507059e+37
    %v459 = vand.u32 %v447, 2147483648
    %v460 = vor.u32 1.1754944e-38, %v459
    %v461 = vsel %vm458, %v460, %v456
    %v462 = vmul.f32 1.0, %v461
    %v463 = vpack.c.bf16 %v129, %v128
    %v464 = vpack.c.bf16 %v131, %v130
    %v465 = vpack.c.bf16 %v133, %v132
    %v466 = vpack.c.bf16 %v135, %v134
    %v467 = vpack.c.bf16 %v137, %v136
    %v468 = vpack.c.bf16 %v139, %v138
    %v469 = vpack.c.bf16 %v141, %v140
    %v470 = vpack.c.bf16 %v143, %v142
    %vm471 = vcmask 130048
    %v473 = vsel %vm471, %v342, 0
    %v476 = vsel %vm471, %v343, 0
    %v479 = vsel %vm471, %v344, 0
    %v482 = vsel %vm471, %v345, 0
    %v485 = vsel %vm471, %v346, 0
    %v488 = vsel %vm471, %v347, 0
    %v491 = vsel %vm471, %v348, 0
    %v494 = vsel %vm471, %v349, 0
    %v497 = vsel %vm471, %v350, 0
    %v500 = vsel %vm471, %v351, 0
    %v503 = vsel %vm471, %v352, 0
    %v506 = vsel %vm471, %v353, 0
    %v509 = vsel %vm471, %v354, 0
    %v512 = vsel %vm471, %v355, 0
    %514 = vmatpush.bf16.msra.mxu0 0
    %515 = vmatpush.bf16.msra.mxu0 0
    %516 = vmatpush.bf16.msra.mxu0 0
    %517 = vmatpush.bf16.msra.mxu0 0
    %518 = vmatpush.bf16.msra.mxu0 0
    %519 = vmatpush.bf16.msra.mxu0 0
    %520 = vmatpush.bf16.msra.mxu0 0
    %521 = vmatpush.bf16.msra.mxu0 %v463
    %522 = vmatmul.bf16.gmra.mxu0 %v473
    %v523 = vpop.f32.mrf.mxu0
    %v524 = vadd.f32 0.0, %v523
    %v525 = vpop.f32.mrf.mxu0
    %v526 = vadd.f32 0.0, %v525
    %527 = vmatmul.bf16.gmra.mxu0 %v476
    %v528 = vpop.f32.mrf.mxu0
    %v529 = vadd.f32 0.0, %v528
    %v530 = vpop.f32.mrf.mxu0
    %v531 = vadd.f32 0.0, %v530
    %532 = vmatmul.bf16.gmra.mxu0 %v479
    %v533 = vpop.f32.mrf.mxu0
    %v534 = vadd.f32 0.0, %v533
    %v535 = vpop.f32.mrf.mxu0
    %v536 = vadd.f32 0.0, %v535
    %537 = vmatmul.bf16.gmra.mxu0 %v482
    %v538 = vpop.f32.mrf.mxu0
    %v539 = vadd.f32 0.0, %v538
    %v540 = vpop.f32.mrf.mxu0
    %v541 = vadd.f32 0.0, %v540
    %542 = vmatmul.bf16.gmra.mxu0 %v485
    %v543 = vpop.f32.mrf.mxu0
    %v544 = vadd.f32 0.0, %v543
    %v545 = vpop.f32.mrf.mxu0
    %v546 = vadd.f32 0.0, %v545
    %547 = vmatmul.bf16.gmra.mxu0 %v488
    %v548 = vpop.f32.mrf.mxu0
    %v549 = vadd.f32 0.0, %v548
    %v550 = vpop.f32.mrf.mxu0
    %v551 = vadd.f32 0.0, %v550
    %552 = vmatmul.bf16.gmra.mxu0 %v491
    %v553 = vpop.f32.mrf.mxu0
    %v554 = vadd.f32 0.0, %v553
    %v555 = vpop.f32.mrf.mxu0
    %v556 = vadd.f32 0.0, %v555
    %557 = vmatmul.bf16.gmra.mxu0 %v494
    %v558 = vpop.f32.mrf.mxu0
    %v559 = vadd.f32 0.0, %v558
    %v560 = vpop.f32.mrf.mxu0
    %v561 = vadd.f32 0.0, %v560
    %562 = vmatmul.bf16.gmra.mxu0 %v497
    %v563 = vpop.f32.mrf.mxu0
    %v564 = vadd.f32 0.0, %v563
    %v565 = vpop.f32.mrf.mxu0
    %v566 = vadd.f32 0.0, %v565
    %567 = vmatmul.bf16.gmra.mxu0 %v500
    %v568 = vpop.f32.mrf.mxu0
    %v569 = vadd.f32 0.0, %v568
    %v570 = vpop.f32.mrf.mxu0
    %v571 = vadd.f32 0.0, %v570
    %572 = vmatmul.bf16.gmra.mxu0 %v503
    %v573 = vpop.f32.mrf.mxu0
    %v574 = vadd.f32 0.0, %v573
    %v575 = vpop.f32.mrf.mxu0
    %v576 = vadd.f32 0.0, %v575
    %577 = vmatmul.bf16.gmra.mxu0 %v506
    %v578 = vpop.f32.mrf.mxu0
    %v579 = vadd.f32 0.0, %v578
    %v580 = vpop.f32.mrf.mxu0
    %v581 = vadd.f32 0.0, %v580
    %582 = vmatmul.bf16.gmra.mxu0 %v509
    %v583 = vpop.f32.mrf.mxu0
    %v584 = vadd.f32 0.0, %v583
    %v585 = vpop.f32.mrf.mxu0
    %v586 = vadd.f32 0.0, %v585
    %587 = vmatmul.bf16.gmra.mxu0 %v512
    %v588 = vpop.f32.mrf.mxu0
    %v589 = vadd.f32 0.0, %v588
    %v590 = vpop.f32.mrf.mxu0
    %v591 = vadd.f32 0.0, %v590
    %592 = vdwg.mxu0
    %v593 = vpack.c.bf16 %v526, %v524
    %v594 = vpack.c.bf16 %v531, %v529
    %v595 = vpack.c.bf16 %v536, %v534
    %v596 = vpack.c.bf16 %v541, %v539
    %v597 = vpack.c.bf16 %v546, %v544
    %v598 = vpack.c.bf16 %v551, %v549
    %v599 = vpack.c.bf16 %v556, %v554
    %v600 = vpack.c.bf16 %v561, %v559
    %v601 = vpack.c.bf16 %v566, %v564
    %v602 = vpack.c.bf16 %v571, %v569
    %v603 = vpack.c.bf16 %v576, %v574
    %v604 = vpack.c.bf16 %v581, %v579
    %v605 = vpack.c.bf16 %v586, %v584
    %v606 = vpack.c.bf16 %v591, %v589
    %v607 = vld [vmem:[%s13] sm:$0xf]
    %v608 = vld [vmem:[%s13 + $0x4] sm:$0xf]
    %v609 = vld [vmem:[%s13 + $0x8] sm:$0xf]
    %v610 = vld [vmem:[%s13 + $0xc] sm:$0xf]
    %v615 = vunpack.c.l.b16 %v607
    %v616 = vunpack.c.l.b16 %v608
    %v617 = vunpack.c.l.b16 %v609
    %v618 = vunpack.c.l.b16 %v610
    %v619 = vpack.c.b16 %v616, %v615
    %v620 = vpack.c.b16 %v618, %v617
    %vm623 = vcmask 261120
    %v625 = vsel %vm623, %v593, 0
    %v628 = vsel %vm623, %v594, 0
    %v631 = vsel %vm623, %v595, 0
    %v634 = vsel %vm623, %v596, 0
    %v637 = vsel %vm623, %v597, 0
    %v640 = vsel %vm623, %v598, 0
    %v643 = vsel %vm623, %v599, 0
    %645 = vmatpush.bf16.msra.mxu0 0
    %646 = vmatpush.bf16.msra.mxu0 0
    %647 = vmatpush.bf16.msra.mxu0 0
    %648 = vmatpush.bf16.msra.mxu0 0
    %649 = vmatpush.bf16.msra.mxu0 0
    %650 = vmatpush.bf16.msra.mxu0 0
    %651 = vmatpush.bf16.msra.mxu0 %v620
    %652 = vmatpush.bf16.msra.mxu0 %v619
    %653 = vmatmul.bf16.gmra.mxu0 %v625
    %v654 = vpop.f32.mrf.mxu0
    %v655 = vadd.f32 0.0, %v654
    %v656 = vpop.f32.mrf.mxu0
    %v657 = vadd.f32 0.0, %v656
    %658 = vmatmul.bf16.gmra.mxu0 %v628
    %v659 = vpop.f32.mrf.mxu0
    %v660 = vadd.f32 0.0, %v659
    %v661 = vpop.f32.mrf.mxu0
    %v662 = vadd.f32 0.0, %v661
    %663 = vmatmul.bf16.gmra.mxu0 %v631
    %v664 = vpop.f32.mrf.mxu0
    %v665 = vadd.f32 0.0, %v664
    %v666 = vpop.f32.mrf.mxu0
    %v667 = vadd.f32 0.0, %v666
    %668 = vmatmul.bf16.gmra.mxu0 %v634
    %v669 = vpop.f32.mrf.mxu0
    %v670 = vadd.f32 0.0, %v669
    %v671 = vpop.f32.mrf.mxu0
    %v672 = vadd.f32 0.0, %v671
    %673 = vmatmul.bf16.gmra.mxu0 %v637
    %v674 = vpop.f32.mrf.mxu0
    %v675 = vadd.f32 0.0, %v674
    %v676 = vpop.f32.mrf.mxu0
    %v677 = vadd.f32 0.0, %v676
    %678 = vmatmul.bf16.gmra.mxu0 %v640
    %v679 = vpop.f32.mrf.mxu0
    %v680 = vadd.f32 0.0, %v679
    %v681 = vpop.f32.mrf.mxu0
    %v682 = vadd.f32 0.0, %v681
    %683 = vmatmul.bf16.gmra.mxu0 %v643
    %v684 = vpop.f32.mrf.mxu0
    %v685 = vadd.f32 0.0, %v684
    %v686 = vpop.f32.mrf.mxu0
    %v687 = vadd.f32 0.0, %v686
    %688 = vdwg.mxu0
    %v689 = vld [vmem:[%s15] sm:$0xf]
    %v690 = vld [vmem:[%s15 + $0x4] sm:$0xf]
    %v691 = vld [vmem:[%s15 + $0x8] sm:$0xf]
    %v692 = vld [vmem:[%s15 + $0xc] sm:$0xf]
    %v697 = vunpack.c.l.b16 %v689
    %v698 = vunpack.c.l.b16 %v690
    %v699 = vunpack.c.l.b16 %v691
    %v700 = vunpack.c.l.b16 %v692
    %v701 = vpack.c.b16 %v698, %v697
    %v702 = vpack.c.b16 %v700, %v699
    %v706 = vsel %vm623, %v600, 0
    %v709 = vsel %vm623, %v601, 0
    %v712 = vsel %vm623, %v602, 0
    %v715 = vsel %vm623, %v603, 0
    %v718 = vsel %vm623, %v604, 0
    %v721 = vsel %vm623, %v605, 0
    %v724 = vsel %vm623, %v606, 0
    %726 = vmatpush.bf16.msra.mxu0 0
    %727 = vmatpush.bf16.msra.mxu0 0
    %728 = vmatpush.bf16.msra.mxu0 0
    %729 = vmatpush.bf16.msra.mxu0 0
    %730 = vmatpush.bf16.msra.mxu0 0
    %731 = vmatpush.bf16.msra.mxu0 0
    %732 = vmatpush.bf16.msra.mxu0 %v702
    %733 = vmatpush.bf16.msra.mxu0 %v701
    %734 = vmatmul.bf16.gmra.mxu0 %v706
    %v735 = vpop.f32.mrf.mxu0
    %v736 = vadd.f32 0.0, %v735
    %v737 = vpop.f32.mrf.mxu0
    %v738 = vadd.f32 0.0, %v737
    %739 = vmatmul.bf16.gmra.mxu0 %v709
    %v740 = vpop.f32.mrf.mxu0
    %v741 = vadd.f32 0.0, %v740
    %v742 = vpop.f32.mrf.mxu0
    %v743 = vadd.f32 0.0, %v742
    %744 = vmatmul.bf16.gmra.mxu0 %v712
    %v745 = vpop.f32.mrf.mxu0
    %v746 = vadd.f32 0.0, %v745
    %v747 = vpop.f32.mrf.mxu0
    %v748 = vadd.f32 0.0, %v747
    %749 = vmatmul.bf16.gmra.mxu0 %v715
    %v750 = vpop.f32.mrf.mxu0
    %v751 = vadd.f32 0.0, %v750
    %v752 = vpop.f32.mrf.mxu0
    %v753 = vadd.f32 0.0, %v752
    %754 = vmatmul.bf16.gmra.mxu0 %v718
    %v755 = vpop.f32.mrf.mxu0
    %v756 = vadd.f32 0.0, %v755
    %v757 = vpop.f32.mrf.mxu0
    %v758 = vadd.f32 0.0, %v757
    %759 = vmatmul.bf16.gmra.mxu0 %v721
    %v760 = vpop.f32.mrf.mxu0
    %v761 = vadd.f32 0.0, %v760
    %v762 = vpop.f32.mrf.mxu0
    %v763 = vadd.f32 0.0, %v762
    %764 = vmatmul.bf16.gmra.mxu0 %v724
    %v765 = vpop.f32.mrf.mxu0
    %v766 = vadd.f32 0.0, %v765
    %v767 = vpop.f32.mrf.mxu0
    %v768 = vadd.f32 0.0, %v767
    %769 = vdwg.mxu0
    %v770 = vadd.f32 %v655, %v736
    %v771 = vadd.f32 %v657, %v738
    %v772 = vadd.f32 %v660, %v741
    %v773 = vadd.f32 %v662, %v743
    %v774 = vadd.f32 %v665, %v746
    %v775 = vadd.f32 %v667, %v748
    %v776 = vadd.f32 %v670, %v751
    %v777 = vadd.f32 %v672, %v753
    %v778 = vadd.f32 %v675, %v756
    %v779 = vadd.f32 %v677, %v758
    %v780 = vadd.f32 %v680, %v761
    %v781 = vadd.f32 %v682, %v763
    %v782 = vadd.f32 %v685, %v766
    %v783 = vadd.f32 %v687, %v768
    %v784 = vld [vmem:[%s17] sm:$0xf]
    %v785 = vld [vmem:[%s17 + $0x4] sm:$0xf]
    %v786 = vld [vmem:[%s17 + $0x8] sm:$0xf]
    %v787 = vld [vmem:[%s17 + $0xc] sm:$0xf]
    %v792 = vunpack.c.l.b16 %v784
    %v793 = vunpack.c.l.b16 %v785
    %v794 = vunpack.c.l.b16 %v786
    %v795 = vunpack.c.l.b16 %v787
    %v796 = vpack.c.b16 %v793, %v792
    %v797 = vpack.c.b16 %v795, %v794
    %v801 = vsel %vm623, %v464, 0
    %v804 = vsel %vm623, %v465, 0
    %v807 = vsel %vm623, %v466, 0
    %v810 = vsel %vm623, %v467, 0
    %v813 = vsel %vm623, %v468, 0
    %v816 = vsel %vm623, %v469, 0
    %v819 = vsel %vm623, %v470, 0
    %821 = vmatpush.bf16.msra.mxu0 0
    %822 = vmatpush.bf16.msra.mxu0 0
    %823 = vmatpush.bf16.msra.mxu0 0
    %824 = vmatpush.bf16.msra.mxu0 0
    %825 = vmatpush.bf16.msra.mxu0 0
    %826 = vmatpush.bf16.msra.mxu0 0
    %827 = vmatpush.bf16.msra.mxu0 %v797
    %828 = vmatpush.bf16.msra.mxu0 %v796
    %829 = vmatmul.bf16.gmra.mxu0 %v801
    %v830 = vpop.f32.mrf.mxu0
    %v831 = vadd.f32 0.0, %v830
    %v832 = vpop.f32.mrf.mxu0
    %v833 = vadd.f32 0.0, %v832
    %834 = vmatmul.bf16.gmra.mxu0 %v804
    %v835 = vpop.f32.mrf.mxu0
    %v836 = vadd.f32 0.0, %v835
    %v837 = vpop.f32.mrf.mxu0
    %v838 = vadd.f32 0.0, %v837
    %839 = vmatmul.bf16.gmra.mxu0 %v807
    %v840 = vpop.f32.mrf.mxu0
    %v841 = vadd.f32 0.0, %v840
    %v842 = vpop.f32.mrf.mxu0
    %v843 = vadd.f32 0.0, %v842
    %844 = vmatmul.bf16.gmra.mxu0 %v810
    %v845 = vpop.f32.mrf.mxu0
    %v846 = vadd.f32 0.0, %v845
    %v847 = vpop.f32.mrf.mxu0
    %v848 = vadd.f32 0.0, %v847
    %849 = vmatmul.bf16.gmra.mxu0 %v813
    %v850 = vpop.f32.mrf.mxu0
    %v851 = vadd.f32 0.0, %v850
    %v852 = vpop.f32.mrf.mxu0
    %v853 = vadd.f32 0.0, %v852
    %854 = vmatmul.bf16.gmra.mxu0 %v816
    %v855 = vpop.f32.mrf.mxu0
    %v856 = vadd.f32 0.0, %v855
    %v857 = vpop.f32.mrf.mxu0
    %v858 = vadd.f32 0.0, %v857
    %859 = vmatmul.bf16.gmra.mxu0 %v819
    %v860 = vpop.f32.mrf.mxu0
    %v861 = vadd.f32 0.0, %v860
    %v862 = vpop.f32.mrf.mxu0
    %v863 = vadd.f32 0.0, %v862
    %864 = vdwg.mxu0
    %v865 = vadd.f32 %v770, %v831
    %v866 = vadd.f32 %v771, %v833
    %v867 = vadd.f32 %v772, %v836
    %v868 = vadd.f32 %v773, %v838
    %v869 = vadd.f32 %v774, %v841
    %v870 = vadd.f32 %v775, %v843
    %v871 = vadd.f32 %v776, %v846
    %v872 = vadd.f32 %v777, %v848
    %v873 = vadd.f32 %v778, %v851
    %v874 = vadd.f32 %v779, %v853
    %v875 = vadd.f32 %v780, %v856
    %v876 = vadd.f32 %v781, %v858
    %v877 = vadd.f32 %v782, %v861
    %v878 = vadd.f32 %v783, %v863
    %v879 = vld [vmem:[%s19] sm:$0x1]
    %v881 = vperm.slane %v879, 0
    %v883 = vadd.f32 %v865, %v881
    %v884 = vadd.f32 %v866, %v881
    %v885 = vadd.f32 %v867, %v881
    %v886 = vadd.f32 %v868, %v881
    %v887 = vadd.f32 %v869, %v881
    %v888 = vadd.f32 %v870, %v881
    %v889 = vadd.f32 %v871, %v881
    %v890 = vadd.f32 %v872, %v881
    %v891 = vadd.f32 %v873, %v881
    %v892 = vadd.f32 %v874, %v881
    %v893 = vadd.f32 %v875, %v881
    %v894 = vadd.f32 %v876, %v881
    %v895 = vadd.f32 %v877, %v881
    %v896 = vadd.f32 %v878, %v881
    %v897 = vmax.f32 %v883, 0.0
    %v898 = vmax.f32 %v884, 0.0
    %v899 = vmax.f32 %v885, 0.0
    %v900 = vmax.f32 %v886, 0.0
    %v901 = vmax.f32 %v887, 0.0
    %v902 = vmax.f32 %v888, 0.0
    %v903 = vmax.f32 %v889, 0.0
    %v904 = vmax.f32 %v890, 0.0
    %v905 = vmax.f32 %v891, 0.0
    %v906 = vmax.f32 %v892, 0.0
    %v907 = vmax.f32 %v893, 0.0
    %v908 = vmax.f32 %v894, 0.0
    %v909 = vmax.f32 %v895, 0.0
    %v910 = vmax.f32 %v896, 0.0
    %v911 = vpack.c.bf16 %v898, %v897
    %v912 = vpack.c.bf16 %v900, %v899
    %v913 = vpack.c.bf16 %v902, %v901
    %v914 = vpack.c.bf16 %v904, %v903
    %v915 = vpack.c.bf16 %v906, %v905
    %v916 = vpack.c.bf16 %v908, %v907
    %v917 = vpack.c.bf16 %v910, %v909
    %v918 = vld [vmem:[%s21] sm:$0xf]
    %v919 = vld [vmem:[%s21 + $0x4] sm:$0xf]
    %v920 = vld [vmem:[%s21 + $0x8] sm:$0xf]
    %v921 = vld [vmem:[%s21 + $0xc] sm:$0xf]
    %v922 = vld [vmem:[%s21 + $0x10] sm:$0xf]
    %v923 = vld [vmem:[%s21 + $0x14] sm:$0xf]
    %v924 = vld [vmem:[%s21 + $0x18] sm:$0xf]
    %v925 = vld [vmem:[%s21 + $0x1c] sm:$0xf]
    %v926 = vld [vmem:[%s23] sm:$0x1]
    %v928 = vperm.slane %v926, 0
    %v938 = vunpack.c.l.b16 %v918
    %v939 = vunpack.c.l.b16 %v919
    %v940 = vunpack.c.l.b16 %v920
    %v941 = vunpack.c.l.b16 %v921
    %v942 = vunpack.c.l.b16 %v922
    %v943 = vunpack.c.l.b16 %v923
    %v944 = vunpack.c.l.b16 %v924
    %v945 = vunpack.c.l.b16 %v925
    %v946 = vpack.c.b16 %v939, %v938
    %v947 = vpack.c.b16 %v941, %v940
    %v948 = vpack.c.b16 %v943, %v942
    %v949 = vpack.c.b16 %v945, %v944
    %vm954 = vcmask 523264
    %v956 = vsel %vm954, %v911, 0
    %v959 = vsel %vm954, %v912, 0
    %v962 = vsel %vm954, %v913, 0
    %v965 = vsel %vm954, %v914, 0
    %v968 = vsel %vm954, %v915, 0
    %v971 = vsel %vm954, %v916, 0
    %v974 = vsel %vm954, %v917, 0
    %976 = vmatpush.bf16.msra.mxu0 0
    %977 = vmatpush.bf16.msra.mxu0 0
    %978 = vmatpush.bf16.msra.mxu0 0
    %979 = vmatpush.bf16.msra.mxu0 0
    %980 = vmatpush.bf16.msra.mxu0 %v949
    %981 = vmatpush.bf16.msra.mxu0 %v948
    %982 = vmatpush.bf16.msra.mxu0 %v947
    %983 = vmatpush.bf16.msra.mxu0 %v946
    %984 = vmatmul.bf16.gmra.mxu0 %v956
    %v985 = vpop.f32.mrf.mxu0
    %v986 = vadd.f32 %v928, %v985
    %v987 = vpop.f32.mrf.mxu0
    %v988 = vadd.f32 %v928, %v987
    %989 = vmatmul.bf16.gmra.mxu0 %v959
    %v990 = vpop.f32.mrf.mxu0
    %v991 = vadd.f32 %v928, %v990
    %v992 = vpop.f32.mrf.mxu0
    %v993 = vadd.f32 %v928, %v992
    %994 = vmatmul.bf16.gmra.mxu0 %v962
    %v995 = vpop.f32.mrf.mxu0
    %v996 = vadd.f32 %v928, %v995
    %v997 = vpop.f32.mrf.mxu0
    %v998 = vadd.f32 %v928, %v997
    %999 = vmatmul.bf16.gmra.mxu0 %v965
    %v1000 = vpop.f32.mrf.mxu0
    %v1001 = vadd.f32 %v928, %v1000
    %v1002 = vpop.f32.mrf.mxu0
    %v1003 = vadd.f32 %v928, %v1002
    %1004 = vmatmul.bf16.gmra.mxu0 %v968
    %v1005 = vpop.f32.mrf.mxu0
    %v1006 = vadd.f32 %v928, %v1005
    %v1007 = vpop.f32.mrf.mxu0
    %v1008 = vadd.f32 %v928, %v1007
    %1009 = vmatmul.bf16.gmra.mxu0 %v971
    %v1010 = vpop.f32.mrf.mxu0
    %v1011 = vadd.f32 %v928, %v1010
    %v1012 = vpop.f32.mrf.mxu0
    %v1013 = vadd.f32 %v928, %v1012
    %1014 = vmatmul.bf16.gmra.mxu0 %v974
    %v1015 = vpop.f32.mrf.mxu0
    %v1016 = vadd.f32 %v928, %v1015
    %v1017 = vpop.f32.mrf.mxu0
    %v1018 = vadd.f32 %v928, %v1017
    %1019 = vdwg.mxu0
    %v1020 = vmax.f32 %v986, 0.0
    %v1021 = vmax.f32 %v988, 0.0
    %v1022 = vmax.f32 %v991, 0.0
    %v1023 = vmax.f32 %v993, 0.0
    %v1024 = vmax.f32 %v996, 0.0
    %v1025 = vmax.f32 %v998, 0.0
    %v1026 = vmax.f32 %v1001, 0.0
    %v1027 = vmax.f32 %v1003, 0.0
    %v1028 = vmax.f32 %v1006, 0.0
    %v1029 = vmax.f32 %v1008, 0.0
    %v1030 = vmax.f32 %v1011, 0.0
    %v1031 = vmax.f32 %v1013, 0.0
    %v1032 = vmax.f32 %v1016, 0.0
    %v1033 = vmax.f32 %v1018, 0.0
    %v1034 = vpack.c.bf16 %v1021, %v1020
    %v1035 = vpack.c.bf16 %v1023, %v1022
    %v1036 = vpack.c.bf16 %v1025, %v1024
    %v1037 = vpack.c.bf16 %v1027, %v1026
    %v1038 = vpack.c.bf16 %v1029, %v1028
    %v1039 = vpack.c.bf16 %v1031, %v1030
    %v1040 = vpack.c.bf16 %v1033, %v1032
    %v1041 = vld [vmem:[%s25] sm:$0xf]
    %v1042 = vld [vmem:[%s25 + $0x4] sm:$0xf]
    %v1043 = vld [vmem:[%s25 + $0x8] sm:$0xf]
    %v1044 = vld [vmem:[%s25 + $0xc] sm:$0xf]
    %v1045 = vld [vmem:[%s25 + $0x10] sm:$0xf]
    %v1046 = vld [vmem:[%s25 + $0x14] sm:$0xf]
    %v1047 = vld [vmem:[%s25 + $0x18] sm:$0xf]
    %v1048 = vld [vmem:[%s25 + $0x1c] sm:$0xf]
    %v1049 = vld [vmem:[%s27] sm:$0x1]
    %v1051 = vperm.slane %v1049, 0
    %v1061 = vunpack.c.l.b16 %v1041
    %v1062 = vunpack.c.l.b16 %v1042
    %v1063 = vunpack.c.l.b16 %v1043
    %v1064 = vunpack.c.l.b16 %v1044
    %v1065 = vunpack.c.l.b16 %v1045
    %v1066 = vunpack.c.l.b16 %v1046
    %v1067 = vunpack.c.l.b16 %v1047
    %v1068 = vunpack.c.l.b16 %v1048
    %v1069 = vpack.c.b16 %v1062, %v1061
    %v1070 = vpack.c.b16 %v1064, %v1063
    %v1071 = vpack.c.b16 %v1066, %v1065
    %v1072 = vpack.c.b16 %v1068, %v1067
    %v1078 = vsel %vm954, %v1034, 0
    %v1081 = vsel %vm954, %v1035, 0
    %v1084 = vsel %vm954, %v1036, 0
    %v1087 = vsel %vm954, %v1037, 0
    %v1090 = vsel %vm954, %v1038, 0
    %v1093 = vsel %vm954, %v1039, 0
    %v1096 = vsel %vm954, %v1040, 0
    %1098 = vmatpush.bf16.msra.mxu0 0
    %1099 = vmatpush.bf16.msra.mxu0 0
    %1100 = vmatpush.bf16.msra.mxu0 0
    %1101 = vmatpush.bf16.msra.mxu0 0
    %1102 = vmatpush.bf16.msra.mxu0 %v1072
    %1103 = vmatpush.bf16.msra.mxu0 %v1071
    %1104 = vmatpush.bf16.msra.mxu0 %v1070
    %1105 = vmatpush.bf16.msra.mxu0 %v1069
    %1106 = vmatmul.bf16.gmra.mxu0 %v1078
    %v1107 = vpop.f32.mrf.mxu0
    %v1108 = vadd.f32 %v1051, %v1107
    %v1109 = vpop.f32.mrf.mxu0
    %v1110 = vadd.f32 %v1051, %v1109
    %1111 = vmatmul.bf16.gmra.mxu0 %v1081
    %v1112 = vpop.f32.mrf.mxu0
    %v1113 = vadd.f32 %v1051, %v1112
    %v1114 = vpop.f32.mrf.mxu0
    %v1115 = vadd.f32 %v1051, %v1114
    %1116 = vmatmul.bf16.gmra.mxu0 %v1084
    %v1117 = vpop.f32.mrf.mxu0
    %v1118 = vadd.f32 %v1051, %v1117
    %v1119 = vpop.f32.mrf.mxu0
    %v1120 = vadd.f32 %v1051, %v1119
    %1121 = vmatmul.bf16.gmra.mxu0 %v1087
    %v1122 = vpop.f32.mrf.mxu0
    %v1123 = vadd.f32 %v1051, %v1122
    %v1124 = vpop.f32.mrf.mxu0
    %v1125 = vadd.f32 %v1051, %v1124
    %1126 = vmatmul.bf16.gmra.mxu0 %v1090
    %v1127 = vpop.f32.mrf.mxu0
    %v1128 = vadd.f32 %v1051, %v1127
    %v1129 = vpop.f32.mrf.mxu0
    %v1130 = vadd.f32 %v1051, %v1129
    %1131 = vmatmul.bf16.gmra.mxu0 %v1093
    %v1132 = vpop.f32.mrf.mxu0
    %v1133 = vadd.f32 %v1051, %v1132
    %v1134 = vpop.f32.mrf.mxu0
    %v1135 = vadd.f32 %v1051, %v1134
    %1136 = vmatmul.bf16.gmra.mxu0 %v1096
    %v1137 = vpop.f32.mrf.mxu0
    %v1138 = vadd.f32 %v1051, %v1137
    %v1139 = vpop.f32.mrf.mxu0
    %v1140 = vadd.f32 %v1051, %v1139
    %1141 = vdwg.mxu0
    %v1142 = vadd.f32 %v130, %v1108
    %v1143 = vadd.f32 %v131, %v1110
    %v1144 = vadd.f32 %v132, %v1113
    %v1145 = vadd.f32 %v133, %v1115
    %v1146 = vadd.f32 %v134, %v1118
    %v1147 = vadd.f32 %v135, %v1120
    %v1148 = vadd.f32 %v136, %v1123
    %v1149 = vadd.f32 %v137, %v1125
    %v1150 = vadd.f32 %v138, %v1128
    %v1151 = vadd.f32 %v139, %v1130
    %v1152 = vadd.f32 %v140, %v1133
    %v1153 = vadd.f32 %v141, %v1135
    %v1154 = vadd.f32 %v142, %v1138
    %v1155 = vadd.f32 %v143, %v1140
    %v1156 = vmax.f32 %v1142, 0.0
    %v1157 = vmax.f32 %v1143, 0.0
    %v1158 = vmax.f32 %v1144, 0.0
    %v1159 = vmax.f32 %v1145, 0.0
    %v1160 = vmax.f32 %v1146, 0.0
    %v1161 = vmax.f32 %v1147, 0.0
    %v1162 = vmax.f32 %v1148, 0.0
    %v1163 = vmax.f32 %v1149, 0.0
    %v1164 = vmax.f32 %v1150, 0.0
    %v1165 = vmax.f32 %v1151, 0.0
    %v1166 = vmax.f32 %v1152, 0.0
    %v1167 = vmax.f32 %v1153, 0.0
    %v1168 = vmax.f32 %v1154, 0.0
    %v1169 = vmax.f32 %v1155, 0.0
    %v1170 = vpack.c.bf16 %v1157, %v1156
    %v1171 = vpack.c.bf16 %v1159, %v1158
    %v1172 = vpack.c.bf16 %v1161, %v1160
    %v1173 = vpack.c.bf16 %v1163, %v1162
    %v1174 = vpack.c.bf16 %v1165, %v1164
    %v1175 = vpack.c.bf16 %v1167, %v1166
    %v1176 = vpack.c.bf16 %v1169, %v1168
    %v1177 = vld [vmem:[%s29] sm:$0xf]
    %v1178 = vld [vmem:[%s29 + $0x4] sm:$0xf]
    %v1179 = vld [vmem:[%s29 + $0x8] sm:$0xf]
    %v1180 = vld [vmem:[%s29 + $0xc] sm:$0xf]
    %v1185 = vunpack.c.l.b16 %v1177
    %v1186 = vunpack.c.l.b16 %v1178
    %v1187 = vunpack.c.l.b16 %v1179
    %v1188 = vunpack.c.l.b16 %v1180
    %v1189 = vpack.c.b16 %v1186, %v1185
    %v1190 = vpack.c.b16 %v1188, %v1187
    %v1194 = vsel %vm623, %v1170, 0
    %v1197 = vsel %vm623, %v1171, 0
    %v1200 = vsel %vm623, %v1172, 0
    %v1203 = vsel %vm623, %v1173, 0
    %v1206 = vsel %vm623, %v1174, 0
    %v1209 = vsel %vm623, %v1175, 0
    %v1212 = vsel %vm623, %v1176, 0
    %1214 = vmatpush.bf16.msra.mxu0 0
    %1215 = vmatpush.bf16.msra.mxu0 0
    %1216 = vmatpush.bf16.msra.mxu0 0
    %1217 = vmatpush.bf16.msra.mxu0 0
    %1218 = vmatpush.bf16.msra.mxu0 0
    %1219 = vmatpush.bf16.msra.mxu0 0
    %1220 = vmatpush.bf16.msra.mxu0 %v1190
    %1221 = vmatpush.bf16.msra.mxu0 %v1189
    %1222 = vmatmul.bf16.gmra.mxu0 %v1194
    %v1223 = vpop.f32.mrf.mxu0
    %v1224 = vadd.f32 0.0, %v1223
    %v1225 = vpop.f32.mrf.mxu0
    %v1226 = vadd.f32 0.0, %v1225
    %1227 = vmatmul.bf16.gmra.mxu0 %v1197
    %v1228 = vpop.f32.mrf.mxu0
    %v1229 = vadd.f32 0.0, %v1228
    %v1230 = vpop.f32.mrf.mxu0
    %v1231 = vadd.f32 0.0, %v1230
    %1232 = vmatmul.bf16.gmra.mxu0 %v1200
    %v1233 = vpop.f32.mrf.mxu0
    %v1234 = vadd.f32 0.0, %v1233
    %v1235 = vpop.f32.mrf.mxu0
    %v1236 = vadd.f32 0.0, %v1235
    %1237 = vmatmul.bf16.gmra.mxu0 %v1203
    %v1238 = vpop.f32.mrf.mxu0
    %v1239 = vadd.f32 0.0, %v1238
    %v1240 = vpop.f32.mrf.mxu0
    %v1241 = vadd.f32 0.0, %v1240
    %1242 = vmatmul.bf16.gmra.mxu0 %v1206
    %v1243 = vpop.f32.mrf.mxu0
    %v1244 = vadd.f32 0.0, %v1243
    %v1245 = vpop.f32.mrf.mxu0
    %v1246 = vadd.f32 0.0, %v1245
    %1247 = vmatmul.bf16.gmra.mxu0 %v1209
    %v1248 = vpop.f32.mrf.mxu0
    %v1249 = vadd.f32 0.0, %v1248
    %v1250 = vpop.f32.mrf.mxu0
    %v1251 = vadd.f32 0.0, %v1250
    %1252 = vmatmul.bf16.gmra.mxu0 %v1212
    %v1253 = vpop.f32.mrf.mxu0
    %v1254 = vadd.f32 0.0, %v1253
    %v1255 = vpop.f32.mrf.mxu0
    %v1256 = vadd.f32 0.0, %v1255
    %1257 = vdwg.mxu0
    %1272 = vrot.lane.b32.xlu0 %v1224, 64
    %v1273 = vpop.permute.xlu0 %1272
    %1274 = vrot.lane.b32.xlu0 %v1226, 64
    %v1275 = vpop.permute.xlu0 %1274
    %1276 = vrot.lane.b32.xlu0 %v1229, 64
    %v1277 = vpop.permute.xlu0 %1276
    %1278 = vrot.lane.b32.xlu0 %v1231, 64
    %v1279 = vpop.permute.xlu0 %1278
    %1280 = vrot.lane.b32.xlu0 %v1234, 64
    %v1281 = vpop.permute.xlu0 %1280
    %1282 = vrot.lane.b32.xlu0 %v1236, 64
    %v1283 = vpop.permute.xlu0 %1282
    %1284 = vrot.lane.b32.xlu0 %v1239, 64
    %v1285 = vpop.permute.xlu0 %1284
    %1286 = vrot.lane.b32.xlu0 %v1241, 64
    %v1287 = vpop.permute.xlu0 %1286
    %1288 = vrot.lane.b32.xlu0 %v1244, 64
    %v1289 = vpop.permute.xlu0 %1288
    %1290 = vrot.lane.b32.xlu0 %v1246, 64
    %v1291 = vpop.permute.xlu0 %1290
    %1292 = vrot.lane.b32.xlu0 %v1249, 64
    %v1293 = vpop.permute.xlu0 %1292
    %1294 = vrot.lane.b32.xlu0 %v1251, 64
    %v1295 = vpop.permute.xlu0 %1294
    %1296 = vrot.lane.b32.xlu0 %v1254, 64
    %v1297 = vpop.permute.xlu0 %1296
    %1298 = vrot.lane.b32.xlu0 %v1256, 64
    %v1299 = vpop.permute.xlu0 %1298
    %v1314 = vadd.f32 %v655, %v1273
    %v1315 = vadd.f32 %v657, %v1275
    %v1316 = vadd.f32 %v660, %v1277
    %v1317 = vadd.f32 %v662, %v1279
    %v1318 = vadd.f32 %v665, %v1281
    %v1319 = vadd.f32 %v667, %v1283
    %v1320 = vadd.f32 %v670, %v1285
    %v1321 = vadd.f32 %v672, %v1287
    %v1322 = vadd.f32 %v675, %v1289
    %v1323 = vadd.f32 %v677, %v1291
    %v1324 = vadd.f32 %v680, %v1293
    %v1325 = vadd.f32 %v682, %v1295
    %v1326 = vadd.f32 %v685, %v1297
    %v1327 = vadd.f32 %v687, %v1299
    %v1328 = vld [vmem:[%s31] sm:$0x1]
    %v1330 = vperm.slane %v1328, 0
    %1331 = vrot.lane.b32.xlu0 %v1330, 64
    %v1332 = vpop.permute.xlu0 %1331
    %v1334 = vadd.f32 %v1314, %v1332
    %v1335 = vadd.f32 %v1315, %v1332
    %v1336 = vadd.f32 %v1316, %v1332
    %v1337 = vadd.f32 %v1317, %v1332
    %v1338 = vadd.f32 %v1318, %v1332
    %v1339 = vadd.f32 %v1319, %v1332
    %v1340 = vadd.f32 %v1320, %v1332
    %v1341 = vadd.f32 %v1321, %v1332
    %v1342 = vadd.f32 %v1322, %v1332
    %v1343 = vadd.f32 %v1323, %v1332
    %v1344 = vadd.f32 %v1324, %v1332
    %v1345 = vadd.f32 %v1325, %v1332
    %v1346 = vadd.f32 %v1326, %v1332
    %v1347 = vadd.f32 %v1327, %v1332
    %v1348 = vmax.f32 %v1334, 0.0
    %v1349 = vmax.f32 %v1335, 0.0
    %v1350 = vmax.f32 %v1336, 0.0
    %v1351 = vmax.f32 %v1337, 0.0
    %v1352 = vmax.f32 %v1338, 0.0
    %v1353 = vmax.f32 %v1339, 0.0
    %v1354 = vmax.f32 %v1340, 0.0
    %v1355 = vmax.f32 %v1341, 0.0
    %v1356 = vmax.f32 %v1342, 0.0
    %v1357 = vmax.f32 %v1343, 0.0
    %v1358 = vmax.f32 %v1344, 0.0
    %v1359 = vmax.f32 %v1345, 0.0
    %v1360 = vmax.f32 %v1346, 0.0
    %v1361 = vmax.f32 %v1347, 0.0
    %v1362 = vpack.c.bf16 %v1349, %v1348
    %v1363 = vpack.c.bf16 %v1351, %v1350
    %v1364 = vpack.c.bf16 %v1353, %v1352
    %v1365 = vpack.c.bf16 %v1355, %v1354
    %v1366 = vpack.c.bf16 %v1357, %v1356
    %v1367 = vpack.c.bf16 %v1359, %v1358
    %v1368 = vpack.c.bf16 %v1361, %v1360
    %v1369 = vld [vmem:[%s33] sm:$0xf]
    %v1370 = vld [vmem:[%s33 + $0x4] sm:$0xf]
    %v1371 = vld [vmem:[%s33 + $0x8] sm:$0xf]
    %v1372 = vld [vmem:[%s33 + $0xc] sm:$0xf]
    %v1373 = vld [vmem:[%s33 + $0x10] sm:$0xf]
    %v1374 = vld [vmem:[%s33 + $0x14] sm:$0xf]
    %v1375 = vld [vmem:[%s33 + $0x18] sm:$0xf]
    %v1376 = vld [vmem:[%s33 + $0x1c] sm:$0xf]
    %v1377 = vld [vmem:[%s35] sm:$0x1]
    %v1379 = vperm.slane %v1377, 0
    %1388 = vrot.lane.b32.xlu0 %v1362, 64
    %v1389 = vpop.permute.xlu0 %1388
    %1390 = vrot.lane.b32.xlu0 %v1363, 64
    %v1391 = vpop.permute.xlu0 %1390
    %1392 = vrot.lane.b32.xlu0 %v1364, 64
    %v1393 = vpop.permute.xlu0 %1392
    %1394 = vrot.lane.b32.xlu0 %v1365, 64
    %v1395 = vpop.permute.xlu0 %1394
    %1396 = vrot.lane.b32.xlu0 %v1366, 64
    %v1397 = vpop.permute.xlu0 %1396
    %1398 = vrot.lane.b32.xlu0 %v1367, 64
    %v1399 = vpop.permute.xlu0 %1398
    %1400 = vrot.lane.b32.xlu0 %v1368, 64
    %v1401 = vpop.permute.xlu0 %1400
    %v1410 = vunpack.c.l.b16 %v1369
    %v1411 = vunpack.c.l.b16 %v1370
    %v1412 = vunpack.c.l.b16 %v1371
    %v1413 = vunpack.c.l.b16 %v1372
    %v1414 = vunpack.c.l.b16 %v1373
    %v1415 = vunpack.c.l.b16 %v1374
    %v1416 = vunpack.c.l.b16 %v1375
    %v1417 = vunpack.c.l.b16 %v1376
    %v1418 = vpack.c.b16 %v1411, %v1410
    %v1419 = vpack.c.b16 %v1413, %v1412
    %v1420 = vpack.c.b16 %v1415, %v1414
    %v1421 = vpack.c.b16 %v1417, %v1416
    %v1427 = vsel %vm954, %v1389, 0
    %v1430 = vsel %vm954, %v1391, 0
    %v1433 = vsel %vm954, %v1393, 0
    %v1436 = vsel %vm954, %v1395, 0
    %v1439 = vsel %vm954, %v1397, 0
    %v1442 = vsel %vm954, %v1399, 0
    %v1445 = vsel %vm954, %v1401, 0
    %1447 = vmatpush.bf16.msra.mxu0 0
    %1448 = vmatpush.bf16.msra.mxu0 0
    %1449 = vmatpush.bf16.msra.mxu0 0
    %1450 = vmatpush.bf16.msra.mxu0 0
    %1451 = vmatpush.bf16.msra.mxu0 %v1421
    %1452 = vmatpush.bf16.msra.mxu0 %v1420
    %1453 = vmatpush.bf16.msra.mxu0 %v1419
    %1454 = vmatpush.bf16.msra.mxu0 %v1418
    %1455 = vmatmul.bf16.gmra.mxu0 %v1427
    %v1456 = vpop.f32.mrf.mxu0
    %v1457 = vadd.f32 %v1379, %v1456
    %v1458 = vpop.f32.mrf.mxu0
    %v1459 = vadd.f32 %v1379, %v1458
    %1460 = vmatmul.bf16.gmra.mxu0 %v1430
    %v1461 = vpop.f32.mrf.mxu0
    %v1462 = vadd.f32 %v1379, %v1461
    %v1463 = vpop.f32.mrf.mxu0
    %v1464 = vadd.f32 %v1379, %v1463
    %1465 = vmatmul.bf16.gmra.mxu0 %v1433
    %v1466 = vpop.f32.mrf.mxu0
    %v1467 = vadd.f32 %v1379, %v1466
    %v1468 = vpop.f32.mrf.mxu0
    %v1469 = vadd.f32 %v1379, %v1468
    %1470 = vmatmul.bf16.gmra.mxu0 %v1436
    %v1471 = vpop.f32.mrf.mxu0
    %v1472 = vadd.f32 %v1379, %v1471
    %v1473 = vpop.f32.mrf.mxu0
    %v1474 = vadd.f32 %v1379, %v1473
    %1475 = vmatmul.bf16.gmra.mxu0 %v1439
    %v1476 = vpop.f32.mrf.mxu0
    %v1477 = vadd.f32 %v1379, %v1476
    %v1478 = vpop.f32.mrf.mxu0
    %v1479 = vadd.f32 %v1379, %v1478
    %1480 = vmatmul.bf16.gmra.mxu0 %v1442
    %v1481 = vpop.f32.mrf.mxu0
    %v1482 = vadd.f32 %v1379, %v1481
    %v1483 = vpop.f32.mrf.mxu0
    %v1484 = vadd.f32 %v1379, %v1483
    %1485 = vmatmul.bf16.gmra.mxu0 %v1445
    %v1486 = vpop.f32.mrf.mxu0
    %v1487 = vadd.f32 %v1379, %v1486
    %v1488 = vpop.f32.mrf.mxu0
    %v1489 = vadd.f32 %v1379, %v1488
    %1490 = vdwg.mxu0
    %v1491 = vmax.f32 %v1457, 0.0
    %v1492 = vmax.f32 %v1459, 0.0
    %v1493 = vmax.f32 %v1462, 0.0
    %v1494 = vmax.f32 %v1464, 0.0
    %v1495 = vmax.f32 %v1467, 0.0
    %v1496 = vmax.f32 %v1469, 0.0
    %v1497 = vmax.f32 %v1472, 0.0
    %v1498 = vmax.f32 %v1474, 0.0
    %v1499 = vmax.f32 %v1477, 0.0
    %v1500 = vmax.f32 %v1479, 0.0
    %v1501 = vmax.f32 %v1482, 0.0
    %v1502 = vmax.f32 %v1484, 0.0
    %v1503 = vmax.f32 %v1487, 0.0
    %v1504 = vmax.f32 %v1489, 0.0
    %v1505 = vpack.c.bf16 %v1492, %v1491
    %v1506 = vpack.c.bf16 %v1494, %v1493
    %v1507 = vpack.c.bf16 %v1496, %v1495
    %v1508 = vpack.c.bf16 %v1498, %v1497
    %v1509 = vpack.c.bf16 %v1500, %v1499
    %v1510 = vpack.c.bf16 %v1502, %v1501
    %v1511 = vpack.c.bf16 %v1504, %v1503
    %v1513 = vsel %vm382, %v367, 0
    %1515 = vmatpush.bf16.msra.mxu0 0
    %1516 = vmatpush.bf16.msra.mxu0 %v1511
    %1517 = vmatpush.bf16.msra.mxu0 %v1510
    %1518 = vmatpush.bf16.msra.mxu0 %v1509
    %1519 = vmatpush.bf16.msra.mxu0 %v1508
    %1520 = vmatpush.bf16.msra.mxu0 %v1507
    %1521 = vmatpush.bf16.msra.mxu0 %v1506
    %1522 = vmatpush.bf16.msra.mxu0 %v1505
    %1523 = vmatmul.bf16.gmra.mxu0 %v1513
    %v1524 = vpop.f32.mrf.mxu0
    %v1525 = vadd.f32 0.0, %v1524
    %v1526 = vpop.f32.mrf.mxu0
    %v1527 = vadd.f32 0.0, %v1526
    %1528 = vdwg.mxu0
    %v1529 = vmul.f32 %v1525, %v405
    %v1530 = vmul.f32 %v1527, %v420
    %v1531 = vld [vmem:[%s37] sm:$0xf]
    %v1532 = vld [vmem:[%s37 + $0x4] sm:$0xf]
    %v1533 = vld [vmem:[%s37 + $0x8] sm:$0xf]
    %v1534 = vld [vmem:[%s37 + $0xc] sm:$0xf]
    %v1535 = vpack.c.bf16 %v1530, %v1529
    %v1536 = vld [vmem:[%s39] sm:$0xf]
    %v1537 = vld [vmem:[%s39 + $0x4] sm:$0xf]
    %v1538 = vld [vmem:[%s39 + $0x8] sm:$0xf]
    %v1539 = vld [vmem:[%s39 + $0xc] sm:$0xf]
    %v1540 = vld [vmem:[%s39 + $0x10] sm:$0xf]
    %v1541 = vld [vmem:[%s39 + $0x14] sm:$0xf]
    %v1542 = vld [vmem:[%s39 + $0x18] sm:$0xf]
    %v1543 = vld [vmem:[%s39 + $0x1c] sm:$0xf]
    %v1552 = vunpack.c.l.b16 %v1536
    %v1553 = vunpack.c.l.b16 %v1537
    %v1554 = vunpack.c.l.b16 %v1538
    %v1555 = vunpack.c.l.b16 %v1539
    %v1556 = vunpack.c.l.b16 %v1540
    %v1557 = vunpack.c.l.b16 %v1541
    %v1558 = vunpack.c.l.b16 %v1542
    %v1559 = vunpack.c.l.b16 %v1543
    %v1560 = vpack.c.b16 %v1553, %v1552
    %v1561 = vpack.c.b16 %v1555, %v1554
    %v1562 = vpack.c.b16 %v1557, %v1556
    %v1563 = vpack.c.b16 %v1559, %v1558
    %v1569 = vsel %vm954, %v1535, 0
    %1571 = vmatpush.bf16.msra.mxu0 0
    %1572 = vmatpush.bf16.msra.mxu0 0
    %1573 = vmatpush.bf16.msra.mxu0 0
    %1574 = vmatpush.bf16.msra.mxu0 0
    %1575 = vmatpush.bf16.msra.mxu0 %v1563
    %1576 = vmatpush.bf16.msra.mxu0 %v1562
    %1577 = vmatpush.bf16.msra.mxu0 %v1561
    %1578 = vmatpush.bf16.msra.mxu0 %v1560
    %1579 = vmatmul.bf16.gmra.mxu0 %v1569
    %v1580 = vpop.f32.mrf.mxu0
    %v1581 = vadd.f32 0.0, %v1580
    %v1582 = vpop.f32.mrf.mxu0
    %v1583 = vadd.f32 0.0, %v1582
    %1584 = vdwg.mxu0
    %v1589 = vunpack.c.l.b16 %v1531
    %v1590 = vunpack.c.l.b16 %v1532
    %v1591 = vunpack.c.l.b16 %v1533
    %v1592 = vunpack.c.l.b16 %v1534
    %v1593 = vpack.c.b16 %v1590, %v1589
    %v1594 = vpack.c.b16 %v1592, %v1591
    %v1598 = vsel %vm623, %v463, 0
    %1600 = vmatpush.bf16.msra.mxu0 0
    %1601 = vmatpush.bf16.msra.mxu0 0
    %1602 = vmatpush.bf16.msra.mxu0 0
    %1603 = vmatpush.bf16.msra.mxu0 0
    %1604 = vmatpush.bf16.msra.mxu0 0
    %1605 = vmatpush.bf16.msra.mxu0 0
    %1606 = vmatpush.bf16.msra.mxu0 %v1594
    %1607 = vmatpush.bf16.msra.mxu0 %v1593
    %1608 = vmatmul.bf16.gmra.mxu0 %v1598
    %v1609 = vpop.f32.mrf.mxu0
    %v1610 = vadd.f32 %v1581, %v1609
    %v1611 = vpop.f32.mrf.mxu0
    %v1612 = vadd.f32 %v1583, %v1611
    %1613 = vdwg.mxu0
    %v1614 = vld [vmem:[%s41] sm:$0x1]
    %v1616 = vperm.slane %v1614, 0
    %v1618 = vadd.f32 %v1610, %v1616
    %v1619 = vadd.f32 %v1612, %v1616
    %v1620 = vmax.f32 %v1618, 0.0
    %v1621 = vmax.f32 %v1619, 0.0
    %v1622 = vpack.c.bf16 %v1621, %v1620
    %v1623 = vld [vmem:[%s43] sm:$0xf]
    %v1624 = vld [vmem:[%s43 + $0x4] sm:$0xf]
    %v1625 = vld [vmem:[%s43 + $0x8] sm:$0xf]
    %v1626 = vld [vmem:[%s43 + $0xc] sm:$0xf]
    %v1627 = vld [vmem:[%s43 + $0x10] sm:$0xf]
    %v1628 = vld [vmem:[%s43 + $0x14] sm:$0xf]
    %v1629 = vld [vmem:[%s43 + $0x18] sm:$0xf]
    %v1630 = vld [vmem:[%s43 + $0x1c] sm:$0xf]
    %v1631 = vld [vmem:[%s45] sm:$0x1]
    %v1633 = vperm.slane %v1631, 0
    %v1643 = vunpack.c.l.b16 %v1623
    %v1644 = vunpack.c.l.b16 %v1624
    %v1645 = vunpack.c.l.b16 %v1625
    %v1646 = vunpack.c.l.b16 %v1626
    %v1647 = vunpack.c.l.b16 %v1627
    %v1648 = vunpack.c.l.b16 %v1628
    %v1649 = vunpack.c.l.b16 %v1629
    %v1650 = vunpack.c.l.b16 %v1630
    %v1651 = vpack.c.b16 %v1644, %v1643
    %v1652 = vpack.c.b16 %v1646, %v1645
    %v1653 = vpack.c.b16 %v1648, %v1647
    %v1654 = vpack.c.b16 %v1650, %v1649
    %v1660 = vsel %vm954, %v1622, 0
    %1662 = vmatpush.bf16.msra.mxu0 0
    %1663 = vmatpush.bf16.msra.mxu0 0
    %1664 = vmatpush.bf16.msra.mxu0 0
    %1665 = vmatpush.bf16.msra.mxu0 0
    %1666 = vmatpush.bf16.msra.mxu0 %v1654
    %1667 = vmatpush.bf16.msra.mxu0 %v1653
    %1668 = vmatpush.bf16.msra.mxu0 %v1652
    %1669 = vmatpush.bf16.msra.mxu0 %v1651
    %1670 = vmatmul.bf16.gmra.mxu0 %v1660
    %v1671 = vpop.f32.mrf.mxu0
    %v1672 = vadd.f32 %v1633, %v1671
    %v1673 = vpop.f32.mrf.mxu0
    %v1674 = vadd.f32 %v1633, %v1673
    %1675 = vdwg.mxu0
    %v1676 = vadd.f32 %v128, %v1672
    %v1677 = vadd.f32 %v129, %v1674
    %v1678 = vmax.f32 %v1676, 0.0
    %v1679 = vmax.f32 %v1677, 0.0
    %v1680 = vpack.c.bf16 %v1679, %v1678
    %1681 = vmatpush.bf16.msra.mxu0 0
    %1682 = vmatpush.bf16.msra.mxu0 0
    %1683 = vmatpush.bf16.msra.mxu0 0
    %1684 = vmatpush.bf16.msra.mxu0 0
    %1685 = vmatpush.bf16.msra.mxu0 0
    %1686 = vmatpush.bf16.msra.mxu0 0
    %1687 = vmatpush.bf16.msra.mxu0 0
    %1688 = vmatpush.bf16.msra.mxu0 %v1680
    %1689 = vmatmul.bf16.gmra.mxu0 %v473
    %v1690 = vpop.f32.mrf.mxu0
    %v1691 = vadd.f32 0.0, %v1690
    %v1692 = vpop.f32.mrf.mxu0
    %v1693 = vadd.f32 0.0, %v1692
    %1694 = vmatmul.bf16.gmra.mxu0 %v476
    %v1695 = vpop.f32.mrf.mxu0
    %v1696 = vadd.f32 0.0, %v1695
    %v1697 = vpop.f32.mrf.mxu0
    %v1698 = vadd.f32 0.0, %v1697
    %1699 = vmatmul.bf16.gmra.mxu0 %v479
    %v1700 = vpop.f32.mrf.mxu0
    %v1701 = vadd.f32 0.0, %v1700
    %v1702 = vpop.f32.mrf.mxu0
    %v1703 = vadd.f32 0.0, %v1702
    %1704 = vmatmul.bf16.gmra.mxu0 %v482
    %v1705 = vpop.f32.mrf.mxu0
    %v1706 = vadd.f32 0.0, %v1705
    %v1707 = vpop.f32.mrf.mxu0
    %v1708 = vadd.f32 0.0, %v1707
    %1709 = vmatmul.bf16.gmra.mxu0 %v485
    %v1710 = vpop.f32.mrf.mxu0
    %v1711 = vadd.f32 0.0, %v1710
    %v1712 = vpop.f32.mrf.mxu0
    %v1713 = vadd.f32 0.0, %v1712
    %1714 = vmatmul.bf16.gmra.mxu0 %v488
    %v1715 = vpop.f32.mrf.mxu0
    %v1716 = vadd.f32 0.0, %v1715
    %v1717 = vpop.f32.mrf.mxu0
    %v1718 = vadd.f32 0.0, %v1717
    %1719 = vmatmul.bf16.gmra.mxu0 %v491
    %v1720 = vpop.f32.mrf.mxu0
    %v1721 = vadd.f32 0.0, %v1720
    %v1722 = vpop.f32.mrf.mxu0
    %v1723 = vadd.f32 0.0, %v1722
    %1724 = vmatmul.bf16.gmra.mxu0 %v494
    %v1725 = vpop.f32.mrf.mxu0
    %v1726 = vadd.f32 0.0, %v1725
    %v1727 = vpop.f32.mrf.mxu0
    %v1728 = vadd.f32 0.0, %v1727
    %1729 = vmatmul.bf16.gmra.mxu0 %v497
    %v1730 = vpop.f32.mrf.mxu0
    %v1731 = vadd.f32 0.0, %v1730
    %v1732 = vpop.f32.mrf.mxu0
    %v1733 = vadd.f32 0.0, %v1732
    %1734 = vmatmul.bf16.gmra.mxu0 %v500
    %v1735 = vpop.f32.mrf.mxu0
    %v1736 = vadd.f32 0.0, %v1735
    %v1737 = vpop.f32.mrf.mxu0
    %v1738 = vadd.f32 0.0, %v1737
    %1739 = vmatmul.bf16.gmra.mxu0 %v503
    %v1740 = vpop.f32.mrf.mxu0
    %v1741 = vadd.f32 0.0, %v1740
    %v1742 = vpop.f32.mrf.mxu0
    %v1743 = vadd.f32 0.0, %v1742
    %1744 = vmatmul.bf16.gmra.mxu0 %v506
    %v1745 = vpop.f32.mrf.mxu0
    %v1746 = vadd.f32 0.0, %v1745
    %v1747 = vpop.f32.mrf.mxu0
    %v1748 = vadd.f32 0.0, %v1747
    %1749 = vmatmul.bf16.gmra.mxu0 %v509
    %v1750 = vpop.f32.mrf.mxu0
    %v1751 = vadd.f32 0.0, %v1750
    %v1752 = vpop.f32.mrf.mxu0
    %v1753 = vadd.f32 0.0, %v1752
    %1754 = vmatmul.bf16.gmra.mxu0 %v512
    %v1755 = vpop.f32.mrf.mxu0
    %v1756 = vadd.f32 0.0, %v1755
    %v1757 = vpop.f32.mrf.mxu0
    %v1758 = vadd.f32 0.0, %v1757
    %1759 = vdwg.mxu0
    %v1760 = vpack.c.bf16 %v1693, %v1691
    %v1761 = vpack.c.bf16 %v1698, %v1696
    %v1762 = vpack.c.bf16 %v1703, %v1701
    %v1763 = vpack.c.bf16 %v1708, %v1706
    %v1764 = vpack.c.bf16 %v1713, %v1711
    %v1765 = vpack.c.bf16 %v1718, %v1716
    %v1766 = vpack.c.bf16 %v1723, %v1721
    %v1767 = vpack.c.bf16 %v1728, %v1726
    %v1768 = vpack.c.bf16 %v1733, %v1731
    %v1769 = vpack.c.bf16 %v1738, %v1736
    %v1770 = vpack.c.bf16 %v1743, %v1741
    %v1771 = vpack.c.bf16 %v1748, %v1746
    %v1772 = vpack.c.bf16 %v1753, %v1751
    %v1773 = vpack.c.bf16 %v1758, %v1756
    %s1774 = scalar_lea.vmem %s13, 16
    %v1775 = vld [vmem:[%s1774] sm:$0xf]
    %v1776 = vld [vmem:[%s1774 + $0x4] sm:$0xf]
    %v1777 = vld [vmem:[%s1774 + $0x8] sm:$0xf]
    %v1778 = vld [vmem:[%s1774 + $0xc] sm:$0xf]
    %v1783 = vunpack.c.l.b16 %v1775
    %v1784 = vunpack.c.l.b16 %v1776
    %v1785 = vunpack.c.l.b16 %v1777
    %v1786 = vunpack.c.l.b16 %v1778
    %v1787 = vpack.c.b16 %v1784, %v1783
    %v1788 = vpack.c.b16 %v1786, %v1785
    %v1792 = vsel %vm623, %v1760, 0
    %v1795 = vsel %vm623, %v1761, 0
    %v1798 = vsel %vm623, %v1762, 0
    %v1801 = vsel %vm623, %v1763, 0
    %v1804 = vsel %vm623, %v1764, 0
    %v1807 = vsel %vm623, %v1765, 0
    %v1810 = vsel %vm623, %v1766, 0
    %1812 = vmatpush.bf16.msra.mxu0 0
    %1813 = vmatpush.bf16.msra.mxu0 0
    %1814 = vmatpush.bf16.msra.mxu0 0
    %1815 = vmatpush.bf16.msra.mxu0 0
    %1816 = vmatpush.bf16.msra.mxu0 0
    %1817 = vmatpush.bf16.msra.mxu0 0
    %1818 = vmatpush.bf16.msra.mxu0 %v1788
    %1819 = vmatpush.bf16.msra.mxu0 %v1787
    %1820 = vmatmul.bf16.gmra.mxu0 %v1792
    %v1821 = vpop.f32.mrf.mxu0
    %v1822 = vadd.f32 0.0, %v1821
    %v1823 = vpop.f32.mrf.mxu0
    %v1824 = vadd.f32 0.0, %v1823
    %1825 = vmatmul.bf16.gmra.mxu0 %v1795
    %v1826 = vpop.f32.mrf.mxu0
    %v1827 = vadd.f32 0.0, %v1826
    %v1828 = vpop.f32.mrf.mxu0
    %v1829 = vadd.f32 0.0, %v1828
    %1830 = vmatmul.bf16.gmra.mxu0 %v1798
    %v1831 = vpop.f32.mrf.mxu0
    %v1832 = vadd.f32 0.0, %v1831
    %v1833 = vpop.f32.mrf.mxu0
    %v1834 = vadd.f32 0.0, %v1833
    %1835 = vmatmul.bf16.gmra.mxu0 %v1801
    %v1836 = vpop.f32.mrf.mxu0
    %v1837 = vadd.f32 0.0, %v1836
    %v1838 = vpop.f32.mrf.mxu0
    %v1839 = vadd.f32 0.0, %v1838
    %1840 = vmatmul.bf16.gmra.mxu0 %v1804
    %v1841 = vpop.f32.mrf.mxu0
    %v1842 = vadd.f32 0.0, %v1841
    %v1843 = vpop.f32.mrf.mxu0
    %v1844 = vadd.f32 0.0, %v1843
    %1845 = vmatmul.bf16.gmra.mxu0 %v1807
    %v1846 = vpop.f32.mrf.mxu0
    %v1847 = vadd.f32 0.0, %v1846
    %v1848 = vpop.f32.mrf.mxu0
    %v1849 = vadd.f32 0.0, %v1848
    %1850 = vmatmul.bf16.gmra.mxu0 %v1810
    %v1851 = vpop.f32.mrf.mxu0
    %v1852 = vadd.f32 0.0, %v1851
    %v1853 = vpop.f32.mrf.mxu0
    %v1854 = vadd.f32 0.0, %v1853
    %1855 = vdwg.mxu0
    %s1856 = scalar_lea.vmem %s15, 16
    %v1857 = vld [vmem:[%s1856] sm:$0xf]
    %v1858 = vld [vmem:[%s1856 + $0x4] sm:$0xf]
    %v1859 = vld [vmem:[%s1856 + $0x8] sm:$0xf]
    %v1860 = vld [vmem:[%s1856 + $0xc] sm:$0xf]
    %v1865 = vunpack.c.l.b16 %v1857
    %v1866 = vunpack.c.l.b16 %v1858
    %v1867 = vunpack.c.l.b16 %v1859
    %v1868 = vunpack.c.l.b16 %v1860
    %v1869 = vpack.c.b16 %v1866, %v1865
    %v1870 = vpack.c.b16 %v1868, %v1867
    %v1874 = vsel %vm623, %v1767, 0
    %v1877 = vsel %vm623, %v1768, 0
    %v1880 = vsel %vm623, %v1769, 0
    %v1883 = vsel %vm623, %v1770, 0
    %v1886 = vsel %vm623, %v1771, 0
    %v1889 = vsel %vm623, %v1772, 0
    %v1892 = vsel %vm623, %v1773, 0
    %1894 = vmatpush.bf16.msra.mxu0 0
    %1895 = vmatpush.bf16.msra.mxu0 0
    %1896 = vmatpush.bf16.msra.mxu0 0
    %1897 = vmatpush.bf16.msra.mxu0 0
    %1898 = vmatpush.bf16.msra.mxu0 0
    %1899 = vmatpush.bf16.msra.mxu0 0
    %1900 = vmatpush.bf16.msra.mxu0 %v1870
    %1901 = vmatpush.bf16.msra.mxu0 %v1869
    %1902 = vmatmul.bf16.gmra.mxu0 %v1874
    %v1903 = vpop.f32.mrf.mxu0
    %v1904 = vadd.f32 0.0, %v1903
    %v1905 = vpop.f32.mrf.mxu0
    %v1906 = vadd.f32 0.0, %v1905
    %1907 = vmatmul.bf16.gmra.mxu0 %v1877
    %v1908 = vpop.f32.mrf.mxu0
    %v1909 = vadd.f32 0.0, %v1908
    %v1910 = vpop.f32.mrf.mxu0
    %v1911 = vadd.f32 0.0, %v1910
    %1912 = vmatmul.bf16.gmra.mxu0 %v1880
    %v1913 = vpop.f32.mrf.mxu0
    %v1914 = vadd.f32 0.0, %v1913
    %v1915 = vpop.f32.mrf.mxu0
    %v1916 = vadd.f32 0.0, %v1915
    %1917 = vmatmul.bf16.gmra.mxu0 %v1883
    %v1918 = vpop.f32.mrf.mxu0
    %v1919 = vadd.f32 0.0, %v1918
    %v1920 = vpop.f32.mrf.mxu0
    %v1921 = vadd.f32 0.0, %v1920
    %1922 = vmatmul.bf16.gmra.mxu0 %v1886
    %v1923 = vpop.f32.mrf.mxu0
    %v1924 = vadd.f32 0.0, %v1923
    %v1925 = vpop.f32.mrf.mxu0
    %v1926 = vadd.f32 0.0, %v1925
    %1927 = vmatmul.bf16.gmra.mxu0 %v1889
    %v1928 = vpop.f32.mrf.mxu0
    %v1929 = vadd.f32 0.0, %v1928
    %v1930 = vpop.f32.mrf.mxu0
    %v1931 = vadd.f32 0.0, %v1930
    %1932 = vmatmul.bf16.gmra.mxu0 %v1892
    %v1933 = vpop.f32.mrf.mxu0
    %v1934 = vadd.f32 0.0, %v1933
    %v1935 = vpop.f32.mrf.mxu0
    %v1936 = vadd.f32 0.0, %v1935
    %1937 = vdwg.mxu0
    %v1938 = vadd.f32 %v1822, %v1904
    %v1939 = vadd.f32 %v1824, %v1906
    %v1940 = vadd.f32 %v1827, %v1909
    %v1941 = vadd.f32 %v1829, %v1911
    %v1942 = vadd.f32 %v1832, %v1914
    %v1943 = vadd.f32 %v1834, %v1916
    %v1944 = vadd.f32 %v1837, %v1919
    %v1945 = vadd.f32 %v1839, %v1921
    %v1946 = vadd.f32 %v1842, %v1924
    %v1947 = vadd.f32 %v1844, %v1926
    %v1948 = vadd.f32 %v1847, %v1929
    %v1949 = vadd.f32 %v1849, %v1931
    %v1950 = vadd.f32 %v1852, %v1934
    %v1951 = vadd.f32 %v1854, %v1936
    %s1952 = scalar_lea.vmem %s17, 16
    %v1953 = vld [vmem:[%s1952] sm:$0xf]
    %v1954 = vld [vmem:[%s1952 + $0x4] sm:$0xf]
    %v1955 = vld [vmem:[%s1952 + $0x8] sm:$0xf]
    %v1956 = vld [vmem:[%s1952 + $0xc] sm:$0xf]
    %v1961 = vunpack.c.l.b16 %v1953
    %v1962 = vunpack.c.l.b16 %v1954
    %v1963 = vunpack.c.l.b16 %v1955
    %v1964 = vunpack.c.l.b16 %v1956
    %v1965 = vpack.c.b16 %v1962, %v1961
    %v1966 = vpack.c.b16 %v1964, %v1963
    %1969 = vmatpush.bf16.msra.mxu0 0
    %1970 = vmatpush.bf16.msra.mxu0 0
    %1971 = vmatpush.bf16.msra.mxu0 0
    %1972 = vmatpush.bf16.msra.mxu0 0
    %1973 = vmatpush.bf16.msra.mxu0 0
    %1974 = vmatpush.bf16.msra.mxu0 0
    %1975 = vmatpush.bf16.msra.mxu0 %v1966
    %1976 = vmatpush.bf16.msra.mxu0 %v1965
    %1977 = vmatmul.bf16.gmra.mxu0 %v1194
    %v1978 = vpop.f32.mrf.mxu0
    %v1979 = vadd.f32 0.0, %v1978
    %v1980 = vpop.f32.mrf.mxu0
    %v1981 = vadd.f32 0.0, %v1980
    %1982 = vmatmul.bf16.gmra.mxu0 %v1197
    %v1983 = vpop.f32.mrf.mxu0
    %v1984 = vadd.f32 0.0, %v1983
    %v1985 = vpop.f32.mrf.mxu0
    %v1986 = vadd.f32 0.0, %v1985
    %1987 = vmatmul.bf16.gmra.mxu0 %v1200
    %v1988 = vpop.f32.mrf.mxu0
    %v1989 = vadd.f32 0.0, %v1988
    %v1990 = vpop.f32.mrf.mxu0
    %v1991 = vadd.f32 0.0, %v1990
    %1992 = vmatmul.bf16.gmra.mxu0 %v1203
    %v1993 = vpop.f32.mrf.mxu0
    %v1994 = vadd.f32 0.0, %v1993
    %v1995 = vpop.f32.mrf.mxu0
    %v1996 = vadd.f32 0.0, %v1995
    %1997 = vmatmul.bf16.gmra.mxu0 %v1206
    %v1998 = vpop.f32.mrf.mxu0
    %v1999 = vadd.f32 0.0, %v1998
    %v2000 = vpop.f32.mrf.mxu0
    %v2001 = vadd.f32 0.0, %v2000
    %2002 = vmatmul.bf16.gmra.mxu0 %v1209
    %v2003 = vpop.f32.mrf.mxu0
    %v2004 = vadd.f32 0.0, %v2003
    %v2005 = vpop.f32.mrf.mxu0
    %v2006 = vadd.f32 0.0, %v2005
    %2007 = vmatmul.bf16.gmra.mxu0 %v1212
    %v2008 = vpop.f32.mrf.mxu0
    %v2009 = vadd.f32 0.0, %v2008
    %v2010 = vpop.f32.mrf.mxu0
    %v2011 = vadd.f32 0.0, %v2010
    %2012 = vdwg.mxu0
    %v2013 = vadd.f32 %v1938, %v1979
    %v2014 = vadd.f32 %v1939, %v1981
    %v2015 = vadd.f32 %v1940, %v1984
    %v2016 = vadd.f32 %v1941, %v1986
    %v2017 = vadd.f32 %v1942, %v1989
    %v2018 = vadd.f32 %v1943, %v1991
    %v2019 = vadd.f32 %v1944, %v1994
    %v2020 = vadd.f32 %v1945, %v1996
    %v2021 = vadd.f32 %v1946, %v1999
    %v2022 = vadd.f32 %v1947, %v2001
    %v2023 = vadd.f32 %v1948, %v2004
    %v2024 = vadd.f32 %v1949, %v2006
    %v2025 = vadd.f32 %v1950, %v2009
    %v2026 = vadd.f32 %v1951, %v2011
    %s2027 = scalar_lea.vmem %s19, 1
    %v2028 = vld [vmem:[%s2027] sm:$0x1]
    %v2030 = vperm.slane %v2028, 0
    %v2032 = vadd.f32 %v2013, %v2030
    %v2033 = vadd.f32 %v2014, %v2030
    %v2034 = vadd.f32 %v2015, %v2030
    %v2035 = vadd.f32 %v2016, %v2030
    %v2036 = vadd.f32 %v2017, %v2030
    %v2037 = vadd.f32 %v2018, %v2030
    %v2038 = vadd.f32 %v2019, %v2030
    %v2039 = vadd.f32 %v2020, %v2030
    %v2040 = vadd.f32 %v2021, %v2030
    %v2041 = vadd.f32 %v2022, %v2030
    %v2042 = vadd.f32 %v2023, %v2030
    %v2043 = vadd.f32 %v2024, %v2030
    %v2044 = vadd.f32 %v2025, %v2030
    %v2045 = vadd.f32 %v2026, %v2030
    %v2046 = vmax.f32 %v2032, 0.0
    %v2047 = vmax.f32 %v2033, 0.0
    %v2048 = vmax.f32 %v2034, 0.0
    %v2049 = vmax.f32 %v2035, 0.0
    %v2050 = vmax.f32 %v2036, 0.0
    %v2051 = vmax.f32 %v2037, 0.0
    %v2052 = vmax.f32 %v2038, 0.0
    %v2053 = vmax.f32 %v2039, 0.0
    %v2054 = vmax.f32 %v2040, 0.0
    %v2055 = vmax.f32 %v2041, 0.0
    %v2056 = vmax.f32 %v2042, 0.0
    %v2057 = vmax.f32 %v2043, 0.0
    %v2058 = vmax.f32 %v2044, 0.0
    %v2059 = vmax.f32 %v2045, 0.0
    %v2060 = vpack.c.bf16 %v2047, %v2046
    %v2061 = vpack.c.bf16 %v2049, %v2048
    %v2062 = vpack.c.bf16 %v2051, %v2050
    %v2063 = vpack.c.bf16 %v2053, %v2052
    %v2064 = vpack.c.bf16 %v2055, %v2054
    %v2065 = vpack.c.bf16 %v2057, %v2056
    %v2066 = vpack.c.bf16 %v2059, %v2058
    %s2067 = scalar_lea.vmem %s21, 32
    %v2068 = vld [vmem:[%s2067] sm:$0xf]
    %v2069 = vld [vmem:[%s2067 + $0x4] sm:$0xf]
    %v2070 = vld [vmem:[%s2067 + $0x8] sm:$0xf]
    %v2071 = vld [vmem:[%s2067 + $0xc] sm:$0xf]
    %v2072 = vld [vmem:[%s2067 + $0x10] sm:$0xf]
    %v2073 = vld [vmem:[%s2067 + $0x14] sm:$0xf]
    %v2074 = vld [vmem:[%s2067 + $0x18] sm:$0xf]
    %v2075 = vld [vmem:[%s2067 + $0x1c] sm:$0xf]
    %s2076 = scalar_lea.vmem %s23, 1
    %v2077 = vld [vmem:[%s2076] sm:$0x1]
    %v2079 = vperm.slane %v2077, 0
    %v2089 = vunpack.c.l.b16 %v2068
    %v2090 = vunpack.c.l.b16 %v2069
    %v2091 = vunpack.c.l.b16 %v2070
    %v2092 = vunpack.c.l.b16 %v2071
    %v2093 = vunpack.c.l.b16 %v2072
    %v2094 = vunpack.c.l.b16 %v2073
    %v2095 = vunpack.c.l.b16 %v2074
    %v2096 = vunpack.c.l.b16 %v2075
    %v2097 = vpack.c.b16 %v2090, %v2089
    %v2098 = vpack.c.b16 %v2092, %v2091
    %v2099 = vpack.c.b16 %v2094, %v2093
    %v2100 = vpack.c.b16 %v2096, %v2095
    %v2106 = vsel %vm954, %v2060, 0
    %v2109 = vsel %vm954, %v2061, 0
    %v2112 = vsel %vm954, %v2062, 0
    %v2115 = vsel %vm954, %v2063, 0
    %v2118 = vsel %vm954, %v2064, 0
    %v2121 = vsel %vm954, %v2065, 0
    %v2124 = vsel %vm954, %v2066, 0
    %2126 = vmatpush.bf16.msra.mxu0 0
    %2127 = vmatpush.bf16.msra.mxu0 0
    %2128 = vmatpush.bf16.msra.mxu0 0
    %2129 = vmatpush.bf16.msra.mxu0 0
    %2130 = vmatpush.bf16.msra.mxu0 %v2100
    %2131 = vmatpush.bf16.msra.mxu0 %v2099
    %2132 = vmatpush.bf16.msra.mxu0 %v2098
    %2133 = vmatpush.bf16.msra.mxu0 %v2097
    %2134 = vmatmul.bf16.gmra.mxu0 %v2106
    %v2135 = vpop.f32.mrf.mxu0
    %v2136 = vadd.f32 %v2079, %v2135
    %v2137 = vpop.f32.mrf.mxu0
    %v2138 = vadd.f32 %v2079, %v2137
    %2139 = vmatmul.bf16.gmra.mxu0 %v2109
    %v2140 = vpop.f32.mrf.mxu0
    %v2141 = vadd.f32 %v2079, %v2140
    %v2142 = vpop.f32.mrf.mxu0
    %v2143 = vadd.f32 %v2079, %v2142
    %2144 = vmatmul.bf16.gmra.mxu0 %v2112
    %v2145 = vpop.f32.mrf.mxu0
    %v2146 = vadd.f32 %v2079, %v2145
    %v2147 = vpop.f32.mrf.mxu0
    %v2148 = vadd.f32 %v2079, %v2147
    %2149 = vmatmul.bf16.gmra.mxu0 %v2115
    %v2150 = vpop.f32.mrf.mxu0
    %v2151 = vadd.f32 %v2079, %v2150
    %v2152 = vpop.f32.mrf.mxu0
    %v2153 = vadd.f32 %v2079, %v2152
    %2154 = vmatmul.bf16.gmra.mxu0 %v2118
    %v2155 = vpop.f32.mrf.mxu0
    %v2156 = vadd.f32 %v2079, %v2155
    %v2157 = vpop.f32.mrf.mxu0
    %v2158 = vadd.f32 %v2079, %v2157
    %2159 = vmatmul.bf16.gmra.mxu0 %v2121
    %v2160 = vpop.f32.mrf.mxu0
    %v2161 = vadd.f32 %v2079, %v2160
    %v2162 = vpop.f32.mrf.mxu0
    %v2163 = vadd.f32 %v2079, %v2162
    %2164 = vmatmul.bf16.gmra.mxu0 %v2124
    %v2165 = vpop.f32.mrf.mxu0
    %v2166 = vadd.f32 %v2079, %v2165
    %v2167 = vpop.f32.mrf.mxu0
    %v2168 = vadd.f32 %v2079, %v2167
    %2169 = vdwg.mxu0
    %v2170 = vmax.f32 %v2136, 0.0
    %v2171 = vmax.f32 %v2138, 0.0
    %v2172 = vmax.f32 %v2141, 0.0
    %v2173 = vmax.f32 %v2143, 0.0
    %v2174 = vmax.f32 %v2146, 0.0
    %v2175 = vmax.f32 %v2148, 0.0
    %v2176 = vmax.f32 %v2151, 0.0
    %v2177 = vmax.f32 %v2153, 0.0
    %v2178 = vmax.f32 %v2156, 0.0
    %v2179 = vmax.f32 %v2158, 0.0
    %v2180 = vmax.f32 %v2161, 0.0
    %v2181 = vmax.f32 %v2163, 0.0
    %v2182 = vmax.f32 %v2166, 0.0
    %v2183 = vmax.f32 %v2168, 0.0
    %v2184 = vpack.c.bf16 %v2171, %v2170
    %v2185 = vpack.c.bf16 %v2173, %v2172
    %v2186 = vpack.c.bf16 %v2175, %v2174
    %v2187 = vpack.c.bf16 %v2177, %v2176
    %v2188 = vpack.c.bf16 %v2179, %v2178
    %v2189 = vpack.c.bf16 %v2181, %v2180
    %v2190 = vpack.c.bf16 %v2183, %v2182
    %s2191 = scalar_lea.vmem %s25, 32
    %v2192 = vld [vmem:[%s2191] sm:$0xf]
    %v2193 = vld [vmem:[%s2191 + $0x4] sm:$0xf]
    %v2194 = vld [vmem:[%s2191 + $0x8] sm:$0xf]
    %v2195 = vld [vmem:[%s2191 + $0xc] sm:$0xf]
    %v2196 = vld [vmem:[%s2191 + $0x10] sm:$0xf]
    %v2197 = vld [vmem:[%s2191 + $0x14] sm:$0xf]
    %v2198 = vld [vmem:[%s2191 + $0x18] sm:$0xf]
    %v2199 = vld [vmem:[%s2191 + $0x1c] sm:$0xf]
    %s2200 = scalar_lea.vmem %s27, 1
    %v2201 = vld [vmem:[%s2200] sm:$0x1]
    %v2203 = vperm.slane %v2201, 0
    %v2213 = vunpack.c.l.b16 %v2192
    %v2214 = vunpack.c.l.b16 %v2193
    %v2215 = vunpack.c.l.b16 %v2194
    %v2216 = vunpack.c.l.b16 %v2195
    %v2217 = vunpack.c.l.b16 %v2196
    %v2218 = vunpack.c.l.b16 %v2197
    %v2219 = vunpack.c.l.b16 %v2198
    %v2220 = vunpack.c.l.b16 %v2199
    %v2221 = vpack.c.b16 %v2214, %v2213
    %v2222 = vpack.c.b16 %v2216, %v2215
    %v2223 = vpack.c.b16 %v2218, %v2217
    %v2224 = vpack.c.b16 %v2220, %v2219
    %v2230 = vsel %vm954, %v2184, 0
    %v2233 = vsel %vm954, %v2185, 0
    %v2236 = vsel %vm954, %v2186, 0
    %v2239 = vsel %vm954, %v2187, 0
    %v2242 = vsel %vm954, %v2188, 0
    %v2245 = vsel %vm954, %v2189, 0
    %v2248 = vsel %vm954, %v2190, 0
    %2250 = vmatpush.bf16.msra.mxu0 0
    %2251 = vmatpush.bf16.msra.mxu0 0
    %2252 = vmatpush.bf16.msra.mxu0 0
    %2253 = vmatpush.bf16.msra.mxu0 0
    %2254 = vmatpush.bf16.msra.mxu0 %v2224
    %2255 = vmatpush.bf16.msra.mxu0 %v2223
    %2256 = vmatpush.bf16.msra.mxu0 %v2222
    %2257 = vmatpush.bf16.msra.mxu0 %v2221
    %2258 = vmatmul.bf16.gmra.mxu0 %v2230
    %v2259 = vpop.f32.mrf.mxu0
    %v2260 = vadd.f32 %v2203, %v2259
    %v2261 = vpop.f32.mrf.mxu0
    %v2262 = vadd.f32 %v2203, %v2261
    %2263 = vmatmul.bf16.gmra.mxu0 %v2233
    %v2264 = vpop.f32.mrf.mxu0
    %v2265 = vadd.f32 %v2203, %v2264
    %v2266 = vpop.f32.mrf.mxu0
    %v2267 = vadd.f32 %v2203, %v2266
    %2268 = vmatmul.bf16.gmra.mxu0 %v2236
    %v2269 = vpop.f32.mrf.mxu0
    %v2270 = vadd.f32 %v2203, %v2269
    %v2271 = vpop.f32.mrf.mxu0
    %v2272 = vadd.f32 %v2203, %v2271
    %2273 = vmatmul.bf16.gmra.mxu0 %v2239
    %v2274 = vpop.f32.mrf.mxu0
    %v2275 = vadd.f32 %v2203, %v2274
    %v2276 = vpop.f32.mrf.mxu0
    %v2277 = vadd.f32 %v2203, %v2276
    %2278 = vmatmul.bf16.gmra.mxu0 %v2242
    %v2279 = vpop.f32.mrf.mxu0
    %v2280 = vadd.f32 %v2203, %v2279
    %v2281 = vpop.f32.mrf.mxu0
    %v2282 = vadd.f32 %v2203, %v2281
    %2283 = vmatmul.bf16.gmra.mxu0 %v2245
    %v2284 = vpop.f32.mrf.mxu0
    %v2285 = vadd.f32 %v2203, %v2284
    %v2286 = vpop.f32.mrf.mxu0
    %v2287 = vadd.f32 %v2203, %v2286
    %2288 = vmatmul.bf16.gmra.mxu0 %v2248
    %v2289 = vpop.f32.mrf.mxu0
    %v2290 = vadd.f32 %v2203, %v2289
    %v2291 = vpop.f32.mrf.mxu0
    %v2292 = vadd.f32 %v2203, %v2291
    %2293 = vdwg.mxu0
    %v2294 = vadd.f32 %v1156, %v2260
    %v2295 = vadd.f32 %v1157, %v2262
    %v2296 = vadd.f32 %v1158, %v2265
    %v2297 = vadd.f32 %v1159, %v2267
    %v2298 = vadd.f32 %v1160, %v2270
    %v2299 = vadd.f32 %v1161, %v2272
    %v2300 = vadd.f32 %v1162, %v2275
    %v2301 = vadd.f32 %v1163, %v2277
    %v2302 = vadd.f32 %v1164, %v2280
    %v2303 = vadd.f32 %v1165, %v2282
    %v2304 = vadd.f32 %v1166, %v2285
    %v2305 = vadd.f32 %v1167, %v2287
    %v2306 = vadd.f32 %v1168, %v2290
    %v2307 = vadd.f32 %v1169, %v2292
    %v2308 = vmax.f32 %v2294, 0.0
    %v2309 = vmax.f32 %v2295, 0.0
    %v2310 = vmax.f32 %v2296, 0.0
    %v2311 = vmax.f32 %v2297, 0.0
    %v2312 = vmax.f32 %v2298, 0.0
    %v2313 = vmax.f32 %v2299, 0.0
    %v2314 = vmax.f32 %v2300, 0.0
    %v2315 = vmax.f32 %v2301, 0.0
    %v2316 = vmax.f32 %v2302, 0.0
    %v2317 = vmax.f32 %v2303, 0.0
    %v2318 = vmax.f32 %v2304, 0.0
    %v2319 = vmax.f32 %v2305, 0.0
    %v2320 = vmax.f32 %v2306, 0.0
    %v2321 = vmax.f32 %v2307, 0.0
    %v2322 = vpack.c.bf16 %v2309, %v2308
    %v2323 = vpack.c.bf16 %v2311, %v2310
    %v2324 = vpack.c.bf16 %v2313, %v2312
    %v2325 = vpack.c.bf16 %v2315, %v2314
    %v2326 = vpack.c.bf16 %v2317, %v2316
    %v2327 = vpack.c.bf16 %v2319, %v2318
    %v2328 = vpack.c.bf16 %v2321, %v2320
    %s2329 = scalar_lea.vmem %s29, 16
    %v2330 = vld [vmem:[%s2329] sm:$0xf]
    %v2331 = vld [vmem:[%s2329 + $0x4] sm:$0xf]
    %v2332 = vld [vmem:[%s2329 + $0x8] sm:$0xf]
    %v2333 = vld [vmem:[%s2329 + $0xc] sm:$0xf]
    %v2338 = vunpack.c.l.b16 %v2330
    %v2339 = vunpack.c.l.b16 %v2331
    %v2340 = vunpack.c.l.b16 %v2332
    %v2341 = vunpack.c.l.b16 %v2333
    %v2342 = vpack.c.b16 %v2339, %v2338
    %v2343 = vpack.c.b16 %v2341, %v2340
    %v2347 = vsel %vm623, %v2322, 0
    %v2350 = vsel %vm623, %v2323, 0
    %v2353 = vsel %vm623, %v2324, 0
    %v2356 = vsel %vm623, %v2325, 0
    %v2359 = vsel %vm623, %v2326, 0
    %v2362 = vsel %vm623, %v2327, 0
    %v2365 = vsel %vm623, %v2328, 0
    %2367 = vmatpush.bf16.msra.mxu0 0
    %2368 = vmatpush.bf16.msra.mxu0 0
    %2369 = vmatpush.bf16.msra.mxu0 0
    %2370 = vmatpush.bf16.msra.mxu0 0
    %2371 = vmatpush.bf16.msra.mxu0 0
    %2372 = vmatpush.bf16.msra.mxu0 0
    %2373 = vmatpush.bf16.msra.mxu0 %v2343
    %2374 = vmatpush.bf16.msra.mxu0 %v2342
    %2375 = vmatmul.bf16.gmra.mxu0 %v2347
    %v2376 = vpop.f32.mrf.mxu0
    %v2377 = vadd.f32 0.0, %v2376
    %v2378 = vpop.f32.mrf.mxu0
    %v2379 = vadd.f32 0.0, %v2378
    %2380 = vmatmul.bf16.gmra.mxu0 %v2350
    %v2381 = vpop.f32.mrf.mxu0
    %v2382 = vadd.f32 0.0, %v2381
    %v2383 = vpop.f32.mrf.mxu0
    %v2384 = vadd.f32 0.0, %v2383
    %2385 = vmatmul.bf16.gmra.mxu0 %v2353
    %v2386 = vpop.f32.mrf.mxu0
    %v2387 = vadd.f32 0.0, %v2386
    %v2388 = vpop.f32.mrf.mxu0
    %v2389 = vadd.f32 0.0, %v2388
    %2390 = vmatmul.bf16.gmra.mxu0 %v2356
    %v2391 = vpop.f32.mrf.mxu0
    %v2392 = vadd.f32 0.0, %v2391
    %v2393 = vpop.f32.mrf.mxu0
    %v2394 = vadd.f32 0.0, %v2393
    %2395 = vmatmul.bf16.gmra.mxu0 %v2359
    %v2396 = vpop.f32.mrf.mxu0
    %v2397 = vadd.f32 0.0, %v2396
    %v2398 = vpop.f32.mrf.mxu0
    %v2399 = vadd.f32 0.0, %v2398
    %2400 = vmatmul.bf16.gmra.mxu0 %v2362
    %v2401 = vpop.f32.mrf.mxu0
    %v2402 = vadd.f32 0.0, %v2401
    %v2403 = vpop.f32.mrf.mxu0
    %v2404 = vadd.f32 0.0, %v2403
    %2405 = vmatmul.bf16.gmra.mxu0 %v2365
    %v2406 = vpop.f32.mrf.mxu0
    %v2407 = vadd.f32 0.0, %v2406
    %v2408 = vpop.f32.mrf.mxu0
    %v2409 = vadd.f32 0.0, %v2408
    %2410 = vdwg.mxu0
    %2425 = vrot.lane.b32.xlu0 %v2377, 64
    %v2426 = vpop.permute.xlu0 %2425
    %2427 = vrot.lane.b32.xlu0 %v2379, 64
    %v2428 = vpop.permute.xlu0 %2427
    %2429 = vrot.lane.b32.xlu0 %v2382, 64
    %v2430 = vpop.permute.xlu0 %2429
    %2431 = vrot.lane.b32.xlu0 %v2384, 64
    %v2432 = vpop.permute.xlu0 %2431
    %2433 = vrot.lane.b32.xlu0 %v2387, 64
    %v2434 = vpop.permute.xlu0 %2433
    %2435 = vrot.lane.b32.xlu0 %v2389, 64
    %v2436 = vpop.permute.xlu0 %2435
    %2437 = vrot.lane.b32.xlu0 %v2392, 64
    %v2438 = vpop.permute.xlu0 %2437
    %2439 = vrot.lane.b32.xlu0 %v2394, 64
    %v2440 = vpop.permute.xlu0 %2439
    %2441 = vrot.lane.b32.xlu0 %v2397, 64
    %v2442 = vpop.permute.xlu0 %2441
    %2443 = vrot.lane.b32.xlu0 %v2399, 64
    %v2444 = vpop.permute.xlu0 %2443
    %2445 = vrot.lane.b32.xlu0 %v2402, 64
    %v2446 = vpop.permute.xlu0 %2445
    %2447 = vrot.lane.b32.xlu0 %v2404, 64
    %v2448 = vpop.permute.xlu0 %2447
    %2449 = vrot.lane.b32.xlu0 %v2407, 64
    %v2450 = vpop.permute.xlu0 %2449
    %2451 = vrot.lane.b32.xlu0 %v2409, 64
    %v2452 = vpop.permute.xlu0 %2451
    %v2467 = vadd.f32 %v1822, %v2426
    %v2468 = vadd.f32 %v1824, %v2428
    %v2469 = vadd.f32 %v1827, %v2430
    %v2470 = vadd.f32 %v1829, %v2432
    %v2471 = vadd.f32 %v1832, %v2434
    %v2472 = vadd.f32 %v1834, %v2436
    %v2473 = vadd.f32 %v1837, %v2438
    %v2474 = vadd.f32 %v1839, %v2440
    %v2475 = vadd.f32 %v1842, %v2442
    %v2476 = vadd.f32 %v1844, %v2444
    %v2477 = vadd.f32 %v1847, %v2446
    %v2478 = vadd.f32 %v1849, %v2448
    %v2479 = vadd.f32 %v1852, %v2450
    %v2480 = vadd.f32 %v1854, %v2452
    %s2481 = scalar_lea.vmem %s31, 1
    %v2482 = vld [vmem:[%s2481] sm:$0x1]
    %v2484 = vperm.slane %v2482, 0
    %2485 = vrot.lane.b32.xlu0 %v2484, 64
    %v2486 = vpop.permute.xlu0 %2485
    %v2488 = vadd.f32 %v2467, %v2486
    %v2489 = vadd.f32 %v2468, %v2486
    %v2490 = vadd.f32 %v2469, %v2486
    %v2491 = vadd.f32 %v2470, %v2486
    %v2492 = vadd.f32 %v2471, %v2486
    %v2493 = vadd.f32 %v2472, %v2486
    %v2494 = vadd.f32 %v2473, %v2486
    %v2495 = vadd.f32 %v2474, %v2486
    %v2496 = vadd.f32 %v2475, %v2486
    %v2497 = vadd.f32 %v2476, %v2486
    %v2498 = vadd.f32 %v2477, %v2486
    %v2499 = vadd.f32 %v2478, %v2486
    %v2500 = vadd.f32 %v2479, %v2486
    %v2501 = vadd.f32 %v2480, %v2486
    %v2502 = vmax.f32 %v2488, 0.0
    %v2503 = vmax.f32 %v2489, 0.0
    %v2504 = vmax.f32 %v2490, 0.0
    %v2505 = vmax.f32 %v2491, 0.0
    %v2506 = vmax.f32 %v2492, 0.0
    %v2507 = vmax.f32 %v2493, 0.0
    %v2508 = vmax.f32 %v2494, 0.0
    %v2509 = vmax.f32 %v2495, 0.0
    %v2510 = vmax.f32 %v2496, 0.0
    %v2511 = vmax.f32 %v2497, 0.0
    %v2512 = vmax.f32 %v2498, 0.0
    %v2513 = vmax.f32 %v2499, 0.0
    %v2514 = vmax.f32 %v2500, 0.0
    %v2515 = vmax.f32 %v2501, 0.0
    %v2516 = vpack.c.bf16 %v2503, %v2502
    %v2517 = vpack.c.bf16 %v2505, %v2504
    %v2518 = vpack.c.bf16 %v2507, %v2506
    %v2519 = vpack.c.bf16 %v2509, %v2508
    %v2520 = vpack.c.bf16 %v2511, %v2510
    %v2521 = vpack.c.bf16 %v2513, %v2512
    %v2522 = vpack.c.bf16 %v2515, %v2514
    %s2523 = scalar_lea.vmem %s33, 32
    %v2524 = vld [vmem:[%s2523] sm:$0xf]
    %v2525 = vld [vmem:[%s2523 + $0x4] sm:$0xf]
    %v2526 = vld [vmem:[%s2523 + $0x8] sm:$0xf]
    %v2527 = vld [vmem:[%s2523 + $0xc] sm:$0xf]
    %v2528 = vld [vmem:[%s2523 + $0x10] sm:$0xf]
    %v2529 = vld [vmem:[%s2523 + $0x14] sm:$0xf]
    %v2530 = vld [vmem:[%s2523 + $0x18] sm:$0xf]
    %v2531 = vld [vmem:[%s2523 + $0x1c] sm:$0xf]
    %s2532 = scalar_lea.vmem %s35, 1
    %v2533 = vld [vmem:[%s2532] sm:$0x1]
    %v2535 = vperm.slane %v2533, 0
    %2544 = vrot.lane.b32.xlu0 %v2516, 64
    %v2545 = vpop.permute.xlu0 %2544
    %2546 = vrot.lane.b32.xlu0 %v2517, 64
    %v2547 = vpop.permute.xlu0 %2546
    %2548 = vrot.lane.b32.xlu0 %v2518, 64
    %v2549 = vpop.permute.xlu0 %2548
    %2550 = vrot.lane.b32.xlu0 %v2519, 64
    %v2551 = vpop.permute.xlu0 %2550
    %2552 = vrot.lane.b32.xlu0 %v2520, 64
    %v2553 = vpop.permute.xlu0 %2552
    %2554 = vrot.lane.b32.xlu0 %v2521, 64
    %v2555 = vpop.permute.xlu0 %2554
    %2556 = vrot.lane.b32.xlu0 %v2522, 64
    %v2557 = vpop.permute.xlu0 %2556
    %v2566 = vunpack.c.l.b16 %v2524
    %v2567 = vunpack.c.l.b16 %v2525
    %v2568 = vunpack.c.l.b16 %v2526
    %v2569 = vunpack.c.l.b16 %v2527
    %v2570 = vunpack.c.l.b16 %v2528
    %v2571 = vunpack.c.l.b16 %v2529
    %v2572 = vunpack.c.l.b16 %v2530
    %v2573 = vunpack.c.l.b16 %v2531
    %v2574 = vpack.c.b16 %v2567, %v2566
    %v2575 = vpack.c.b16 %v2569, %v2568
    %v2576 = vpack.c.b16 %v2571, %v2570
    %v2577 = vpack.c.b16 %v2573, %v2572
    %v2583 = vsel %vm954, %v2545, 0
    %v2586 = vsel %vm954, %v2547, 0
    %v2589 = vsel %vm954, %v2549, 0
    %v2592 = vsel %vm954, %v2551, 0
    %v2595 = vsel %vm954, %v2553, 0
    %v2598 = vsel %vm954, %v2555, 0
    %v2601 = vsel %vm954, %v2557, 0
    %2603 = vmatpush.bf16.msra.mxu0 0
    %2604 = vmatpush.bf16.msra.mxu0 0
    %2605 = vmatpush.bf16.msra.mxu0 0
    %2606 = vmatpush.bf16.msra.mxu0 0
    %2607 = vmatpush.bf16.msra.mxu0 %v2577
    %2608 = vmatpush.bf16.msra.mxu0 %v2576
    %2609 = vmatpush.bf16.msra.mxu0 %v2575
    %2610 = vmatpush.bf16.msra.mxu0 %v2574
    %2611 = vmatmul.bf16.gmra.mxu0 %v2583
    %v2612 = vpop.f32.mrf.mxu0
    %v2613 = vadd.f32 %v2535, %v2612
    %v2614 = vpop.f32.mrf.mxu0
    %v2615 = vadd.f32 %v2535, %v2614
    %2616 = vmatmul.bf16.gmra.mxu0 %v2586
    %v2617 = vpop.f32.mrf.mxu0
    %v2618 = vadd.f32 %v2535, %v2617
    %v2619 = vpop.f32.mrf.mxu0
    %v2620 = vadd.f32 %v2535, %v2619
    %2621 = vmatmul.bf16.gmra.mxu0 %v2589
    %v2622 = vpop.f32.mrf.mxu0
    %v2623 = vadd.f32 %v2535, %v2622
    %v2624 = vpop.f32.mrf.mxu0
    %v2625 = vadd.f32 %v2535, %v2624
    %2626 = vmatmul.bf16.gmra.mxu0 %v2592
    %v2627 = vpop.f32.mrf.mxu0
    %v2628 = vadd.f32 %v2535, %v2627
    %v2629 = vpop.f32.mrf.mxu0
    %v2630 = vadd.f32 %v2535, %v2629
    %2631 = vmatmul.bf16.gmra.mxu0 %v2595
    %v2632 = vpop.f32.mrf.mxu0
    %v2633 = vadd.f32 %v2535, %v2632
    %v2634 = vpop.f32.mrf.mxu0
    %v2635 = vadd.f32 %v2535, %v2634
    %2636 = vmatmul.bf16.gmra.mxu0 %v2598
    %v2637 = vpop.f32.mrf.mxu0
    %v2638 = vadd.f32 %v2535, %v2637
    %v2639 = vpop.f32.mrf.mxu0
    %v2640 = vadd.f32 %v2535, %v2639
    %2641 = vmatmul.bf16.gmra.mxu0 %v2601
    %v2642 = vpop.f32.mrf.mxu0
    %v2643 = vadd.f32 %v2535, %v2642
    %v2644 = vpop.f32.mrf.mxu0
    %v2645 = vadd.f32 %v2535, %v2644
    %2646 = vdwg.mxu0
    %v2647 = vmax.f32 %v2613, 0.0
    %v2648 = vmax.f32 %v2615, 0.0
    %v2649 = vmax.f32 %v2618, 0.0
    %v2650 = vmax.f32 %v2620, 0.0
    %v2651 = vmax.f32 %v2623, 0.0
    %v2652 = vmax.f32 %v2625, 0.0
    %v2653 = vmax.f32 %v2628, 0.0
    %v2654 = vmax.f32 %v2630, 0.0
    %v2655 = vmax.f32 %v2633, 0.0
    %v2656 = vmax.f32 %v2635, 0.0
    %v2657 = vmax.f32 %v2638, 0.0
    %v2658 = vmax.f32 %v2640, 0.0
    %v2659 = vmax.f32 %v2643, 0.0
    %v2660 = vmax.f32 %v2645, 0.0
    %v2661 = vpack.c.bf16 %v2648, %v2647
    %v2662 = vpack.c.bf16 %v2650, %v2649
    %v2663 = vpack.c.bf16 %v2652, %v2651
    %v2664 = vpack.c.bf16 %v2654, %v2653
    %v2665 = vpack.c.bf16 %v2656, %v2655
    %v2666 = vpack.c.bf16 %v2658, %v2657
    %v2667 = vpack.c.bf16 %v2660, %v2659
    %2668 = vmatpush.bf16.msra.mxu0 0
    %2669 = vmatpush.bf16.msra.mxu0 %v2667
    %2670 = vmatpush.bf16.msra.mxu0 %v2666
    %2671 = vmatpush.bf16.msra.mxu0 %v2665
    %2672 = vmatpush.bf16.msra.mxu0 %v2664
    %2673 = vmatpush.bf16.msra.mxu0 %v2663
    %2674 = vmatpush.bf16.msra.mxu0 %v2662
    %2675 = vmatpush.bf16.msra.mxu0 %v2661
    %2676 = vmatmul.bf16.gmra.mxu0 %v1513
    %v2677 = vpop.f32.mrf.mxu0
    %v2678 = vadd.f32 0.0, %v2677
    %v2679 = vpop.f32.mrf.mxu0
    %v2680 = vadd.f32 0.0, %v2679
    %2681 = vdwg.mxu0
    %v2682 = vmul.f32 %v2678, %v405
    %v2683 = vmul.f32 %v2680, %v420
    %s2684 = scalar_lea.vmem %s37, 16
    %v2685 = vld [vmem:[%s2684] sm:$0xf]
    %v2686 = vld [vmem:[%s2684 + $0x4] sm:$0xf]
    %v2687 = vld [vmem:[%s2684 + $0x8] sm:$0xf]
    %v2688 = vld [vmem:[%s2684 + $0xc] sm:$0xf]
    %v2689 = vpack.c.bf16 %v2683, %v2682
    %s2690 = scalar_lea.vmem %s39, 32
    %v2691 = vld [vmem:[%s2690] sm:$0xf]
    %v2692 = vld [vmem:[%s2690 + $0x4] sm:$0xf]
    %v2693 = vld [vmem:[%s2690 + $0x8] sm:$0xf]
    %v2694 = vld [vmem:[%s2690 + $0xc] sm:$0xf]
    %v2695 = vld [vmem:[%s2690 + $0x10] sm:$0xf]
    %v2696 = vld [vmem:[%s2690 + $0x14] sm:$0xf]
    %v2697 = vld [vmem:[%s2690 + $0x18] sm:$0xf]
    %v2698 = vld [vmem:[%s2690 + $0x1c] sm:$0xf]
    %v2707 = vunpack.c.l.b16 %v2691
    %v2708 = vunpack.c.l.b16 %v2692
    %v2709 = vunpack.c.l.b16 %v2693
    %v2710 = vunpack.c.l.b16 %v2694
    %v2711 = vunpack.c.l.b16 %v2695
    %v2712 = vunpack.c.l.b16 %v2696
    %v2713 = vunpack.c.l.b16 %v2697
    %v2714 = vunpack.c.l.b16 %v2698
    %v2715 = vpack.c.b16 %v2708, %v2707
    %v2716 = vpack.c.b16 %v2710, %v2709
    %v2717 = vpack.c.b16 %v2712, %v2711
    %v2718 = vpack.c.b16 %v2714, %v2713
    %v2724 = vsel %vm954, %v2689, 0
    %2726 = vmatpush.bf16.msra.mxu0 0
    %2727 = vmatpush.bf16.msra.mxu0 0
    %2728 = vmatpush.bf16.msra.mxu0 0
    %2729 = vmatpush.bf16.msra.mxu0 0
    %2730 = vmatpush.bf16.msra.mxu0 %v2718
    %2731 = vmatpush.bf16.msra.mxu0 %v2717
    %2732 = vmatpush.bf16.msra.mxu0 %v2716
    %2733 = vmatpush.bf16.msra.mxu0 %v2715
    %2734 = vmatmul.bf16.gmra.mxu0 %v2724
    %v2735 = vpop.f32.mrf.mxu0
    %v2736 = vadd.f32 0.0, %v2735
    %v2737 = vpop.f32.mrf.mxu0
    %v2738 = vadd.f32 0.0, %v2737
    %2739 = vdwg.mxu0
    %v2744 = vunpack.c.l.b16 %v2685
    %v2745 = vunpack.c.l.b16 %v2686
    %v2746 = vunpack.c.l.b16 %v2687
    %v2747 = vunpack.c.l.b16 %v2688
    %v2748 = vpack.c.b16 %v2745, %v2744
    %v2749 = vpack.c.b16 %v2747, %v2746
    %v2753 = vsel %vm623, %v1680, 0
    %2755 = vmatpush.bf16.msra.mxu0 0
    %2756 = vmatpush.bf16.msra.mxu0 0
    %2757 = vmatpush.bf16.msra.mxu0 0
    %2758 = vmatpush.bf16.msra.mxu0 0
    %2759 = vmatpush.bf16.msra.mxu0 0
    %2760 = vmatpush.bf16.msra.mxu0 0
    %2761 = vmatpush.bf16.msra.mxu0 %v2749
    %2762 = vmatpush.bf16.msra.mxu0 %v2748
    %2763 = vmatmul.bf16.gmra.mxu0 %v2753
    %v2764 = vpop.f32.mrf.mxu0
    %v2765 = vadd.f32 %v2736, %v2764
    %v2766 = vpop.f32.mrf.mxu0
    %v2767 = vadd.f32 %v2738, %v2766
    %2768 = vdwg.mxu0
    %s2769 = scalar_lea.vmem %s41, 1
    %v2770 = vld [vmem:[%s2769] sm:$0x1]
    %v2772 = vperm.slane %v2770, 0
    %v2774 = vadd.f32 %v2765, %v2772
    %v2775 = vadd.f32 %v2767, %v2772
    %v2776 = vmax.f32 %v2774, 0.0
    %v2777 = vmax.f32 %v2775, 0.0
    %v2778 = vpack.c.bf16 %v2777, %v2776
    %s2779 = scalar_lea.vmem %s43, 32
    %v2780 = vld [vmem:[%s2779] sm:$0xf]
    %v2781 = vld [vmem:[%s2779 + $0x4] sm:$0xf]
    %v2782 = vld [vmem:[%s2779 + $0x8] sm:$0xf]
    %v2783 = vld [vmem:[%s2779 + $0xc] sm:$0xf]
    %v2784 = vld [vmem:[%s2779 + $0x10] sm:$0xf]
    %v2785 = vld [vmem:[%s2779 + $0x14] sm:$0xf]
    %v2786 = vld [vmem:[%s2779 + $0x18] sm:$0xf]
    %v2787 = vld [vmem:[%s2779 + $0x1c] sm:$0xf]
    %s2788 = scalar_lea.vmem %s45, 1
    %v2789 = vld [vmem:[%s2788] sm:$0x1]
    %v2791 = vperm.slane %v2789, 0
    %v2801 = vunpack.c.l.b16 %v2780
    %v2802 = vunpack.c.l.b16 %v2781
    %v2803 = vunpack.c.l.b16 %v2782
    %v2804 = vunpack.c.l.b16 %v2783
    %v2805 = vunpack.c.l.b16 %v2784
    %v2806 = vunpack.c.l.b16 %v2785
    %v2807 = vunpack.c.l.b16 %v2786
    %v2808 = vunpack.c.l.b16 %v2787
    %v2809 = vpack.c.b16 %v2802, %v2801
    %v2810 = vpack.c.b16 %v2804, %v2803
    %v2811 = vpack.c.b16 %v2806, %v2805
    %v2812 = vpack.c.b16 %v2808, %v2807
    %v2818 = vsel %vm954, %v2778, 0
    %2820 = vmatpush.bf16.msra.mxu0 0
    %2821 = vmatpush.bf16.msra.mxu0 0
    %2822 = vmatpush.bf16.msra.mxu0 0
    %2823 = vmatpush.bf16.msra.mxu0 0
    %2824 = vmatpush.bf16.msra.mxu0 %v2812
    %2825 = vmatpush.bf16.msra.mxu0 %v2811
    %2826 = vmatpush.bf16.msra.mxu0 %v2810
    %2827 = vmatpush.bf16.msra.mxu0 %v2809
    %2828 = vmatmul.bf16.gmra.mxu0 %v2818
    %v2829 = vpop.f32.mrf.mxu0
    %v2830 = vadd.f32 %v2791, %v2829
    %v2831 = vpop.f32.mrf.mxu0
    %v2832 = vadd.f32 %v2791, %v2831
    %2833 = vdwg.mxu0
    %v2834 = vadd.f32 %v1678, %v2830
    %v2835 = vadd.f32 %v1679, %v2832
    %v2836 = vmax.f32 %v2834, 0.0
    %v2837 = vmax.f32 %v2835, 0.0
    %v2838 = vpack.c.bf16 %v2837, %v2836
    %v2840 = vsel %vm471, %v373, 0
    %2842 = vmatpush.bf16.msra.mxu0 0
    %2843 = vmatpush.bf16.msra.mxu0 0
    %2844 = vmatpush.bf16.msra.mxu0 0
    %2845 = vmatpush.bf16.msra.mxu0 0
    %2846 = vmatpush.bf16.msra.mxu0 0
    %2847 = vmatpush.bf16.msra.mxu0 0
    %2848 = vmatpush.bf16.msra.mxu0 0
    %2849 = vmatpush.bf16.msra.mxu0 %v2838
    %2850 = vmatmul.bf16.gmra.mxu0 %v2840
    %v2851 = vpop.f32.mrf.mxu0
    %v2852 = vadd.f32 0.0, %v2851
    %v2853 = vpop.f32.mrf.mxu0
    %2854 = vdwg.mxu0
    %v2855 = vmul.f32 %v2852, %v441
    %v2857 = vsel %vm382, %v379, 0
    %2859 = vmatpush.bf16.msra.mxu0 0
    %2860 = vmatpush.bf16.msra.mxu0 %v2328
    %2861 = vmatpush.bf16.msra.mxu0 %v2327
    %2862 = vmatpush.bf16.msra.mxu0 %v2326
    %2863 = vmatpush.bf16.msra.mxu0 %v2325
    %2864 = vmatpush.bf16.msra.mxu0 %v2324
    %2865 = vmatpush.bf16.msra.mxu0 %v2323
    %2866 = vmatpush.bf16.msra.mxu0 %v2322
    %2867 = vmatmul.bf16.gmra.mxu0 %v2857
    %v2868 = vpop.f32.mrf.mxu0
    %v2869 = vadd.f32 0.0, %v2868
    %v2870 = vpop.f32.mrf.mxu0
    %2871 = vdwg.mxu0
    %v2872 = vmul.f32 %v2869, %v462
    %v2873 = vpack.c.bf16 %v2855, %v2855
    %v2874 = vld [vmem:[%s47] sm:$0xf]
    %v2875 = vld [vmem:[%s47 + $0x4] sm:$0xf]
    %v2876 = vld [vmem:[%s47 + $0x8] sm:$0xf]
    %v2877 = vld [vmem:[%s47 + $0xc] sm:$0xf]
    %v2878 = vpack.c.bf16 %v2872, %v2872
    %v2879 = vld [vmem:[%s49] sm:$0xf]
    %v2880 = vld [vmem:[%s49 + $0x4] sm:$0xf]
    %v2881 = vld [vmem:[%s49 + $0x8] sm:$0xf]
    %v2882 = vld [vmem:[%s49 + $0xc] sm:$0xf]
    %v2887 = vunpack.c.l.b16 %v2879
    %v2888 = vunpack.c.l.b16 %v2880
    %v2889 = vunpack.c.l.b16 %v2881
    %v2890 = vunpack.c.l.b16 %v2882
    %v2891 = vpack.c.b16 %v2888, %v2887
    %v2892 = vpack.c.b16 %v2890, %v2889
    %v2896 = vsel %vm623, %v2878, 0
    %2898 = vmatpush.bf16.msra.mxu0 0
    %2899 = vmatpush.bf16.msra.mxu0 0
    %2900 = vmatpush.bf16.msra.mxu0 0
    %2901 = vmatpush.bf16.msra.mxu0 0
    %2902 = vmatpush.bf16.msra.mxu0 0
    %2903 = vmatpush.bf16.msra.mxu0 0
    %2904 = vmatpush.bf16.msra.mxu0 %v2892
    %2905 = vmatpush.bf16.msra.mxu0 %v2891
    %2906 = vmatmul.bf16.gmra.mxu0 %v2896
    %v2907 = vpop.f32.mrf.mxu0
    %v2908 = vadd.f32 0.0, %v2907
    %v2909 = vpop.f32.mrf.mxu0
    %2910 = vdwg.mxu0
    %v2915 = vunpack.c.l.b16 %v2874
    %v2916 = vunpack.c.l.b16 %v2875
    %v2917 = vunpack.c.l.b16 %v2876
    %v2918 = vunpack.c.l.b16 %v2877
    %v2919 = vpack.c.b16 %v2916, %v2915
    %v2920 = vpack.c.b16 %v2918, %v2917
    %v2924 = vsel %vm623, %v2873, 0
    %2926 = vmatpush.bf16.msra.mxu0 0
    %2927 = vmatpush.bf16.msra.mxu0 0
    %2928 = vmatpush.bf16.msra.mxu0 0
    %2929 = vmatpush.bf16.msra.mxu0 0
    %2930 = vmatpush.bf16.msra.mxu0 0
    %2931 = vmatpush.bf16.msra.mxu0 0
    %2932 = vmatpush.bf16.msra.mxu0 %v2920
    %2933 = vmatpush.bf16.msra.mxu0 %v2919
    %2934 = vmatmul.bf16.gmra.mxu0 %v2924
    %v2935 = vpop.f32.mrf.mxu0
    %v2936 = vadd.f32 %v2908, %v2935
    %v2937 = vpop.f32.mrf.mxu0
    %2938 = vdwg.mxu0
    %v2939 = vld [vmem:[%s51] sm:$0x1]
    %v2941 = vperm.slane %v2939, 0
    %v2943 = vadd.f32 %v2936, %v2941
    %v2944 = vmax.f32 %v2943, 0.0
    %v2945 = vpack.c.bf16 %v2944, %v2944
    %v2946 = vld [vmem:[%s53] sm:$0xf]
    %v2947 = vld [vmem:[%s53 + $0x4] sm:$0xf]
    %v2948 = vld [vmem:[%s53 + $0x8] sm:$0xf]
    %v2949 = vld [vmem:[%s53 + $0xc] sm:$0xf]
    %v2950 = vld [vmem:[%s53 + $0x10] sm:$0xf]
    %v2951 = vld [vmem:[%s53 + $0x14] sm:$0xf]
    %v2952 = vld [vmem:[%s53 + $0x18] sm:$0xf]
    %v2953 = vld [vmem:[%s53 + $0x1c] sm:$0xf]
    %v2954 = vld [vmem:[%s55] sm:$0x1]
    %v2956 = vperm.slane %v2954, 0
    %v2966 = vunpack.c.l.b16 %v2946
    %v2967 = vunpack.c.l.b16 %v2947
    %v2968 = vunpack.c.l.b16 %v2948
    %v2969 = vunpack.c.l.b16 %v2949
    %v2970 = vunpack.c.l.b16 %v2950
    %v2971 = vunpack.c.l.b16 %v2951
    %v2972 = vunpack.c.l.b16 %v2952
    %v2973 = vunpack.c.l.b16 %v2953
    %v2974 = vpack.c.b16 %v2967, %v2966
    %v2975 = vpack.c.b16 %v2969, %v2968
    %v2976 = vpack.c.b16 %v2971, %v2970
    %v2977 = vpack.c.b16 %v2973, %v2972
    %v2983 = vsel %vm954, %v2945, 0
    %2985 = vmatpush.bf16.msra.mxu0 0
    %2986 = vmatpush.bf16.msra.mxu0 0
    %2987 = vmatpush.bf16.msra.mxu0 0
    %2988 = vmatpush.bf16.msra.mxu0 0
    %2989 = vmatpush.bf16.msra.mxu0 %v2977
    %2990 = vmatpush.bf16.msra.mxu0 %v2976
    %2991 = vmatpush.bf16.msra.mxu0 %v2975
    %2992 = vmatpush.bf16.msra.mxu0 %v2974
    %2993 = vmatmul.bf16.gmra.mxu0 %v2983
    %v2994 = vpop.f32.mrf.mxu0
    %v2995 = vadd.f32 %v2956, %v2994
    %v2996 = vpop.f32.mrf.mxu0
    %2997 = vdwg.mxu0
    %v2998 = vmax.f32 %v2995, 0.0
    %v2999 = vpack.c.bf16 %v2998, %v2998
    %v3000 = vld [vmem:[%s57] sm:$0xf]
    %v3001 = vld [vmem:[%s57 + $0x4] sm:$0xf]
    %v3002 = vld [vmem:[%s57 + $0x8] sm:$0xf]
    %v3003 = vld [vmem:[%s57 + $0xc] sm:$0xf]
    %v3004 = vld [vmem:[%s59] sm:$0x1]
    %v3006 = vperm.slane %v3004, 0
    %v3012 = vunpack.c.l.b16 %v3000
    %v3013 = vunpack.c.l.b16 %v3001
    %v3014 = vunpack.c.l.b16 %v3002
    %v3015 = vunpack.c.l.b16 %v3003
    %v3016 = vpack.c.b16 %v3013, %v3012
    %v3017 = vpack.c.b16 %v3015, %v3014
    %v3021 = vsel %vm623, %v2999, 0
    %3023 = vmatpush.bf16.msra.mxu0 0
    %3024 = vmatpush.bf16.msra.mxu0 0
    %3025 = vmatpush.bf16.msra.mxu0 0
    %3026 = vmatpush.bf16.msra.mxu0 0
    %3027 = vmatpush.bf16.msra.mxu0 0
    %3028 = vmatpush.bf16.msra.mxu0 0
    %3029 = vmatpush.bf16.msra.mxu0 %v3017
    %3030 = vmatpush.bf16.msra.mxu0 %v3016
    %3031 = vmatmul.bf16.gmra.mxu0 %v3021
    %v3032 = vpop.f32.mrf.mxu0
    %v3033 = vadd.f32 %v3006, %v3032
    %v3034 = vpop.f32.mrf.mxu0
    %3035 = vdwg.mxu0
    %vm3036 = vcmask 25600
    %3037 = vst.msk [vmem:[#allocation2] sm:$0x3] %vm3036, %v3033
    // Predicated region
    $region122: #{tpu_custom_call.1} parent=1 // pred_check
      _
    $region123: #{tpu_custom_call.1} parent=1 // pred_check_branch
      %3039 = sbr.rel (0) target = $region125
    $region124: #{tpu_custom_call.1} parent=1 // pred_region
      %3041 = vsyncadd [#allocation3], 0
      %s3043 = sshll.u32 [#allocation2], 4
      %s3044 = int_to_ptr.vmem [resolvable:$true] %s3043
      %s3045 = sshll.u32 %s61, 4
      %s3046 = int_to_ptr.hbm [resolvable:$true] %s3045
      %3048 = dma.vmem_to_hbm [thread:$0]  %s3044, 32, %s3046, [#allocation3]
    $region125: #{tpu_custom_call.1} parent=1 // pred_fallthru
      _
    // Predicated region
    $region126: #{tpu_custom_call.1} parent=1 // pred_check
      _
    $region127: #{tpu_custom_call.1} parent=1 // pred_check_branch
      %3050 = sbr.rel (0) target = $region129
    $region128: #{tpu_custom_call.1} parent=1 // pred_region
      %3052 = dma.done [#allocation3], 32
    $region129: #{tpu_custom_call.1} parent=1 // pred_fallthru
      _
    %3053 = vsyncpa [#allocation3], 1

</llo_original>
